<compile_context>
chip_gen: v7x
topology: tpu7x:2x2x1
jax: 0.10.0
libtpu: 0.0.40
codegen_flags: <defaults>
</compile_context>

<pallas_src>
import math
import functools

import jax
import jax.numpy as jnp
import numpy as np
from jax.experimental import pallas as pl
from jax.experimental.pallas import tpu as pltpu


# ----------------------------------------------------------------------------
# In-kernel multi-head attention for a (Bt, Lq, D) block of queries.
# ----------------------------------------------------------------------------
def _mha_heads(q3, k3, v3, mask_add, wo_ref, bo, num_heads):
    """q3: (Bt, Lq, D) f32, already scaled by 1/sqrt(hd); k3, v3: (Bt, Lk, D) f32.
    mask_add: (Bt, 1, Lk) additive f32.  wo_ref: (H, hd, D) bf16 ref, pre-split per
    head in the wrapper (no mid-tile row slicing of packed bf16 weights in-kernel).
    bo: (1, D) f32.  Returns attn @ W_o + b_o as (Bt*Lq, D) f32.

    Each head is accumulated straight through its W_o slab, so there is no lane-dim
    concatenate of per-head outputs.  (At production sizes this accumulator should
    live in VMEM scratch; at Bt*Lq=16, D=32 it is a couple of vregs.)
    """
    bt, lq, d = q3.shape
    hd = d // num_heads
    out = jnp.zeros((bt * lq, d), jnp.float32)
    for h in range(num_heads):
        lo, hi = h * hd, (h + 1) * hd
        qh = q3[:, :, lo:hi].astype(jnp.bfloat16)          # (Bt, Lq, hd)
        kh = k3[:, :, lo:hi].astype(jnp.bfloat16)          # (Bt, Lk, hd)
        vh = v3[:, :, lo:hi].astype(jnp.bfloat16)          # (Bt, Lk, hd)
        # scores / softmax stay f32; batched einsums (leading batch dim) as in flash-attn.
        s = jnp.einsum("bqd,bkd->bqk", qh, kh, preferred_element_type=jnp.float32)
        s = s + mask_add
        s = s - jnp.max(s, axis=-1, keepdims=True)
        p = jnp.exp(s)
        p = p * pl.reciprocal(jnp.sum(p, axis=-1, keepdims=True), approx=True)
        oh = jnp.einsum("bqk,bkd->bqd", p.astype(jnp.bfloat16), vh,
                        preferred_element_type=jnp.float32)      # (Bt, Lq, hd)
        out = out + jnp.dot(oh.reshape(bt * lq, hd).astype(jnp.bfloat16),
                            wo_ref[h], preferred_element_type=jnp.float32)
    return out + bo


# ----------------------------------------------------------------------------
# Kernel: whole GatedXattnDense forward for a block of `block_b` batch elements.
# ----------------------------------------------------------------------------
def gated_xattn_kernel(y_ref, x_ref, m_ref, w_ref, b_ref, woc_ref, wos_ref,
                       gate_ref, out_ref, *, num_heads):
    bt, ly, d = y_ref.shape
    lx = x_ref.shape[1]
    hd = d // num_heads
    scale = 1.0 / math.sqrt(hd)

    # D-wide column groups of the packed slabs:
    #   W slab (D, 8D):  [q_c | k_c | v_c | ff | q_s | k_s | v_s | ff2]
    #   b slab (1, 10D): the same 8 groups + [o_c | o_s]
    def wcol(g0, g1):
        return w_ref[:, g0 * d:g1 * d]

    def bcol(g0, g1):
        return b_ref[:, g0 * d:g1 * d]

    y = y_ref[...]                                   # (Bt, Ly, D) f32
    x = x_ref[...]                                   # (Bt, Lx, D) f32
    masks = m_ref[...]                               # (Bt, 2, Lm) additive f32
    xm = masks[:, 0:1, :lx]                          # (Bt, 1, Lx)
    ym = masks[:, 1:2, :ly]                          # (Bt, 1, Ly)

    # Gates: tanh already applied in the wrapper, read as SMEM scalars.
    a_x = gate_ref[0, 0]
    a_d = gate_ref[0, 1]

    # Token-major 2D views (leading-dim merge, minor dim preserved -> layout-preserving).
    y2d = y.reshape(bt * ly, d)                      # f32 residual stream
    x2d = x.reshape(bt * lx, d)
    y_bf = y2d.astype(jnp.bfloat16)
    x_bf = x2d.astype(jnp.bfloat16)

    # ---- cross attention: Q from y, fused K|V from x (one MXU pass, N=2D) ---
    q = (jnp.dot(y_bf, wcol(0, 1), preferred_element_type=jnp.float32)
         + bcol(0, 1)) * scale                                     # (Bt*Ly, D)
    kv = jnp.dot(x_bf, wcol(1, 3), preferred_element_type=jnp.float32) + bcol(1, 3)
    cross = _mha_heads(q.reshape(bt, ly, d),
                       kv[:, :d].reshape(bt, lx, d),
                       kv[:, d:].reshape(bt, lx, d),
                       xm, woc_ref, bcol(8, 9), num_heads)         # (Bt*Ly, D)

    y1 = y2d + a_x * cross

    # ---- gated dense (Linear + ReLU) ----------------------------------------
    ff1 = jnp.maximum(
        jnp.dot(y1.astype(jnp.bfloat16), wcol(3, 4),
                preferred_element_type=jnp.float32) + bcol(3, 4), 0.0)
    y2 = y1 + a_d * ff1

    # ---- frozen self attention: fused Q|K|V (one MXU pass, N=3D) ------------
    qkv = jnp.dot(y2.astype(jnp.bfloat16), wcol(4, 7),
                  preferred_element_type=jnp.float32) + bcol(4, 7)  # (Bt*Ly, 3D)
    self_out = _mha_heads((qkv[:, :d] * scale).reshape(bt, ly, d),
                          qkv[:, d:2 * d].reshape(bt, ly, d),
                          qkv[:, 2 * d:].reshape(bt, ly, d),
                          ym, wos_ref, bcol(9, 10), num_heads)
    y3 = y2 + self_out

    # ---- frozen dense (Linear + ReLU) ---------------------------------------
    ff2 = jnp.maximum(
        jnp.dot(y3.astype(jnp.bfloat16), wcol(7, 8),
                preferred_element_type=jnp.float32) + bcol(7, 8), 0.0)
    yout = (y3 + ff2).reshape(bt, ly, d)             # (Bt, Ly, D) f32

    # ---- lane-dense store: (Bt, Ly, D) -> (Bt, 1, Ly*D) ----------------------
    # Ly*D (=256 here) >= 128 lanes => unmasked full-lane stores instead of
    # 32-lane masked partial stores.  Built with a minor-dim concat (safe lowering).
    out_ref[...] = jnp.concatenate(
        [yout[:, l:l + 1, :] for l in range(ly)], axis=-1).astype(out_ref.dtype)


# ----------------------------------------------------------------------------
# Wrapper
# ----------------------------------------------------------------------------
def _pick_block_b(batch):
    # As many batch elements per grid step as possible (amortize the ~0.35us/step
    # pipeline overhead), capped at 8 to bound activation VMEM, while keeping
    # >= 2 parallel grid steps once batch >= 4 so both v7x TensorCores get work.
    cap = min(batch, 8)
    if batch >= 4:
        cap = min(cap, batch // 2)
    for bb in range(cap, 0, -1):
        if batch % bb == 0:
            return bb
    return 1


def gated_xattn_dense(y, x, y_mask, x_mask, params, num_heads, block_b=None):
    B, Ly, D = y.shape
    Lx = x.shape[1]
    assert D % num_heads == 0, "d_model must be divisible by num_heads"
    hd = D // num_heads
    Lm = max(Lx, Ly)
    neg = jnp.float32(-1e30)

    if block_b is None:
        block_b = _pick_block_b(B)
    assert B % block_b == 0
    grid_b = B // block_b

    # key_padding_mask semantics: True / nonzero in the *input* masks == valid key.
    # Fold both masks into one additive tensor: row 0 = cross-attn keys (x), row 1 = self-attn keys (y).
    xm_add = jnp.where(x_mask == 0, neg, jnp.float32(0.0)).astype(jnp.float32)   # (B, Lx)
    ym_add = jnp.where(~y_mask, neg, jnp.float32(0.0)).astype(jnp.float32)       # (B, Ly)
    masks = jnp.zeros((B, 2, Lm), jnp.float32)
    masks = masks.at[:, 0, :Lx].set(xm_add)
    masks = masks.at[:, 1, :Ly].set(ym_add)

    bf16, f32 = jnp.bfloat16, jnp.float32
    p = params
    # One bf16 weight slab (contraction dim D first; all weights pre-transposed).
    # Columns (D-wide groups): [q_c | k_c | v_c | ff | q_s | k_s | v_s | ff2]  -> (D, 8D)
    w_slab = jnp.concatenate(
        [p["wqkv_c"], p["wff"], p["wqkv_s"], p["wff2"]], axis=1).astype(bf16)
    # One f32 bias slab: the 8 groups above + [o_c | o_s]                       -> (1, 10D)
    b_slab = jnp.concatenate(
        [p["bqkv_c"], p["bff"], p["bqkv_s"], p["bff2"], p["bo_c"], p["bo_s"]],
        axis=1).astype(f32)
    # Output projections pre-split per head: (H, hd, D) so the kernel indexes a
    # whole head slab (leading dim) instead of row-slicing a packed bf16 tile.
    wo_c = p["wo_c"].reshape(num_heads, hd, D).astype(bf16)
    wo_s = p["wo_s"].reshape(num_heads, hd, D).astype(bf16)
    # tanh gates hoisted out of the kernel (constant across the whole call).
    gates = jnp.tanh(p["alphas"].astype(f32))                                   # (1, 2)

    idx_b3 = lambda b: (b, 0, 0)
    zero2 = lambda b: (0, 0)
    zero3 = lambda b: (0, 0, 0)

    in_specs = [
        pl.BlockSpec((block_b, Ly, D), idx_b3),             # y
        pl.BlockSpec((block_b, Lx, D), idx_b3),             # x
        pl.BlockSpec((block_b, 2, Lm), idx_b3),             # folded additive masks
        # The four specs below are grid-invariant.  At production D, single-buffer
        # them (pipeline_mode=pl.Buffered(1) or one manual DMA into persistent
        # scratch); left at the default here for lowering portability (~40 KB at D=32).
        pl.BlockSpec((D, 8 * D), zero2),                    # packed bf16 weight slab
        pl.BlockSpec((1, 10 * D), zero2),                   # packed f32 bias slab
        pl.BlockSpec((num_heads, hd, D), zero3),            # cross-attn W_o, per head
        pl.BlockSpec((num_heads, hd, D), zero3),            # self-attn W_o, per head
        pl.BlockSpec(memory_space=pltpu.MemorySpace.SMEM),  # tanh'd gates (1, 2)
    ]
    out_specs = pl.BlockSpec((block_b, 1, Ly * D), idx_b3)
    out_shape = jax.ShapeDtypeStruct((B, 1, Ly * D), jnp.float32)

    # VMEM budget: activation blocks + output (double-buffered by the pipeline),
    # grid-invariant weights (conservatively also counted double-buffered),
    # plus headroom for scores / live activations.  Capped below physical VMEM
    # (important on v7x, where a TensorCore only has 64 MiB).
    act_bytes = 4 * block_b * (Ly * D + Lx * D + 2 * Lm + Ly * D)
    weight_bytes = 2 * (8 * D * D) + 4 * (10 * D) + 2 * (2 * D * D)
    interm_bytes = 4 * block_b * (Ly * max(Lx, Ly) + 16 * Ly * D)
    vmem_needed = 2 * (act_bytes + weight_bytes) + interm_bytes
    try:
        vmem_cap = int(pltpu.get_tpu_info().vmem_capacity_bytes)
    except Exception:
        vmem_cap = 64 * 2 ** 20
    vmem_limit = int(min(int(0.75 * vmem_cap), max(4 * vmem_needed, 16 * 2 ** 20)))

    # Advisory scheduler hint so XLA can overlap this (few-us) custom call.
    flops = 2 * B * (D * D * (8 * Ly + 2 * Lx) + 2 * Ly * D * (Lx + Ly))
    transcendentals = B * num_heads * (Ly * Lx + Ly * Ly)          # softmax exps
    bytes_accessed = int(4 * (y.size + x.size + masks.size + B * Ly * D)
                         + 2 * (w_slab.size + wo_c.size + wo_s.size)
                         + 4 * b_slab.size)
    cost = pl.CostEstimate(flops=int(flops), transcendentals=int(transcendentals),
                           bytes_accessed=bytes_accessed)

    kernel = functools.partial(gated_xattn_kernel, num_heads=num_heads)
    out = pl.pallas_call(
        kernel,
        out_shape=out_shape,
        grid=(grid_b,),
        in_specs=in_specs,
        out_specs=out_specs,
        compiler_params=pltpu.CompilerParams(
            dimension_semantics=("parallel",),
            vmem_limit_bytes=vmem_limit),
        cost_estimate=cost,
    )(y, x, masks, w_slab, b_slab, wo_c, wo_s, gates)
    return out.reshape(B, Ly, D)


# ----------------------------------------------------------------------------
# Pure-JAX f32 reference (mirrors PyTorch semantics) for validation.
# ----------------------------------------------------------------------------
def forward_ref(y, x, y_mask, x_mask, params, num_heads):
    B, Ly, D = y.shape
    Lx = x.shape[1]
    hd = D // num_heads
    neg = jnp.float32(-1e30)
    xm_add = jnp.where(x_mask == 0, neg, 0.0).reshape(B, 1, 1, Lx)
    ym_add = jnp.where(~y_mask, neg, 0.0).reshape(B, 1, 1, Ly)

    def mha(qin, kvin, mask_add, wqkv, bqkv, wo, bo):
        Lq, Lk = qin.shape[1], kvin.shape[1]
        q = qin @ wqkv[:, :D] + bqkv[0, :D]
        k = kvin @ wqkv[:, D:2 * D] + bqkv[0, D:2 * D]
        v = kvin @ wqkv[:, 2 * D:] + bqkv[0, 2 * D:]
        q = q.reshape(B, Lq, num_heads, hd).transpose(0, 2, 1, 3)
        k = k.reshape(B, Lk, num_heads, hd).transpose(0, 2, 1, 3)
        v = v.reshape(B, Lk, num_heads, hd).transpose(0, 2, 1, 3)
        s = jnp.einsum("bhqd,bhkd->bhqk", q, k) / math.sqrt(hd) + mask_add
        p = jax.nn.softmax(s, axis=-1)
        o = jnp.einsum("bhqk,bhkd->bhqd", p, v).transpose(0, 2, 1, 3).reshape(B, Lq, D)
        return o @ wo + bo[0]

    a_x = jnp.tanh(params["alphas"][0, 0])
    a_d = jnp.tanh(params["alphas"][0, 1])

    cross = mha(y, x, xm_add, params["wqkv_c"], params["bqkv_c"], params["wo_c"], params["bo_c"])
    y = y + a_x * cross
    y = y + a_d * jnp.maximum(y @ params["wff"] + params["bff"][0], 0.0)
    self_out = mha(y, y, ym_add, params["wqkv_s"], params["bqkv_s"], params["wo_s"], params["bo_s"])
    y = y + self_out
    y = y + jnp.maximum(y @ params["wff2"] + params["bff2"][0], 0.0)
    return y


# ----------------------------------------------------------------------------
# Main
# ----------------------------------------------------------------------------
if __name__ == "__main__":
    B, Ly, Lx, D, H = 2, 8, 8, 32, 4

    key = jax.random.PRNGKey(0)
    ks = jax.random.split(key, 16)
    s = 0.1

    params = {
        # weights already transposed: kernel computes act @ W + b
        "wqkv_c": jax.random.normal(ks[0], (D, 3 * D), jnp.float32) * s,
        "bqkv_c": jax.random.normal(ks[1], (1, 3 * D), jnp.float32) * s,
        "wo_c":   jax.random.normal(ks[2], (D, D), jnp.float32) * s,
        "bo_c":   jax.random.normal(ks[3], (1, D), jnp.float32) * s,
        "wff":    jax.random.normal(ks[4], (D, D), jnp.float32) * s,
        "bff":    jax.random.normal(ks[5], (1, D), jnp.float32) * s,
        "wqkv_s": jax.random.normal(ks[6], (D, 3 * D), jnp.float32) * s,
        "bqkv_s": jax.random.normal(ks[7], (1, 3 * D), jnp.float32) * s,
        "wo_s":   jax.random.normal(ks[8], (D, D), jnp.float32) * s,
        "bo_s":   jax.random.normal(ks[9], (1, D), jnp.float32) * s,
        "wff2":   jax.random.normal(ks[10], (D, D), jnp.float32) * s,
        "bff2":   jax.random.normal(ks[11], (1, D), jnp.float32) * s,
        # Module inits these to 0.0 (closed gates); nonzero here so the gated
        # paths are actually exercised.
        "alphas": jnp.array([[0.25, -0.40]], dtype=jnp.float32),
    }

    y = jax.random.normal(ks[12], (B, Ly, D), jnp.float32)
    x = jax.random.normal(ks[13], (B, Lx, D), jnp.float32)
    # x_mask: nonzero == valid; y_mask: True == valid (padding at the tail).
    x_mask = (jnp.arange(Lx)[None, :] < jnp.array([6, Lx])[:, None]).astype(jnp.int32)
    y_mask = jnp.arange(Ly)[None, :] < jnp.array([Ly, 5])[:, None]

    out = gated_xattn_dense(y, x, y_mask, x_mask, params, num_heads=H)
    out = jax.block_until_ready(out)

    ref = forward_ref(y, x, y_mask, x_mask, params, num_heads=H)
    # Matmul operands run in bf16 inside the kernel (f32 accumulate/softmax/residuals),
    # so allow a bf16-sized tolerance against the f32 reference.
    np.testing.assert_allclose(np.asarray(out), np.asarray(ref), rtol=3e-2, atol=3e-2)

    print("KERNEL_OK")
</pallas_src>

<mosaic_0001>
module attributes {stable_mosaic.version = 11 : i64} {
  func.func @gated_xattn_kernel(%arg0: i32, %arg1: memref<2x8x32xf32, #tpu.memory_space<vmem>>, %arg2: memref<2x8x32xf32, #tpu.memory_space<vmem>>, %arg3: memref<2x2x8xf32, #tpu.memory_space<vmem>>, %arg4: memref<32x256xbf16, #tpu.memory_space<vmem>>, %arg5: memref<1x320xf32, #tpu.memory_space<vmem>>, %arg6: memref<4x8x32xbf16, #tpu.memory_space<vmem>>, %arg7: memref<4x8x32xbf16, #tpu.memory_space<vmem>>, %arg8: memref<1x2xf32, #tpu.memory_space<smem>>, %arg9: memref<2x1x256xf32, #tpu.memory_space<vmem>>) attributes {dimension_semantics = [#tpu.dimension_semantics<parallel>], iteration_bounds = array<i64: 1>, scalar_prefetch = 0 : i64, scratch_operands = 0 : i64, tpu.core_type = #tpu.core_type<tc>, window_params = [{transform_indices = @transform_0, window_bounds = array<i64: 2, 8, 32>}, {transform_indices = @transform_1, window_bounds = array<i64: 2, 8, 32>}, {transform_indices = @transform_2, window_bounds = array<i64: 2, 2, 8>}, {pipeline_mode = #tpu.pipeline_mode<synchronous>, transform_indices = @transform_3, window_bounds = array<i64: 32, 256>}, {pipeline_mode = #tpu.pipeline_mode<synchronous>, transform_indices = @transform_4, window_bounds = array<i64: 1, 320>}, {pipeline_mode = #tpu.pipeline_mode<synchronous>, transform_indices = @transform_5, window_bounds = array<i64: 4, 8, 32>}, {pipeline_mode = #tpu.pipeline_mode<synchronous>, transform_indices = @transform_6, window_bounds = array<i64: 4, 8, 32>}, {transform_indices = @transform_7, window_bounds = array<i64: 1, 2>}, {transform_indices = @transform_8, window_bounds = array<i64: 2, 1, 256>}]} {
    %c0 = arith.constant 0 : index
    %c0_0 = arith.constant 0 : index
    %c0_1 = arith.constant 0 : index
    %0 = vector.load %arg1[%c0, %c0_0, %c0_1] : memref<2x8x32xf32, #tpu.memory_space<vmem>>, vector<2x8x32xf32>
    %c0_2 = arith.constant 0 : index
    %c0_3 = arith.constant 0 : index
    %c0_4 = arith.constant 0 : index
    %1 = vector.load %arg2[%c0_2, %c0_3, %c0_4] : memref<2x8x32xf32, #tpu.memory_space<vmem>>, vector<2x8x32xf32>
    %c0_5 = arith.constant 0 : index
    %c0_6 = arith.constant 0 : index
    %c0_7 = arith.constant 0 : index
    %2 = vector.load %arg3[%c0_5, %c0_6, %c0_7] : memref<2x2x8xf32, #tpu.memory_space<vmem>>, vector<2x2x8xf32>
    %3 = vector.extract_strided_slice %2 {offsets = [0, 0, 0], sizes = [2, 1, 8], strides = [1, 1, 1]} : vector<2x2x8xf32> to vector<2x1x8xf32>
    %4 = vector.extract_strided_slice %2 {offsets = [0, 1, 0], sizes = [2, 1, 8], strides = [1, 1, 1]} : vector<2x2x8xf32> to vector<2x1x8xf32>
    %c0_8 = arith.constant 0 : index
    %c0_9 = arith.constant 0 : index
    %5 = memref.load %arg8[%c0_8, %c0_9] : memref<1x2xf32, #tpu.memory_space<smem>>
    %c0_10 = arith.constant 0 : index
    %c1 = arith.constant 1 : index
    %6 = memref.load %arg8[%c0_10, %c1] : memref<1x2xf32, #tpu.memory_space<smem>>
    %7 = vector.shape_cast %0 : vector<2x8x32xf32> to vector<16x32xf32>
    %8 = vector.shape_cast %1 : vector<2x8x32xf32> to vector<16x32xf32>
    %9 = arith.truncf %7 : vector<16x32xf32> to vector<16x32xbf16>
    %10 = arith.truncf %8 : vector<16x32xf32> to vector<16x32xbf16>
    %c0_11 = arith.constant 0 : index
    %c0_12 = arith.constant 0 : index
    %11 = vector.load %arg4[%c0_11, %c0_12] : memref<32x256xbf16, #tpu.memory_space<vmem>>, vector<32x32xbf16>
    %cst = arith.constant dense<0.000000e+00> : vector<16x32xf32>
    %12 = tpu.matmul %9, %11, %cst {dimension_numbers = #tpu.dot_dimension_numbers<[1], [0], [0], [1], [0, 0, 1, 1], [], []>} : vector<16x32xbf16>, vector<32x32xbf16>, vector<16x32xf32> -> vector<16x32xf32>
    %c0_13 = arith.constant 0 : index
    %c0_14 = arith.constant 0 : index
    %13 = vector.load %arg5[%c0_13, %c0_14] : memref<1x320xf32, #tpu.memory_space<vmem>>, vector<1x32xf32>
    %14 = vector.broadcast %13 : vector<1x32xf32> to vector<16x32xf32>
    %15 = arith.addf %12, %14 : vector<16x32xf32>
    %cst_15 = arith.constant 0.353553385 : f32
    %16 = vector.broadcast %cst_15 : f32 to vector<16x32xf32>
    %17 = arith.mulf %15, %16 : vector<16x32xf32>
    %c0_16 = arith.constant 0 : index
    %c32 = arith.constant 32 : index
    %18 = vector.load %arg4[%c0_16, %c32] : memref<32x256xbf16, #tpu.memory_space<vmem>>, vector<32x64xbf16>
    %cst_17 = arith.constant dense<0.000000e+00> : vector<16x64xf32>
    %19 = tpu.matmul %10, %18, %cst_17 {dimension_numbers = #tpu.dot_dimension_numbers<[1], [0], [0], [1], [0, 0, 1, 1], [], []>} : vector<16x32xbf16>, vector<32x64xbf16>, vector<16x64xf32> -> vector<16x64xf32>
    %c0_18 = arith.constant 0 : index
    %c32_19 = arith.constant 32 : index
    %20 = vector.load %arg5[%c0_18, %c32_19] : memref<1x320xf32, #tpu.memory_space<vmem>>, vector<1x64xf32>
    %21 = vector.broadcast %20 : vector<1x64xf32> to vector<16x64xf32>
    %22 = arith.addf %19, %21 : vector<16x64xf32>
    %23 = vector.shape_cast %17 : vector<16x32xf32> to vector<2x8x32xf32>
    %24 = vector.extract_strided_slice %22 {offsets = [0, 0], sizes = [16, 32], strides = [1, 1]} : vector<16x64xf32> to vector<16x32xf32>
    %25 = vector.shape_cast %24 : vector<16x32xf32> to vector<2x8x32xf32>
    %26 = vector.extract_strided_slice %22 {offsets = [0, 32], sizes = [16, 32], strides = [1, 1]} : vector<16x64xf32> to vector<16x32xf32>
    %27 = vector.shape_cast %26 : vector<16x32xf32> to vector<2x8x32xf32>
    %c0_20 = arith.constant 0 : index
    %c256 = arith.constant 256 : index
    %28 = vector.load %arg5[%c0_20, %c256] : memref<1x320xf32, #tpu.memory_space<vmem>>, vector<1x32xf32>
    %cst_21 = arith.constant 0.000000e+00 : f32
    %29 = vector.broadcast %cst_21 : f32 to vector<16x32xf32>
    %30 = vector.extract_strided_slice %23 {offsets = [0, 0, 0], sizes = [2, 8, 8], strides = [1, 1, 1]} : vector<2x8x32xf32> to vector<2x8x8xf32>
    %31 = arith.truncf %30 : vector<2x8x8xf32> to vector<2x8x8xbf16>
    %32 = vector.extract_strided_slice %25 {offsets = [0, 0, 0], sizes = [2, 8, 8], strides = [1, 1, 1]} : vector<2x8x32xf32> to vector<2x8x8xf32>
    %33 = arith.truncf %32 : vector<2x8x8xf32> to vector<2x8x8xbf16>
    %34 = vector.extract_strided_slice %27 {offsets = [0, 0, 0], sizes = [2, 8, 8], strides = [1, 1, 1]} : vector<2x8x32xf32> to vector<2x8x8xf32>
    %35 = arith.truncf %34 : vector<2x8x8xf32> to vector<2x8x8xbf16>
    "tpu.trace_start"() <{level = 10 : i32, message = "bqd,bkd->bqk"}> : () -> ()
    %cst_22 = arith.constant dense<0.000000e+00> : vector<2x8x8xf32>
    %36 = tpu.matmul %31, %33, %cst_22 {dimension_numbers = #tpu.dot_dimension_numbers<[2], [2], [1], [1], [0, 0, 0, 1, 1, 1], [0], [0]>} : vector<2x8x8xbf16>, vector<2x8x8xbf16>, vector<2x8x8xf32> -> vector<2x8x8xf32>
    "tpu.trace_stop"() : () -> ()
    %37 = vector.broadcast %3 : vector<2x1x8xf32> to vector<2x8x8xf32>
    %38 = arith.addf %36, %37 : vector<2x8x8xf32>
    %cst_23 = arith.constant dense<0xFF800000> : vector<2x8xf32>
    %39 = vector.multi_reduction <maximumf>, %38, %cst_23 [2] : vector<2x8x8xf32> to vector<2x8xf32>
    %40 = vector.shape_cast %39 : vector<2x8xf32> to vector<2x8x1xf32>
    %41 = vector.broadcast %40 : vector<2x8x1xf32> to vector<2x8x8xf32>
    %42 = arith.subf %38, %41 : vector<2x8x8xf32>
    %43 = math.exp %42 : vector<2x8x8xf32>
    %cst_24 = arith.constant dense<0.000000e+00> : vector<2x8xf32>
    %44 = vector.multi_reduction <add>, %43, %cst_24 [2] : vector<2x8x8xf32> to vector<2x8xf32>
    %45 = vector.shape_cast %44 : vector<2x8xf32> to vector<2x8x1xf32>
    %46 = tpu.reciprocal %45 {approx = true} : vector<2x8x1xf32> -> vector<2x8x1xf32>
    %47 = vector.broadcast %46 : vector<2x8x1xf32> to vector<2x8x8xf32>
    %48 = arith.mulf %43, %47 : vector<2x8x8xf32>
    %49 = arith.truncf %48 : vector<2x8x8xf32> to vector<2x8x8xbf16>
    "tpu.trace_start"() <{level = 10 : i32, message = "bqk,bkd->bqd"}> : () -> ()
    %cst_25 = arith.constant dense<0.000000e+00> : vector<2x8x8xf32>
    %50 = tpu.matmul %49, %35, %cst_25 {dimension_numbers = #tpu.dot_dimension_numbers<[2], [1], [1], [2], [0, 0, 0, 1, 1, 2], [0], [0]>} : vector<2x8x8xbf16>, vector<2x8x8xbf16>, vector<2x8x8xf32> -> vector<2x8x8xf32>
    "tpu.trace_stop"() : () -> ()
    %51 = vector.shape_cast %50 : vector<2x8x8xf32> to vector<16x8xf32>
    %52 = arith.truncf %51 : vector<16x8xf32> to vector<16x8xbf16>
    %c0_26 = arith.constant 0 : index
    %c0_27 = arith.constant 0 : index
    %c0_28 = arith.constant 0 : index
    %53 = vector.load %arg6[%c0_26, %c0_27, %c0_28] : memref<4x8x32xbf16, #tpu.memory_space<vmem>>, vector<1x8x32xbf16>
    %54 = vector.shape_cast %53 : vector<1x8x32xbf16> to vector<8x32xbf16>
    %cst_29 = arith.constant dense<0.000000e+00> : vector<16x32xf32>
    %55 = tpu.matmul %52, %54, %cst_29 {dimension_numbers = #tpu.dot_dimension_numbers<[1], [0], [0], [1], [0, 0, 1, 1], [], []>} : vector<16x8xbf16>, vector<8x32xbf16>, vector<16x32xf32> -> vector<16x32xf32>
    %56 = arith.addf %29, %55 : vector<16x32xf32>
    %57 = vector.extract_strided_slice %23 {offsets = [0, 0, 8], sizes = [2, 8, 8], strides = [1, 1, 1]} : vector<2x8x32xf32> to vector<2x8x8xf32>
    %58 = arith.truncf %57 : vector<2x8x8xf32> to vector<2x8x8xbf16>
    %59 = vector.extract_strided_slice %25 {offsets = [0, 0, 8], sizes = [2, 8, 8], strides = [1, 1, 1]} : vector<2x8x32xf32> to vector<2x8x8xf32>
    %60 = arith.truncf %59 : vector<2x8x8xf32> to vector<2x8x8xbf16>
    %61 = vector.extract_strided_slice %27 {offsets = [0, 0, 8], sizes = [2, 8, 8], strides = [1, 1, 1]} : vector<2x8x32xf32> to vector<2x8x8xf32>
    %62 = arith.truncf %61 : vector<2x8x8xf32> to vector<2x8x8xbf16>
    "tpu.trace_start"() <{level = 10 : i32, message = "bqd,bkd->bqk"}> : () -> ()
    %cst_30 = arith.constant dense<0.000000e+00> : vector<2x8x8xf32>
    %63 = tpu.matmul %58, %60, %cst_30 {dimension_numbers = #tpu.dot_dimension_numbers<[2], [2], [1], [1], [0, 0, 0, 1, 1, 1], [0], [0]>} : vector<2x8x8xbf16>, vector<2x8x8xbf16>, vector<2x8x8xf32> -> vector<2x8x8xf32>
    "tpu.trace_stop"() : () -> ()
    %64 = vector.broadcast %3 : vector<2x1x8xf32> to vector<2x8x8xf32>
    %65 = arith.addf %63, %64 : vector<2x8x8xf32>
    %cst_31 = arith.constant dense<0xFF800000> : vector<2x8xf32>
    %66 = vector.multi_reduction <maximumf>, %65, %cst_31 [2] : vector<2x8x8xf32> to vector<2x8xf32>
    %67 = vector.shape_cast %66 : vector<2x8xf32> to vector<2x8x1xf32>
    %68 = vector.broadcast %67 : vector<2x8x1xf32> to vector<2x8x8xf32>
    %69 = arith.subf %65, %68 : vector<2x8x8xf32>
    %70 = math.exp %69 : vector<2x8x8xf32>
    %cst_32 = arith.constant dense<0.000000e+00> : vector<2x8xf32>
    %71 = vector.multi_reduction <add>, %70, %cst_32 [2] : vector<2x8x8xf32> to vector<2x8xf32>
    %72 = vector.shape_cast %71 : vector<2x8xf32> to vector<2x8x1xf32>
    %73 = tpu.reciprocal %72 {approx = true} : vector<2x8x1xf32> -> vector<2x8x1xf32>
    %74 = vector.broadcast %73 : vector<2x8x1xf32> to vector<2x8x8xf32>
    %75 = arith.mulf %70, %74 : vector<2x8x8xf32>
    %76 = arith.truncf %75 : vector<2x8x8xf32> to vector<2x8x8xbf16>
    "tpu.trace_start"() <{level = 10 : i32, message = "bqk,bkd->bqd"}> : () -> ()
    %cst_33 = arith.constant dense<0.000000e+00> : vector<2x8x8xf32>
    %77 = tpu.matmul %76, %62, %cst_33 {dimension_numbers = #tpu.dot_dimension_numbers<[2], [1], [1], [2], [0, 0, 0, 1, 1, 2], [0], [0]>} : vector<2x8x8xbf16>, vector<2x8x8xbf16>, vector<2x8x8xf32> -> vector<2x8x8xf32>
    "tpu.trace_stop"() : () -> ()
    %78 = vector.shape_cast %77 : vector<2x8x8xf32> to vector<16x8xf32>
    %79 = arith.truncf %78 : vector<16x8xf32> to vector<16x8xbf16>
    %c1_34 = arith.constant 1 : index
    %c0_35 = arith.constant 0 : index
    %c0_36 = arith.constant 0 : index
    %80 = vector.load %arg6[%c1_34, %c0_35, %c0_36] : memref<4x8x32xbf16, #tpu.memory_space<vmem>>, vector<1x8x32xbf16>
    %81 = vector.shape_cast %80 : vector<1x8x32xbf16> to vector<8x32xbf16>
    %cst_37 = arith.constant dense<0.000000e+00> : vector<16x32xf32>
    %82 = tpu.matmul %79, %81, %cst_37 {dimension_numbers = #tpu.dot_dimension_numbers<[1], [0], [0], [1], [0, 0, 1, 1], [], []>} : vector<16x8xbf16>, vector<8x32xbf16>, vector<16x32xf32> -> vector<16x32xf32>
    %83 = arith.addf %56, %82 : vector<16x32xf32>
    %84 = vector.extract_strided_slice %23 {offsets = [0, 0, 16], sizes = [2, 8, 8], strides = [1, 1, 1]} : vector<2x8x32xf32> to vector<2x8x8xf32>
    %85 = arith.truncf %84 : vector<2x8x8xf32> to vector<2x8x8xbf16>
    %86 = vector.extract_strided_slice %25 {offsets = [0, 0, 16], sizes = [2, 8, 8], strides = [1, 1, 1]} : vector<2x8x32xf32> to vector<2x8x8xf32>
    %87 = arith.truncf %86 : vector<2x8x8xf32> to vector<2x8x8xbf16>
    %88 = vector.extract_strided_slice %27 {offsets = [0, 0, 16], sizes = [2, 8, 8], strides = [1, 1, 1]} : vector<2x8x32xf32> to vector<2x8x8xf32>
    %89 = arith.truncf %88 : vector<2x8x8xf32> to vector<2x8x8xbf16>
    "tpu.trace_start"() <{level = 10 : i32, message = "bqd,bkd->bqk"}> : () -> ()
    %cst_38 = arith.constant dense<0.000000e+00> : vector<2x8x8xf32>
    %90 = tpu.matmul %85, %87, %cst_38 {dimension_numbers = #tpu.dot_dimension_numbers<[2], [2], [1], [1], [0, 0, 0, 1, 1, 1], [0], [0]>} : vector<2x8x8xbf16>, vector<2x8x8xbf16>, vector<2x8x8xf32> -> vector<2x8x8xf32>
    "tpu.trace_stop"() : () -> ()
    %91 = vector.broadcast %3 : vector<2x1x8xf32> to vector<2x8x8xf32>
    %92 = arith.addf %90, %91 : vector<2x8x8xf32>
    %cst_39 = arith.constant dense<0xFF800000> : vector<2x8xf32>
    %93 = vector.multi_reduction <maximumf>, %92, %cst_39 [2] : vector<2x8x8xf32> to vector<2x8xf32>
    %94 = vector.shape_cast %93 : vector<2x8xf32> to vector<2x8x1xf32>
    %95 = vector.broadcast %94 : vector<2x8x1xf32> to vector<2x8x8xf32>
    %96 = arith.subf %92, %95 : vector<2x8x8xf32>
    %97 = math.exp %96 : vector<2x8x8xf32>
    %cst_40 = arith.constant dense<0.000000e+00> : vector<2x8xf32>
    %98 = vector.multi_reduction <add>, %97, %cst_40 [2] : vector<2x8x8xf32> to vector<2x8xf32>
    %99 = vector.shape_cast %98 : vector<2x8xf32> to vector<2x8x1xf32>
    %100 = tpu.reciprocal %99 {approx = true} : vector<2x8x1xf32> -> vector<2x8x1xf32>
    %101 = vector.broadcast %100 : vector<2x8x1xf32> to vector<2x8x8xf32>
    %102 = arith.mulf %97, %101 : vector<2x8x8xf32>
    %103 = arith.truncf %102 : vector<2x8x8xf32> to vector<2x8x8xbf16>
    "tpu.trace_start"() <{level = 10 : i32, message = "bqk,bkd->bqd"}> : () -> ()
    %cst_41 = arith.constant dense<0.000000e+00> : vector<2x8x8xf32>
    %104 = tpu.matmul %103, %89, %cst_41 {dimension_numbers = #tpu.dot_dimension_numbers<[2], [1], [1], [2], [0, 0, 0, 1, 1, 2], [0], [0]>} : vector<2x8x8xbf16>, vector<2x8x8xbf16>, vector<2x8x8xf32> -> vector<2x8x8xf32>
    "tpu.trace_stop"() : () -> ()
    %105 = vector.shape_cast %104 : vector<2x8x8xf32> to vector<16x8xf32>
    %106 = arith.truncf %105 : vector<16x8xf32> to vector<16x8xbf16>
    %c2 = arith.constant 2 : index
    %c0_42 = arith.constant 0 : index
    %c0_43 = arith.constant 0 : index
    %107 = vector.load %arg6[%c2, %c0_42, %c0_43] : memref<4x8x32xbf16, #tpu.memory_space<vmem>>, vector<1x8x32xbf16>
    %108 = vector.shape_cast %107 : vector<1x8x32xbf16> to vector<8x32xbf16>
    %cst_44 = arith.constant dense<0.000000e+00> : vector<16x32xf32>
    %109 = tpu.matmul %106, %108, %cst_44 {dimension_numbers = #tpu.dot_dimension_numbers<[1], [0], [0], [1], [0, 0, 1, 1], [], []>} : vector<16x8xbf16>, vector<8x32xbf16>, vector<16x32xf32> -> vector<16x32xf32>
    %110 = arith.addf %83, %109 : vector<16x32xf32>
    %111 = vector.extract_strided_slice %23 {offsets = [0, 0, 24], sizes = [2, 8, 8], strides = [1, 1, 1]} : vector<2x8x32xf32> to vector<2x8x8xf32>
    %112 = arith.truncf %111 : vector<2x8x8xf32> to vector<2x8x8xbf16>
    %113 = vector.extract_strided_slice %25 {offsets = [0, 0, 24], sizes = [2, 8, 8], strides = [1, 1, 1]} : vector<2x8x32xf32> to vector<2x8x8xf32>
    %114 = arith.truncf %113 : vector<2x8x8xf32> to vector<2x8x8xbf16>
    %115 = vector.extract_strided_slice %27 {offsets = [0, 0, 24], sizes = [2, 8, 8], strides = [1, 1, 1]} : vector<2x8x32xf32> to vector<2x8x8xf32>
    %116 = arith.truncf %115 : vector<2x8x8xf32> to vector<2x8x8xbf16>
    "tpu.trace_start"() <{level = 10 : i32, message = "bqd,bkd->bqk"}> : () -> ()
    %cst_45 = arith.constant dense<0.000000e+00> : vector<2x8x8xf32>
    %117 = tpu.matmul %112, %114, %cst_45 {dimension_numbers = #tpu.dot_dimension_numbers<[2], [2], [1], [1], [0, 0, 0, 1, 1, 1], [0], [0]>} : vector<2x8x8xbf16>, vector<2x8x8xbf16>, vector<2x8x8xf32> -> vector<2x8x8xf32>
    "tpu.trace_stop"() : () -> ()
    %118 = vector.broadcast %3 : vector<2x1x8xf32> to vector<2x8x8xf32>
    %119 = arith.addf %117, %118 : vector<2x8x8xf32>
    %cst_46 = arith.constant dense<0xFF800000> : vector<2x8xf32>
    %120 = vector.multi_reduction <maximumf>, %119, %cst_46 [2] : vector<2x8x8xf32> to vector<2x8xf32>
    %121 = vector.shape_cast %120 : vector<2x8xf32> to vector<2x8x1xf32>
    %122 = vector.broadcast %121 : vector<2x8x1xf32> to vector<2x8x8xf32>
    %123 = arith.subf %119, %122 : vector<2x8x8xf32>
    %124 = math.exp %123 : vector<2x8x8xf32>
    %cst_47 = arith.constant dense<0.000000e+00> : vector<2x8xf32>
    %125 = vector.multi_reduction <add>, %124, %cst_47 [2] : vector<2x8x8xf32> to vector<2x8xf32>
    %126 = vector.shape_cast %125 : vector<2x8xf32> to vector<2x8x1xf32>
    %127 = tpu.reciprocal %126 {approx = true} : vector<2x8x1xf32> -> vector<2x8x1xf32>
    %128 = vector.broadcast %127 : vector<2x8x1xf32> to vector<2x8x8xf32>
    %129 = arith.mulf %124, %128 : vector<2x8x8xf32>
    %130 = arith.truncf %129 : vector<2x8x8xf32> to vector<2x8x8xbf16>
    "tpu.trace_start"() <{level = 10 : i32, message = "bqk,bkd->bqd"}> : () -> ()
    %cst_48 = arith.constant dense<0.000000e+00> : vector<2x8x8xf32>
    %131 = tpu.matmul %130, %116, %cst_48 {dimension_numbers = #tpu.dot_dimension_numbers<[2], [1], [1], [2], [0, 0, 0, 1, 1, 2], [0], [0]>} : vector<2x8x8xbf16>, vector<2x8x8xbf16>, vector<2x8x8xf32> -> vector<2x8x8xf32>
    "tpu.trace_stop"() : () -> ()
    %132 = vector.shape_cast %131 : vector<2x8x8xf32> to vector<16x8xf32>
    %133 = arith.truncf %132 : vector<16x8xf32> to vector<16x8xbf16>
    %c3 = arith.constant 3 : index
    %c0_49 = arith.constant 0 : index
    %c0_50 = arith.constant 0 : index
    %134 = vector.load %arg6[%c3, %c0_49, %c0_50] : memref<4x8x32xbf16, #tpu.memory_space<vmem>>, vector<1x8x32xbf16>
    %135 = vector.shape_cast %134 : vector<1x8x32xbf16> to vector<8x32xbf16>
    %cst_51 = arith.constant dense<0.000000e+00> : vector<16x32xf32>
    %136 = tpu.matmul %133, %135, %cst_51 {dimension_numbers = #tpu.dot_dimension_numbers<[1], [0], [0], [1], [0, 0, 1, 1], [], []>} : vector<16x8xbf16>, vector<8x32xbf16>, vector<16x32xf32> -> vector<16x32xf32>
    %137 = arith.addf %110, %136 : vector<16x32xf32>
    %138 = vector.broadcast %28 : vector<1x32xf32> to vector<16x32xf32>
    %139 = arith.addf %137, %138 : vector<16x32xf32>
    %140 = vector.broadcast %5 : f32 to vector<16x32xf32>
    %141 = arith.mulf %140, %139 : vector<16x32xf32>
    %142 = arith.addf %7, %141 : vector<16x32xf32>
    %143 = arith.truncf %142 : vector<16x32xf32> to vector<16x32xbf16>
    %c0_52 = arith.constant 0 : index
    %c96 = arith.constant 96 : index
    %144 = vector.load %arg4[%c0_52, %c96] : memref<32x256xbf16, #tpu.memory_space<vmem>>, vector<32x32xbf16>
    %cst_53 = arith.constant dense<0.000000e+00> : vector<16x32xf32>
    %145 = tpu.matmul %143, %144, %cst_53 {dimension_numbers = #tpu.dot_dimension_numbers<[1], [0], [0], [1], [0, 0, 1, 1], [], []>} : vector<16x32xbf16>, vector<32x32xbf16>, vector<16x32xf32> -> vector<16x32xf32>
    %c0_54 = arith.constant 0 : index
    %c96_55 = arith.constant 96 : index
    %146 = vector.load %arg5[%c0_54, %c96_55] : memref<1x320xf32, #tpu.memory_space<vmem>>, vector<1x32xf32>
    %147 = vector.broadcast %146 : vector<1x32xf32> to vector<16x32xf32>
    %148 = arith.addf %145, %147 : vector<16x32xf32>
    %cst_56 = arith.constant 0.000000e+00 : f32
    %149 = vector.broadcast %cst_56 : f32 to vector<16x32xf32>
    %150 = arith.maximumf %148, %149 : vector<16x32xf32>
    %151 = vector.broadcast %6 : f32 to vector<16x32xf32>
    %152 = arith.mulf %151, %150 : vector<16x32xf32>
    %153 = arith.addf %142, %152 : vector<16x32xf32>
    %154 = arith.truncf %153 : vector<16x32xf32> to vector<16x32xbf16>
    %c0_57 = arith.constant 0 : index
    %c128 = arith.constant 128 : index
    %155 = vector.load %arg4[%c0_57, %c128] : memref<32x256xbf16, #tpu.memory_space<vmem>>, vector<32x96xbf16>
    %cst_58 = arith.constant dense<0.000000e+00> : vector<16x96xf32>
    %156 = tpu.matmul %154, %155, %cst_58 {dimension_numbers = #tpu.dot_dimension_numbers<[1], [0], [0], [1], [0, 0, 1, 1], [], []>} : vector<16x32xbf16>, vector<32x96xbf16>, vector<16x96xf32> -> vector<16x96xf32>
    %c0_59 = arith.constant 0 : index
    %c128_60 = arith.constant 128 : index
    %157 = vector.load %arg5[%c0_59, %c128_60] : memref<1x320xf32, #tpu.memory_space<vmem>>, vector<1x96xf32>
    %158 = vector.broadcast %157 : vector<1x96xf32> to vector<16x96xf32>
    %159 = arith.addf %156, %158 : vector<16x96xf32>
    %160 = vector.extract_strided_slice %159 {offsets = [0, 0], sizes = [16, 32], strides = [1, 1]} : vector<16x96xf32> to vector<16x32xf32>
    %cst_61 = arith.constant 0.353553385 : f32
    %161 = vector.broadcast %cst_61 : f32 to vector<16x32xf32>
    %162 = arith.mulf %160, %161 : vector<16x32xf32>
    %163 = vector.shape_cast %162 : vector<16x32xf32> to vector<2x8x32xf32>
    %164 = vector.extract_strided_slice %159 {offsets = [0, 32], sizes = [16, 32], strides = [1, 1]} : vector<16x96xf32> to vector<16x32xf32>
    %165 = vector.shape_cast %164 : vector<16x32xf32> to vector<2x8x32xf32>
    %166 = vector.extract_strided_slice %159 {offsets = [0, 64], sizes = [16, 32], strides = [1, 1]} : vector<16x96xf32> to vector<16x32xf32>
    %167 = vector.shape_cast %166 : vector<16x32xf32> to vector<2x8x32xf32>
    %c0_62 = arith.constant 0 : index
    %c288 = arith.constant 288 : index
    %168 = vector.load %arg5[%c0_62, %c288] : memref<1x320xf32, #tpu.memory_space<vmem>>, vector<1x32xf32>
    %cst_63 = arith.constant 0.000000e+00 : f32
    %169 = vector.broadcast %cst_63 : f32 to vector<16x32xf32>
    %170 = vector.extract_strided_slice %163 {offsets = [0, 0, 0], sizes = [2, 8, 8], strides = [1, 1, 1]} : vector<2x8x32xf32> to vector<2x8x8xf32>
    %171 = arith.truncf %170 : vector<2x8x8xf32> to vector<2x8x8xbf16>
    %172 = vector.extract_strided_slice %165 {offsets = [0, 0, 0], sizes = [2, 8, 8], strides = [1, 1, 1]} : vector<2x8x32xf32> to vector<2x8x8xf32>
    %173 = arith.truncf %172 : vector<2x8x8xf32> to vector<2x8x8xbf16>
    %174 = vector.extract_strided_slice %167 {offsets = [0, 0, 0], sizes = [2, 8, 8], strides = [1, 1, 1]} : vector<2x8x32xf32> to vector<2x8x8xf32>
    %175 = arith.truncf %174 : vector<2x8x8xf32> to vector<2x8x8xbf16>
    "tpu.trace_start"() <{level = 10 : i32, message = "bqd,bkd->bqk"}> : () -> ()
    %cst_64 = arith.constant dense<0.000000e+00> : vector<2x8x8xf32>
    %176 = tpu.matmul %171, %173, %cst_64 {dimension_numbers = #tpu.dot_dimension_numbers<[2], [2], [1], [1], [0, 0, 0, 1, 1, 1], [0], [0]>} : vector<2x8x8xbf16>, vector<2x8x8xbf16>, vector<2x8x8xf32> -> vector<2x8x8xf32>
    "tpu.trace_stop"() : () -> ()
    %177 = vector.broadcast %4 : vector<2x1x8xf32> to vector<2x8x8xf32>
    %178 = arith.addf %176, %177 : vector<2x8x8xf32>
    %cst_65 = arith.constant dense<0xFF800000> : vector<2x8xf32>
    %179 = vector.multi_reduction <maximumf>, %178, %cst_65 [2] : vector<2x8x8xf32> to vector<2x8xf32>
    %180 = vector.shape_cast %179 : vector<2x8xf32> to vector<2x8x1xf32>
    %181 = vector.broadcast %180 : vector<2x8x1xf32> to vector<2x8x8xf32>
    %182 = arith.subf %178, %181 : vector<2x8x8xf32>
    %183 = math.exp %182 : vector<2x8x8xf32>
    %cst_66 = arith.constant dense<0.000000e+00> : vector<2x8xf32>
    %184 = vector.multi_reduction <add>, %183, %cst_66 [2] : vector<2x8x8xf32> to vector<2x8xf32>
    %185 = vector.shape_cast %184 : vector<2x8xf32> to vector<2x8x1xf32>
    %186 = tpu.reciprocal %185 {approx = true} : vector<2x8x1xf32> -> vector<2x8x1xf32>
    %187 = vector.broadcast %186 : vector<2x8x1xf32> to vector<2x8x8xf32>
    %188 = arith.mulf %183, %187 : vector<2x8x8xf32>
    %189 = arith.truncf %188 : vector<2x8x8xf32> to vector<2x8x8xbf16>
    "tpu.trace_start"() <{level = 10 : i32, message = "bqk,bkd->bqd"}> : () -> ()
    %cst_67 = arith.constant dense<0.000000e+00> : vector<2x8x8xf32>
    %190 = tpu.matmul %189, %175, %cst_67 {dimension_numbers = #tpu.dot_dimension_numbers<[2], [1], [1], [2], [0, 0, 0, 1, 1, 2], [0], [0]>} : vector<2x8x8xbf16>, vector<2x8x8xbf16>, vector<2x8x8xf32> -> vector<2x8x8xf32>
    "tpu.trace_stop"() : () -> ()
    %191 = vector.shape_cast %190 : vector<2x8x8xf32> to vector<16x8xf32>
    %192 = arith.truncf %191 : vector<16x8xf32> to vector<16x8xbf16>
    %c0_68 = arith.constant 0 : index
    %c0_69 = arith.constant 0 : index
    %c0_70 = arith.constant 0 : index
    %193 = vector.load %arg7[%c0_68, %c0_69, %c0_70] : memref<4x8x32xbf16, #tpu.memory_space<vmem>>, vector<1x8x32xbf16>
    %194 = vector.shape_cast %193 : vector<1x8x32xbf16> to vector<8x32xbf16>
    %cst_71 = arith.constant dense<0.000000e+00> : vector<16x32xf32>
    %195 = tpu.matmul %192, %194, %cst_71 {dimension_numbers = #tpu.dot_dimension_numbers<[1], [0], [0], [1], [0, 0, 1, 1], [], []>} : vector<16x8xbf16>, vector<8x32xbf16>, vector<16x32xf32> -> vector<16x32xf32>
    %196 = arith.addf %169, %195 : vector<16x32xf32>
    %197 = vector.extract_strided_slice %163 {offsets = [0, 0, 8], sizes = [2, 8, 8], strides = [1, 1, 1]} : vector<2x8x32xf32> to vector<2x8x8xf32>
    %198 = arith.truncf %197 : vector<2x8x8xf32> to vector<2x8x8xbf16>
    %199 = vector.extract_strided_slice %165 {offsets = [0, 0, 8], sizes = [2, 8, 8], strides = [1, 1, 1]} : vector<2x8x32xf32> to vector<2x8x8xf32>
    %200 = arith.truncf %199 : vector<2x8x8xf32> to vector<2x8x8xbf16>
    %201 = vector.extract_strided_slice %167 {offsets = [0, 0, 8], sizes = [2, 8, 8], strides = [1, 1, 1]} : vector<2x8x32xf32> to vector<2x8x8xf32>
    %202 = arith.truncf %201 : vector<2x8x8xf32> to vector<2x8x8xbf16>
    "tpu.trace_start"() <{level = 10 : i32, message = "bqd,bkd->bqk"}> : () -> ()
    %cst_72 = arith.constant dense<0.000000e+00> : vector<2x8x8xf32>
    %203 = tpu.matmul %198, %200, %cst_72 {dimension_numbers = #tpu.dot_dimension_numbers<[2], [2], [1], [1], [0, 0, 0, 1, 1, 1], [0], [0]>} : vector<2x8x8xbf16>, vector<2x8x8xbf16>, vector<2x8x8xf32> -> vector<2x8x8xf32>
    "tpu.trace_stop"() : () -> ()
    %204 = vector.broadcast %4 : vector<2x1x8xf32> to vector<2x8x8xf32>
    %205 = arith.addf %203, %204 : vector<2x8x8xf32>
    %cst_73 = arith.constant dense<0xFF800000> : vector<2x8xf32>
    %206 = vector.multi_reduction <maximumf>, %205, %cst_73 [2] : vector<2x8x8xf32> to vector<2x8xf32>
    %207 = vector.shape_cast %206 : vector<2x8xf32> to vector<2x8x1xf32>
    %208 = vector.broadcast %207 : vector<2x8x1xf32> to vector<2x8x8xf32>
    %209 = arith.subf %205, %208 : vector<2x8x8xf32>
    %210 = math.exp %209 : vector<2x8x8xf32>
    %cst_74 = arith.constant dense<0.000000e+00> : vector<2x8xf32>
    %211 = vector.multi_reduction <add>, %210, %cst_74 [2] : vector<2x8x8xf32> to vector<2x8xf32>
    %212 = vector.shape_cast %211 : vector<2x8xf32> to vector<2x8x1xf32>
    %213 = tpu.reciprocal %212 {approx = true} : vector<2x8x1xf32> -> vector<2x8x1xf32>
    %214 = vector.broadcast %213 : vector<2x8x1xf32> to vector<2x8x8xf32>
    %215 = arith.mulf %210, %214 : vector<2x8x8xf32>
    %216 = arith.truncf %215 : vector<2x8x8xf32> to vector<2x8x8xbf16>
    "tpu.trace_start"() <{level = 10 : i32, message = "bqk,bkd->bqd"}> : () -> ()
    %cst_75 = arith.constant dense<0.000000e+00> : vector<2x8x8xf32>
    %217 = tpu.matmul %216, %202, %cst_75 {dimension_numbers = #tpu.dot_dimension_numbers<[2], [1], [1], [2], [0, 0, 0, 1, 1, 2], [0], [0]>} : vector<2x8x8xbf16>, vector<2x8x8xbf16>, vector<2x8x8xf32> -> vector<2x8x8xf32>
    "tpu.trace_stop"() : () -> ()
    %218 = vector.shape_cast %217 : vector<2x8x8xf32> to vector<16x8xf32>
    %219 = arith.truncf %218 : vector<16x8xf32> to vector<16x8xbf16>
    %c1_76 = arith.constant 1 : index
    %c0_77 = arith.constant 0 : index
    %c0_78 = arith.constant 0 : index
    %220 = vector.load %arg7[%c1_76, %c0_77, %c0_78] : memref<4x8x32xbf16, #tpu.memory_space<vmem>>, vector<1x8x32xbf16>
    %221 = vector.shape_cast %220 : vector<1x8x32xbf16> to vector<8x32xbf16>
    %cst_79 = arith.constant dense<0.000000e+00> : vector<16x32xf32>
    %222 = tpu.matmul %219, %221, %cst_79 {dimension_numbers = #tpu.dot_dimension_numbers<[1], [0], [0], [1], [0, 0, 1, 1], [], []>} : vector<16x8xbf16>, vector<8x32xbf16>, vector<16x32xf32> -> vector<16x32xf32>
    %223 = arith.addf %196, %222 : vector<16x32xf32>
    %224 = vector.extract_strided_slice %163 {offsets = [0, 0, 16], sizes = [2, 8, 8], strides = [1, 1, 1]} : vector<2x8x32xf32> to vector<2x8x8xf32>
    %225 = arith.truncf %224 : vector<2x8x8xf32> to vector<2x8x8xbf16>
    %226 = vector.extract_strided_slice %165 {offsets = [0, 0, 16], sizes = [2, 8, 8], strides = [1, 1, 1]} : vector<2x8x32xf32> to vector<2x8x8xf32>
    %227 = arith.truncf %226 : vector<2x8x8xf32> to vector<2x8x8xbf16>
    %228 = vector.extract_strided_slice %167 {offsets = [0, 0, 16], sizes = [2, 8, 8], strides = [1, 1, 1]} : vector<2x8x32xf32> to vector<2x8x8xf32>
    %229 = arith.truncf %228 : vector<2x8x8xf32> to vector<2x8x8xbf16>
    "tpu.trace_start"() <{level = 10 : i32, message = "bqd,bkd->bqk"}> : () -> ()
    %cst_80 = arith.constant dense<0.000000e+00> : vector<2x8x8xf32>
    %230 = tpu.matmul %225, %227, %cst_80 {dimension_numbers = #tpu.dot_dimension_numbers<[2], [2], [1], [1], [0, 0, 0, 1, 1, 1], [0], [0]>} : vector<2x8x8xbf16>, vector<2x8x8xbf16>, vector<2x8x8xf32> -> vector<2x8x8xf32>
    "tpu.trace_stop"() : () -> ()
    %231 = vector.broadcast %4 : vector<2x1x8xf32> to vector<2x8x8xf32>
    %232 = arith.addf %230, %231 : vector<2x8x8xf32>
    %cst_81 = arith.constant dense<0xFF800000> : vector<2x8xf32>
    %233 = vector.multi_reduction <maximumf>, %232, %cst_81 [2] : vector<2x8x8xf32> to vector<2x8xf32>
    %234 = vector.shape_cast %233 : vector<2x8xf32> to vector<2x8x1xf32>
    %235 = vector.broadcast %234 : vector<2x8x1xf32> to vector<2x8x8xf32>
    %236 = arith.subf %232, %235 : vector<2x8x8xf32>
    %237 = math.exp %236 : vector<2x8x8xf32>
    %cst_82 = arith.constant dense<0.000000e+00> : vector<2x8xf32>
    %238 = vector.multi_reduction <add>, %237, %cst_82 [2] : vector<2x8x8xf32> to vector<2x8xf32>
    %239 = vector.shape_cast %238 : vector<2x8xf32> to vector<2x8x1xf32>
    %240 = tpu.reciprocal %239 {approx = true} : vector<2x8x1xf32> -> vector<2x8x1xf32>
    %241 = vector.broadcast %240 : vector<2x8x1xf32> to vector<2x8x8xf32>
    %242 = arith.mulf %237, %241 : vector<2x8x8xf32>
    %243 = arith.truncf %242 : vector<2x8x8xf32> to vector<2x8x8xbf16>
    "tpu.trace_start"() <{level = 10 : i32, message = "bqk,bkd->bqd"}> : () -> ()
    %cst_83 = arith.constant dense<0.000000e+00> : vector<2x8x8xf32>
    %244 = tpu.matmul %243, %229, %cst_83 {dimension_numbers = #tpu.dot_dimension_numbers<[2], [1], [1], [2], [0, 0, 0, 1, 1, 2], [0], [0]>} : vector<2x8x8xbf16>, vector<2x8x8xbf16>, vector<2x8x8xf32> -> vector<2x8x8xf32>
    "tpu.trace_stop"() : () -> ()
    %245 = vector.shape_cast %244 : vector<2x8x8xf32> to vector<16x8xf32>
    %246 = arith.truncf %245 : vector<16x8xf32> to vector<16x8xbf16>
    %c2_84 = arith.constant 2 : index
    %c0_85 = arith.constant 0 : index
    %c0_86 = arith.constant 0 : index
    %247 = vector.load %arg7[%c2_84, %c0_85, %c0_86] : memref<4x8x32xbf16, #tpu.memory_space<vmem>>, vector<1x8x32xbf16>
    %248 = vector.shape_cast %247 : vector<1x8x32xbf16> to vector<8x32xbf16>
    %cst_87 = arith.constant dense<0.000000e+00> : vector<16x32xf32>
    %249 = tpu.matmul %246, %248, %cst_87 {dimension_numbers = #tpu.dot_dimension_numbers<[1], [0], [0], [1], [0, 0, 1, 1], [], []>} : vector<16x8xbf16>, vector<8x32xbf16>, vector<16x32xf32> -> vector<16x32xf32>
    %250 = arith.addf %223, %249 : vector<16x32xf32>
    %251 = vector.extract_strided_slice %163 {offsets = [0, 0, 24], sizes = [2, 8, 8], strides = [1, 1, 1]} : vector<2x8x32xf32> to vector<2x8x8xf32>
    %252 = arith.truncf %251 : vector<2x8x8xf32> to vector<2x8x8xbf16>
    %253 = vector.extract_strided_slice %165 {offsets = [0, 0, 24], sizes = [2, 8, 8], strides = [1, 1, 1]} : vector<2x8x32xf32> to vector<2x8x8xf32>
    %254 = arith.truncf %253 : vector<2x8x8xf32> to vector<2x8x8xbf16>
    %255 = vector.extract_strided_slice %167 {offsets = [0, 0, 24], sizes = [2, 8, 8], strides = [1, 1, 1]} : vector<2x8x32xf32> to vector<2x8x8xf32>
    %256 = arith.truncf %255 : vector<2x8x8xf32> to vector<2x8x8xbf16>
    "tpu.trace_start"() <{level = 10 : i32, message = "bqd,bkd->bqk"}> : () -> ()
    %cst_88 = arith.constant dense<0.000000e+00> : vector<2x8x8xf32>
    %257 = tpu.matmul %252, %254, %cst_88 {dimension_numbers = #tpu.dot_dimension_numbers<[2], [2], [1], [1], [0, 0, 0, 1, 1, 1], [0], [0]>} : vector<2x8x8xbf16>, vector<2x8x8xbf16>, vector<2x8x8xf32> -> vector<2x8x8xf32>
    "tpu.trace_stop"() : () -> ()
    %258 = vector.broadcast %4 : vector<2x1x8xf32> to vector<2x8x8xf32>
    %259 = arith.addf %257, %258 : vector<2x8x8xf32>
    %cst_89 = arith.constant dense<0xFF800000> : vector<2x8xf32>
    %260 = vector.multi_reduction <maximumf>, %259, %cst_89 [2] : vector<2x8x8xf32> to vector<2x8xf32>
    %261 = vector.shape_cast %260 : vector<2x8xf32> to vector<2x8x1xf32>
    %262 = vector.broadcast %261 : vector<2x8x1xf32> to vector<2x8x8xf32>
    %263 = arith.subf %259, %262 : vector<2x8x8xf32>
    %264 = math.exp %263 : vector<2x8x8xf32>
    %cst_90 = arith.constant dense<0.000000e+00> : vector<2x8xf32>
    %265 = vector.multi_reduction <add>, %264, %cst_90 [2] : vector<2x8x8xf32> to vector<2x8xf32>
    %266 = vector.shape_cast %265 : vector<2x8xf32> to vector<2x8x1xf32>
    %267 = tpu.reciprocal %266 {approx = true} : vector<2x8x1xf32> -> vector<2x8x1xf32>
    %268 = vector.broadcast %267 : vector<2x8x1xf32> to vector<2x8x8xf32>
    %269 = arith.mulf %264, %268 : vector<2x8x8xf32>
    %270 = arith.truncf %269 : vector<2x8x8xf32> to vector<2x8x8xbf16>
    "tpu.trace_start"() <{level = 10 : i32, message = "bqk,bkd->bqd"}> : () -> ()
    %cst_91 = arith.constant dense<0.000000e+00> : vector<2x8x8xf32>
    %271 = tpu.matmul %270, %256, %cst_91 {dimension_numbers = #tpu.dot_dimension_numbers<[2], [1], [1], [2], [0, 0, 0, 1, 1, 2], [0], [0]>} : vector<2x8x8xbf16>, vector<2x8x8xbf16>, vector<2x8x8xf32> -> vector<2x8x8xf32>
    "tpu.trace_stop"() : () -> ()
    %272 = vector.shape_cast %271 : vector<2x8x8xf32> to vector<16x8xf32>
    %273 = arith.truncf %272 : vector<16x8xf32> to vector<16x8xbf16>
    %c3_92 = arith.constant 3 : index
    %c0_93 = arith.constant 0 : index
    %c0_94 = arith.constant 0 : index
    %274 = vector.load %arg7[%c3_92, %c0_93, %c0_94] : memref<4x8x32xbf16, #tpu.memory_space<vmem>>, vector<1x8x32xbf16>
    %275 = vector.shape_cast %274 : vector<1x8x32xbf16> to vector<8x32xbf16>
    %cst_95 = arith.constant dense<0.000000e+00> : vector<16x32xf32>
    %276 = tpu.matmul %273, %275, %cst_95 {dimension_numbers = #tpu.dot_dimension_numbers<[1], [0], [0], [1], [0, 0, 1, 1], [], []>} : vector<16x8xbf16>, vector<8x32xbf16>, vector<16x32xf32> -> vector<16x32xf32>
    %277 = arith.addf %250, %276 : vector<16x32xf32>
    %278 = vector.broadcast %168 : vector<1x32xf32> to vector<16x32xf32>
    %279 = arith.addf %277, %278 : vector<16x32xf32>
    %280 = arith.addf %153, %279 : vector<16x32xf32>
    %281 = arith.truncf %280 : vector<16x32xf32> to vector<16x32xbf16>
    %c0_96 = arith.constant 0 : index
    %c224 = arith.constant 224 : index
    %282 = vector.load %arg4[%c0_96, %c224] : memref<32x256xbf16, #tpu.memory_space<vmem>>, vector<32x32xbf16>
    %cst_97 = arith.constant dense<0.000000e+00> : vector<16x32xf32>
    %283 = tpu.matmul %281, %282, %cst_97 {dimension_numbers = #tpu.dot_dimension_numbers<[1], [0], [0], [1], [0, 0, 1, 1], [], []>} : vector<16x32xbf16>, vector<32x32xbf16>, vector<16x32xf32> -> vector<16x32xf32>
    %c0_98 = arith.constant 0 : index
    %c224_99 = arith.constant 224 : index
    %284 = vector.load %arg5[%c0_98, %c224_99] : memref<1x320xf32, #tpu.memory_space<vmem>>, vector<1x32xf32>
    %285 = vector.broadcast %284 : vector<1x32xf32> to vector<16x32xf32>
    %286 = arith.addf %283, %285 : vector<16x32xf32>
    %cst_100 = arith.constant 0.000000e+00 : f32
    %287 = vector.broadcast %cst_100 : f32 to vector<16x32xf32>
    %288 = arith.maximumf %286, %287 : vector<16x32xf32>
    %289 = arith.addf %280, %288 : vector<16x32xf32>
    %290 = vector.shape_cast %289 : vector<16x32xf32> to vector<2x8x32xf32>
    %291 = vector.extract_strided_slice %290 {offsets = [0, 0, 0], sizes = [2, 1, 32], strides = [1, 1, 1]} : vector<2x8x32xf32> to vector<2x1x32xf32>
    %292 = vector.extract_strided_slice %290 {offsets = [0, 1, 0], sizes = [2, 1, 32], strides = [1, 1, 1]} : vector<2x8x32xf32> to vector<2x1x32xf32>
    %293 = vector.extract_strided_slice %290 {offsets = [0, 2, 0], sizes = [2, 1, 32], strides = [1, 1, 1]} : vector<2x8x32xf32> to vector<2x1x32xf32>
    %294 = vector.extract_strided_slice %290 {offsets = [0, 3, 0], sizes = [2, 1, 32], strides = [1, 1, 1]} : vector<2x8x32xf32> to vector<2x1x32xf32>
    %295 = vector.extract_strided_slice %290 {offsets = [0, 4, 0], sizes = [2, 1, 32], strides = [1, 1, 1]} : vector<2x8x32xf32> to vector<2x1x32xf32>
    %296 = vector.extract_strided_slice %290 {offsets = [0, 5, 0], sizes = [2, 1, 32], strides = [1, 1, 1]} : vector<2x8x32xf32> to vector<2x1x32xf32>
    %297 = vector.extract_strided_slice %290 {offsets = [0, 6, 0], sizes = [2, 1, 32], strides = [1, 1, 1]} : vector<2x8x32xf32> to vector<2x1x32xf32>
    %298 = vector.extract_strided_slice %290 {offsets = [0, 7, 0], sizes = [2, 1, 32], strides = [1, 1, 1]} : vector<2x8x32xf32> to vector<2x1x32xf32>
    %299 = tpu.concatenate %291, %292, %293, %294, %295, %296, %297, %298 in 2 : vector<2x1x32xf32>, vector<2x1x32xf32>, vector<2x1x32xf32>, vector<2x1x32xf32>, vector<2x1x32xf32>, vector<2x1x32xf32>, vector<2x1x32xf32>, vector<2x1x32xf32> -> vector<2x1x256xf32>
    %c0_101 = arith.constant 0 : index
    %c0_102 = arith.constant 0 : index
    %c0_103 = arith.constant 0 : index
    %300 = vector.load %arg9[%c0_101, %c0_102, %c0_103] : memref<2x1x256xf32, #tpu.memory_space<vmem>>, vector<2x1x256xf32>
    tpu.vector_store %arg9[%c0_101, %c0_102, %c0_103], %299 {strides = array<i32>} : memref<2x1x256xf32, #tpu.memory_space<vmem>>, vector<2x1x256xf32>,
    return
  }
  func.func @transform_0(%arg0: i32) -> (i32, i32, i32) {
    %c0_i32 = arith.constant 0 : i32
    %c0_i32_0 = arith.constant 0 : i32
    %c0_i32_1 = arith.constant 0 : i32
    return %arg0, %c0_i32, %c0_i32_0 : i32, i32, i32
  }
  func.func @transform_1(%arg0: i32) -> (i32, i32, i32) {
    %c0_i32 = arith.constant 0 : i32
    %c0_i32_0 = arith.constant 0 : i32
    %c0_i32_1 = arith.constant 0 : i32
    return %arg0, %c0_i32, %c0_i32_0 : i32, i32, i32
  }
  func.func @transform_2(%arg0: i32) -> (i32, i32, i32) {
    %c0_i32 = arith.constant 0 : i32
    %c0_i32_0 = arith.constant 0 : i32
    %c0_i32_1 = arith.constant 0 : i32
    return %arg0, %c0_i32, %c0_i32_0 : i32, i32, i32
  }
  func.func @transform_3(%arg0: i32) -> (i32, i32) {
    %c0_i32 = arith.constant 0 : i32
    %c0_i32_0 = arith.constant 0 : i32
    %c0_i32_1 = arith.constant 0 : i32
    return %c0_i32, %c0_i32_0 : i32, i32
  }
  func.func @transform_4(%arg0: i32) -> (i32, i32) {
    %c0_i32 = arith.constant 0 : i32
    %c0_i32_0 = arith.constant 0 : i32
    %c0_i32_1 = arith.constant 0 : i32
    return %c0_i32, %c0_i32_0 : i32, i32
  }
  func.func @transform_5(%arg0: i32) -> (i32, i32, i32) {
    %c0_i32 = arith.constant 0 : i32
    %c0_i32_0 = arith.constant 0 : i32
    %c0_i32_1 = arith.constant 0 : i32
    %c0_i32_2 = arith.constant 0 : i32
    return %c0_i32, %c0_i32_0, %c0_i32_1 : i32, i32, i32
  }
  func.func @transform_6(%arg0: i32) -> (i32, i32, i32) {
    %c0_i32 = arith.constant 0 : i32
    %c0_i32_0 = arith.constant 0 : i32
    %c0_i32_1 = arith.constant 0 : i32
    %c0_i32_2 = arith.constant 0 : i32
    return %c0_i32, %c0_i32_0, %c0_i32_1 : i32, i32, i32
  }
  func.func @transform_7(%arg0: i32) -> (i32, i32) {
    %c0_i32 = arith.constant 0 : i32
    %c0_i32_0 = arith.constant 0 : i32
    %c0_i32_1 = arith.constant 0 : i32
    return %c0_i32, %c0_i32_0 : i32, i32
  }
  func.func @transform_8(%arg0: i32) -> (i32, i32, i32) {
    %c0_i32 = arith.constant 0 : i32
    %c0_i32_0 = arith.constant 0 : i32
    %c0_i32_1 = arith.constant 0 : i32
    return %arg0, %c0_i32, %c0_i32_0 : i32, i32, i32
  }
}

</mosaic_0001>

<llo_original>
// kernel: tpu_custom_call.1
$region0: #{tpu_custom_call.1}
  #allocation0 [shape = 'u32[]', space=smem, size = 0x4, offset = 0x4, fixed_abs, tag = 'smem constant byte address 0x4 - core index']
  #allocation1 [shape = 'u32[144,128]{1,0:T(1,128)}', space=vmem, size = 0x12000, scoped, tag = 'internal scratch']
  %s0 = inlined_call_operand.hbm [shape: f32[2,8,32], index: 0, kind: input, shape index: {}]
  %s1 = inlined_call_operand.hbm [shape: f32[2,8,32], index: 1, kind: input, shape index: {}]
  %s2 = inlined_call_operand.hbm [shape: f32[2,2,8], index: 2, kind: input, shape index: {}]
  %s3 = inlined_call_operand.hbm [shape: bf16[32,256], index: 3, kind: input, shape index: {}]
  %s4 = inlined_call_operand.hbm [shape: f32[1,320], index: 4, kind: input, shape index: {}]
  %s5 = inlined_call_operand.vmem [shape: bf16[4,8,32], index: 5, kind: input, shape index: {}]
  %s6 = inlined_call_operand.hbm [shape: bf16[4,8,32], index: 6, kind: input, shape index: {}]
  %s7 = inlined_call_operand.vmem [shape: f32[1,2], index: 7, kind: input, shape index: {}]
  %s8 = inlined_call_operand.hbm [shape: f32[2,1,256], index: 8, kind: output, shape index: {}]
  %s9 = sld [smem:[#allocation0]]
  $region70: #{tpu_custom_call.1} parent=0
    _
  %s11 = ssub.s32 1, %s9
  %s12 = scalar_select 0, %s11, %s9
  $region1: #{tpu_custom_call.1} parent=0
    #allocation2 [shape = 'u8[8192]{0}', space=vmem, size = 0x2000, scoped, tag = 'input window, operand 0, single buffered']
    #allocation3 [shape = 's32[1]{0}', space=sflag, size = 0x4, scoped, tag = 'scoped memory for tpu_custom_call.1']
    #allocation4 [shape = 's32[1]{0}', space=sflag, size = 0x4, scoped, tag = 'scoped memory for tpu_custom_call.1']
    #allocation5 [shape = 's32[1]{0}', space=sflag, size = 0x4, scoped, tag = 'scoped memory for tpu_custom_call.1']
    #allocation6 [shape = 'u8[8192]{0}', space=vmem, size = 0x2000, scoped, tag = 'input window, operand 1, single buffered']
    #allocation7 [shape = 's32[1]{0}', space=sflag, size = 0x4, scoped, tag = 'scoped memory for tpu_custom_call.1']
    #allocation8 [shape = 'u8[2048]{0}', space=vmem, size = 0x800, scoped, tag = 'input window, operand 2, single buffered']
    #allocation9 [shape = 'u8[16384]{0}', space=vmem, size = 0x4000, scoped, tag = 'input window, operand 3, single buffered']
    #allocation10 [shape = 's32[1]{0}', space=sflag, size = 0x4, scoped, tag = 'scoped memory for tpu_custom_call.1']
    #allocation11 [shape = 'u8[1536]{0}', space=vmem, size = 0x800, scoped, tag = 'input window, operand 4, single buffered']
    #allocation12 [shape = 'u8[8192]{0}', space=vmem, size = 0x2000, scoped, tag = 'input window, operand 6, single buffered']
    #allocation13 [shape = 's32[1]{0}', space=sflag, size = 0x4, scoped, tag = 'scoped memory for tpu_custom_call.1']
    #allocation14 [shape = 'u8[512]{0}', space=smem, size = 0x200, scoped, tag = 'input window, operand 7, single buffered']
    #allocation15 [shape = 'u8[2048]{0}', space=vmem, size = 0x800, scoped, tag = 'output window, operand 0, single buffered']
    %13 = vsyncpa [#allocation3], 0
    %14 = vsyncpa [#allocation7], 0
    %15 = vsyncpa [#allocation10], 0
    %16 = vsyncpa [#allocation13], 0
    %17 = vsyncpa [#allocation5], 0
    %18 = vsyncpa [#allocation4], 0
    // Predicated region
    $region2: #{tpu_custom_call.1} parent=1 // pred_check
      _
    $region3: #{tpu_custom_call.1} parent=1 // pred_check_branch
      %20 = sbr.rel (0) target = $region5
    $region4: #{tpu_custom_call.1} parent=1 // pred_region
      %s22 = ssub.s32 256, 256
      %23 = vsyncadd [#allocation3], %s22
      %s24 = sshll.u32 [#allocation2], 4
      %s25 = int_to_ptr.vmem [resolvable:$true] %s24
      %30 = dma.hbm_to_vmem [thread:$0]  %s0, 256, %s25, [#allocation3], 128, 128, 8
    $region5: #{tpu_custom_call.1} parent=1 // pred_fallthru
      _
    // Predicated region
    $region6: #{tpu_custom_call.1} parent=1 // pred_check
      _
    $region7: #{tpu_custom_call.1} parent=1 // pred_check_branch
      %32 = sbr.rel (0) target = $region9
    $region8: #{tpu_custom_call.1} parent=1 // pred_region
      %s34 = ssub.s32 256, 256
      %35 = vsyncadd [#allocation7], %s34
      %s36 = sshll.u32 [#allocation6], 4
      %s37 = int_to_ptr.vmem [resolvable:$true] %s36
      %42 = dma.hbm_to_vmem [thread:$0]  %s1, 256, %s37, [#allocation7], 128, 128, 8
    $region9: #{tpu_custom_call.1} parent=1 // pred_fallthru
      _
    // Predicated region
    $region10: #{tpu_custom_call.1} parent=1 // pred_check
      _
    $region11: #{tpu_custom_call.1} parent=1 // pred_check_branch
      %44 = sbr.rel (0) target = $region13
    $region12: #{tpu_custom_call.1} parent=1 // pred_region
      %s46 = ssub.s32 64, 64
      %47 = vsyncadd [#allocation7], %s46
      %s48 = sshll.u32 [#allocation8], 4
      %s49 = int_to_ptr.vmem [resolvable:$true] %s48
      %54 = dma.hbm_to_vmem [thread:$0]  %s2, 64, %s49, [#allocation7], 32, 32, 2
    $region13: #{tpu_custom_call.1} parent=1 // pred_fallthru
      _
    // Predicated region
    $region14: #{tpu_custom_call.1} parent=1 // pred_check
      _
    $region15: #{tpu_custom_call.1} parent=1 // pred_check_branch
      %56 = sbr.rel (0) target = $region17
    $region16: #{tpu_custom_call.1} parent=1 // pred_region
      %s58 = ssub.s32 512, 512
      %59 = vsyncadd [#allocation10], %s58
      %s60 = sshll.u32 [#allocation9], 4
      %s61 = int_to_ptr.vmem [resolvable:$true] %s60
      %66 = dma.hbm_to_vmem [thread:$0]  %s3, 512, %s61, [#allocation10], 128, 128, 8
    $region17: #{tpu_custom_call.1} parent=1 // pred_fallthru
      _
    // Predicated region
    $region18: #{tpu_custom_call.1} parent=1 // pred_check
      _
    $region19: #{tpu_custom_call.1} parent=1 // pred_check_branch
      %68 = sbr.rel (0) target = $region21
    $region20: #{tpu_custom_call.1} parent=1 // pred_region
      %s70 = ssub.s32 48, 48
      %71 = vsyncadd [#allocation10], %s70
      %s73 = sshll.u32 [#allocation11], 4
      %s74 = int_to_ptr.vmem [resolvable:$true] %s73
      %76 = dma.hbm_to_vmem [thread:$0]  %s4, 48, %s74, [#allocation10]
    $region21: #{tpu_custom_call.1} parent=1 // pred_fallthru
      _
    // Predicated region
    $region22: #{tpu_custom_call.1} parent=1 // pred_check
      _
    $region23: #{tpu_custom_call.1} parent=1 // pred_check_branch
      %78 = sbr.rel (0) target = $region25
    $region24: #{tpu_custom_call.1} parent=1 // pred_region
      _
    $region25: #{tpu_custom_call.1} parent=1 // pred_fallthru
      _
    // Predicated region
    $region26: #{tpu_custom_call.1} parent=1 // pred_check
      _
    $region27: #{tpu_custom_call.1} parent=1 // pred_check_branch
      %80 = sbr.rel (0) target = $region29
    $region28: #{tpu_custom_call.1} parent=1 // pred_region
      %s82 = ssub.s32 256, 256
      %83 = vsyncadd [#allocation13], %s82
      %s84 = sshll.u32 [#allocation12], 4
      %s85 = int_to_ptr.vmem [resolvable:$true] %s84
      %90 = dma.hbm_to_vmem [thread:$0]  %s6, 256, %s85, [#allocation13], 64, 64, 4
    $region29: #{tpu_custom_call.1} parent=1 // pred_fallthru
      _
    // Predicated region
    $region30: #{tpu_custom_call.1} parent=1 // pred_check
      _
    $region31: #{tpu_custom_call.1} parent=1 // pred_check_branch
      %92 = sbr.rel (0) target = $region33
    $region32: #{tpu_custom_call.1} parent=1 // pred_region
      %s94 = ssub.s32 16, 16
      %95 = vsyncadd [#allocation5], %s94
      %s97 = sshll.u32 %s7, 4
      %s98 = int_to_ptr.vmem [resolvable:$true] %s97
      %100 = dma.vmem_to_smem %s98, 16, [#allocation14], [#allocation5]
    $region33: #{tpu_custom_call.1} parent=1 // pred_fallthru
      _
    // Predicated region
    $region34: #{tpu_custom_call.1} parent=1 // pred_check
      _
    $region35: #{tpu_custom_call.1} parent=1 // pred_check_branch
      %102 = sbr.rel (0) target = $region37
    $region36: #{tpu_custom_call.1} parent=1 // pred_region
      %103 = dma.done [#allocation3], 256
    $region37: #{tpu_custom_call.1} parent=1 // pred_fallthru
      _
    // Predicated region
    $region38: #{tpu_custom_call.1} parent=1 // pred_check
      _
    $region39: #{tpu_custom_call.1} parent=1 // pred_check_branch
      %105 = sbr.rel (0) target = $region41
    $region40: #{tpu_custom_call.1} parent=1 // pred_region
      %106 = dma.done [#allocation7], 256
    $region41: #{tpu_custom_call.1} parent=1 // pred_fallthru
      _
    // Predicated region
    $region42: #{tpu_custom_call.1} parent=1 // pred_check
      _
    $region43: #{tpu_custom_call.1} parent=1 // pred_check_branch
      %108 = sbr.rel (0) target = $region45
    $region44: #{tpu_custom_call.1} parent=1 // pred_region
      %109 = dma.done [#allocation7], 64
    $region45: #{tpu_custom_call.1} parent=1 // pred_fallthru
      _
    // Predicated region
    $region46: #{tpu_custom_call.1} parent=1 // pred_check
      _
    $region47: #{tpu_custom_call.1} parent=1 // pred_check_branch
      %111 = sbr.rel (0) target = $region49
    $region48: #{tpu_custom_call.1} parent=1 // pred_region
      %112 = dma.done [#allocation10], 512
    $region49: #{tpu_custom_call.1} parent=1 // pred_fallthru
      _
    // Predicated region
    $region50: #{tpu_custom_call.1} parent=1 // pred_check
      _
    $region51: #{tpu_custom_call.1} parent=1 // pred_check_branch
      %114 = sbr.rel (0) target = $region53
    $region52: #{tpu_custom_call.1} parent=1 // pred_region
      %115 = dma.done [#allocation10], 48
    $region53: #{tpu_custom_call.1} parent=1 // pred_fallthru
      _
    // Predicated region
    $region54: #{tpu_custom_call.1} parent=1 // pred_check
      _
    $region55: #{tpu_custom_call.1} parent=1 // pred_check_branch
      %117 = sbr.rel (0) target = $region57
    $region56: #{tpu_custom_call.1} parent=1 // pred_region
      %118 = dma.done [#allocation13], 256
    $region57: #{tpu_custom_call.1} parent=1 // pred_fallthru
      _
    // Predicated region
    $region58: #{tpu_custom_call.1} parent=1 // pred_check
      _
    $region59: #{tpu_custom_call.1} parent=1 // pred_check_branch
      %120 = sbr.rel (0) target = $region61
    $region60: #{tpu_custom_call.1} parent=1 // pred_region
      %121 = dma.done [#allocation5], 16
    $region61: #{tpu_custom_call.1} parent=1 // pred_fallthru
      _
    %122 = sfence
    %v124 = vld [vmem:[#allocation2] sm:$0xff]
    %v125 = vld [vmem:[#allocation2 + $0x8] sm:$0xff]
    %v126 = vld [vmem:[#allocation6] sm:$0xff]
    %v127 = vld [vmem:[#allocation6 + $0x8] sm:$0xff]
    %v128 = vld [vmem:[#allocation8] sm:$0x3]
    %v129 = vld [vmem:[#allocation8 + $0x2] sm:$0x3]
    %s130 = sld [smem:[#allocation14]]
    %s131 = sld [smem:[#allocation14 + $0x1]]
    %v132 = vpack.c.bf16 %v125, %v124
    %v133 = vpack.c.bf16 %v127, %v126
    %v134 = vld [vmem:[#allocation9] sm:$0xf]
    %v135 = vld [vmem:[#allocation9 + $0x8] sm:$0xf]
    %v136 = vld [vmem:[#allocation9 + $0x10] sm:$0xf]
    %v137 = vld [vmem:[#allocation9 + $0x18] sm:$0xf]
    %v138 = vld [vmem:[#allocation11] sm:$0x1]
    %v140 = vlaneseq
    %v141 = vshrl.u32 %v140, 7
    %v142 = vsub.s32 0, %v141
    %v143 = vrot.slane %v138, %v142
    %v149 = vunpack.c.l.b16 %v134
    %v150 = vunpack.c.l.b16 %v135
    %v151 = vunpack.c.l.b16 %v136
    %v152 = vunpack.c.l.b16 %v137
    %v153 = vpack.c.b16 %v150, %v149
    %v154 = vpack.c.b16 %v152, %v151
    %vm157 = vcmask 261120
    %v159 = vsel %vm157, %v132, 0
    %161 = vmatprep.subr.bf16.mxu0 0
    %162 = vmatpush1.bf16.msra.mxu0 %v153
    %163 = vmatprep.subr.bf16.mxu0 0
    %164 = vmatpush1.bf16.msra.mxu0 %v154
    %165 = vmatprep.subr.bf16.mxu0 0
    %166 = vmatpush1.bf16.msra.mxu0 0
    %167 = vmatprep.subr.bf16.mxu0 0
    %168 = vmatpush1.bf16.msra.mxu0 0
    %169 = vmatprep.subr.bf16.mxu0 0
    %170 = vmatpush1.bf16.msra.mxu0 0
    %171 = vmatprep.subr.bf16.mxu0 0
    %172 = vmatpush1.bf16.msra.mxu0 0
    %173 = vmatprep.subr.bf16.mxu0 0
    %174 = vmatpush1.bf16.msra.mxu0 0
    %175 = vmatprep.subr.bf16.mxu0 0
    %176 = vmatpush1.bf16.msra.mxu0 0
    %177 = vmatprep.subr.bf16.mxu0 0
    %178 = vmatpush1.bf16.msra.mxu0 0
    %179 = vmatprep.subr.bf16.mxu0 0
    %180 = vmatpush1.bf16.msra.mxu0 0
    %181 = vmatprep.subr.bf16.mxu0 0
    %182 = vmatpush1.bf16.msra.mxu0 0
    %183 = vmatprep.subr.bf16.mxu0 0
    %184 = vmatpush1.bf16.msra.mxu0 0
    %185 = vmatprep.subr.bf16.mxu0 0
    %186 = vmatpush1.bf16.msra.mxu0 0
    %187 = vmatprep.subr.bf16.mxu0 0
    %188 = vmatpush1.bf16.msra.mxu0 0
    %189 = vmatprep.subr.bf16.mxu0 0
    %190 = vmatpush1.bf16.msra.mxu0 0
    %191 = vmatprep.subr.bf16.mxu0 0
    %192 = vmatpush1.bf16.msra.mxu0 0
    %193 = vmatprep.mubr.bf16.mxu0 0
    %194 = vmatmul.mubr.bf16.gmra.mrb[0].mxu0 %v159
    %v195 = vpop.f32.mrb[0].mxu0
    %v196 = vadd.f32 %v143, %v195
    %v197 = vpop.f32.mrb[0].mxu0
    %v198 = vpop.f32.mrb[0].mxu0
    %v199 = vadd.f32 %v143, %v198
    %v200 = vpop.f32.mrb[0].mxu0
    %201 = vdwg.mxu0
    %v202 = vmul.f32 %v196, 0.35355338
    %v203 = vmul.f32 %v199, 0.35355338
    %204 = vrot.lane.b32.xlu0 %v153, 96
    %v205 = vpop.permute.xlu0 %204
    %206 = vrot.lane.b32.xlu0 %v154, 96
    %v207 = vpop.permute.xlu0 %206
    %210 = vrot.lane.b32.xlu0 %v143, 96
    %v211 = vpop.permute.xlu0 %210
    %v214 = vsel %vm157, %v133, 0
    %216 = vmatprep.subr.bf16.mxu0 0
    %217 = vmatpush1.bf16.msra.mxu0 %v205
    %218 = vmatprep.subr.bf16.mxu0 0
    %219 = vmatpush1.bf16.msra.mxu0 %v207
    %220 = vmatprep.subr.bf16.mxu0 0
    %221 = vmatpush1.bf16.msra.mxu0 0
    %222 = vmatprep.subr.bf16.mxu0 0
    %223 = vmatpush1.bf16.msra.mxu0 0
    %224 = vmatprep.subr.bf16.mxu0 0
    %225 = vmatpush1.bf16.msra.mxu0 0
    %226 = vmatprep.subr.bf16.mxu0 0
    %227 = vmatpush1.bf16.msra.mxu0 0
    %228 = vmatprep.subr.bf16.mxu0 0
    %229 = vmatpush1.bf16.msra.mxu0 0
    %230 = vmatprep.subr.bf16.mxu0 0
    %231 = vmatpush1.bf16.msra.mxu0 0
    %232 = vmatprep.subr.bf16.mxu0 0
    %233 = vmatpush1.bf16.msra.mxu0 0
    %234 = vmatprep.subr.bf16.mxu0 0
    %235 = vmatpush1.bf16.msra.mxu0 0
    %236 = vmatprep.subr.bf16.mxu0 0
    %237 = vmatpush1.bf16.msra.mxu0 0
    %238 = vmatprep.subr.bf16.mxu0 0
    %239 = vmatpush1.bf16.msra.mxu0 0
    %240 = vmatprep.subr.bf16.mxu0 0
    %241 = vmatpush1.bf16.msra.mxu0 0
    %242 = vmatprep.subr.bf16.mxu0 0
    %243 = vmatpush1.bf16.msra.mxu0 0
    %244 = vmatprep.subr.bf16.mxu0 0
    %245 = vmatpush1.bf16.msra.mxu0 0
    %246 = vmatprep.subr.bf16.mxu0 0
    %247 = vmatpush1.bf16.msra.mxu0 0
    %248 = vmatprep.mubr.bf16.mxu0 0
    %249 = vmatmul.mubr.bf16.gmra.mrb[0].mxu0 %v214
    %v250 = vpop.f32.mrb[0].mxu0
    %v251 = vadd.f32 %v211, %v250
    %v252 = vpop.f32.mrb[0].mxu0
    %v253 = vpop.f32.mrb[0].mxu0
    %v254 = vadd.f32 %v211, %v253
    %v255 = vpop.f32.mrb[0].mxu0
    %256 = vdwg.mxu0
    %v257 = vld [vmem:[#allocation11 + $0x2] sm:$0x1]
    %v258 = vpack.c.bf16 %v202, %v202
    %v259 = vpack.c.bf16 %v203, %v203
    %v260 = vpack.c.bf16 %v251, %v251
    %v261 = vpack.c.bf16 %v254, %v254
    %v262 = vlaneseq
    %v263 = vshrl.u32 %v262, 7
    %v264 = vsub.s32 0, %v263
    %v265 = vrot.slane %v128, %v264
    %v266 = vlaneseq
    %v267 = vshrl.u32 %v266, 7
    %v268 = vsub.s32 0, %v267
    %v269 = vrot.slane %v129, %v268
    %vm270 = vcmask 64512
    %v272 = vsel %vm270, %v258, 0
    %v275 = vsel %vm270, %v260, 0
    %277 = vmatprep.subr.bf16.mxu0 0
    %278 = vmatpush1.bf16.xpose.msra.mxu0 %v275
    %279 = vmatprep.subr.bf16.mxu0 0
    %280 = vmatpush1.bf16.xpose.msra.mxu0 0
    %281 = vmatprep.subr.bf16.mxu0 0
    %282 = vmatpush1.bf16.xpose.msra.mxu0 0
    %283 = vmatprep.subr.bf16.mxu0 0
    %284 = vmatpush1.bf16.xpose.msra.mxu0 0
    %285 = vmatprep.subr.bf16.mxu0 0
    %286 = vmatpush1.bf16.xpose.msra.mxu0 0
    %287 = vmatprep.subr.bf16.mxu0 0
    %288 = vmatpush1.bf16.xpose.msra.mxu0 0
    %289 = vmatprep.subr.bf16.mxu0 0
    %290 = vmatpush1.bf16.xpose.msra.mxu0 0
    %291 = vmatprep.subr.bf16.mxu0 0
    %292 = vmatpush1.bf16.xpose.msra.mxu0 0
    %293 = vmatprep.subr.bf16.mxu0 0
    %294 = vmatpush1.bf16.xpose.msra.mxu0 0
    %295 = vmatprep.subr.bf16.mxu0 0
    %296 = vmatpush1.bf16.xpose.msra.mxu0 0
    %297 = vmatprep.subr.bf16.mxu0 0
    %298 = vmatpush1.bf16.xpose.msra.mxu0 0
    %299 = vmatprep.subr.bf16.mxu0 0
    %300 = vmatpush1.bf16.xpose.msra.mxu0 0
    %301 = vmatprep.subr.bf16.mxu0 0
    %302 = vmatpush1.bf16.xpose.msra.mxu0 0
    %303 = vmatprep.subr.bf16.mxu0 0
    %304 = vmatpush1.bf16.xpose.msra.mxu0 0
    %305 = vmatprep.subr.bf16.mxu0 0
    %306 = vmatpush1.bf16.xpose.msra.mxu0 0
    %307 = vmatprep.subr.bf16.mxu0 0
    %308 = vmatpush1.bf16.xpose.msra.mxu0 0
    %309 = vmatprep.mubr.bf16.mxu0 0
    %310 = vmatmul.mubr.bf16.gmra.mrb[0].mxu0 %v272
    %v311 = vpop.f32.mrb[0].mxu0
    %v312 = vadd.f32 %v265, %v311
    %v313 = vpop.f32.mrb[0].mxu0
    %v314 = vpop.f32.mrb[0].mxu0
    %v315 = vpop.f32.mrb[0].mxu0
    %316 = vdwg.mxu0
    %v318 = vsel %vm270, %v259, 0
    %v321 = vsel %vm270, %v261, 0
    %323 = vmatprep.subr.bf16.mxu0 0
    %324 = vmatpush1.bf16.xpose.msra.mxu0 %v321
    %325 = vmatprep.subr.bf16.mxu0 0
    %326 = vmatpush1.bf16.xpose.msra.mxu0 0
    %327 = vmatprep.subr.bf16.mxu0 0
    %328 = vmatpush1.bf16.xpose.msra.mxu0 0
    %329 = vmatprep.subr.bf16.mxu0 0
    %330 = vmatpush1.bf16.xpose.msra.mxu0 0
    %331 = vmatprep.subr.bf16.mxu0 0
    %332 = vmatpush1.bf16.xpose.msra.mxu0 0
    %333 = vmatprep.subr.bf16.mxu0 0
    %334 = vmatpush1.bf16.xpose.msra.mxu0 0
    %335 = vmatprep.subr.bf16.mxu0 0
    %336 = vmatpush1.bf16.xpose.msra.mxu0 0
    %337 = vmatprep.subr.bf16.mxu0 0
    %338 = vmatpush1.bf16.xpose.msra.mxu0 0
    %339 = vmatprep.subr.bf16.mxu0 0
    %340 = vmatpush1.bf16.xpose.msra.mxu0 0
    %341 = vmatprep.subr.bf16.mxu0 0
    %342 = vmatpush1.bf16.xpose.msra.mxu0 0
    %343 = vmatprep.subr.bf16.mxu0 0
    %344 = vmatpush1.bf16.xpose.msra.mxu0 0
    %345 = vmatprep.subr.bf16.mxu0 0
    %346 = vmatpush1.bf16.xpose.msra.mxu0 0
    %347 = vmatprep.subr.bf16.mxu0 0
    %348 = vmatpush1.bf16.xpose.msra.mxu0 0
    %349 = vmatprep.subr.bf16.mxu0 0
    %350 = vmatpush1.bf16.xpose.msra.mxu0 0
    %351 = vmatprep.subr.bf16.mxu0 0
    %352 = vmatpush1.bf16.xpose.msra.mxu0 0
    %353 = vmatprep.subr.bf16.mxu0 0
    %354 = vmatpush1.bf16.xpose.msra.mxu0 0
    %355 = vmatprep.mubr.bf16.mxu0 0
    %356 = vmatmul.mubr.bf16.gmra.mrb[0].mxu0 %v318
    %v357 = vpop.f32.mrb[0].mxu0
    %v358 = vadd.f32 %v269, %v357
    %v359 = vpop.f32.mrb[0].mxu0
    %v360 = vpop.f32.mrb[0].mxu0
    %v361 = vpop.f32.mrb[0].mxu0
    %362 = vdwg.mxu0
    %v363 = vsel %vm270, %v312, -inf
    %364 = vmax.xlane.f32.xlu0 %v363
    %v365 = vpop.xlane.xlu0 %364
    %v366 = vsel %vm270, %v358, -inf
    %367 = vmax.xlane.f32.xlu0 %v366
    %v368 = vpop.xlane.xlu0 %367
    %v369 = vsub.f32 %v312, %v365
    %v370 = vsub.f32 %v358, %v368
    %v371 = vmul.f32 %v369, 1.442695
    %v372 = vpow.pop %v371
    %v373 = vmul.f32 %v370, 1.442695
    %v374 = vpow.pop %v373
    %v375 = vsel %vm270, %v372, 0.0
    %376 = vadd.xlane.f32.xlu0 %v375
    %v377 = vpop.xlane.xlu0 %376
    %v378 = vsel %vm270, %v374, 0.0
    %379 = vadd.xlane.f32.xlu0 %v378
    %v380 = vpop.xlane.xlu0 %379
    %v381 = vrcp.pop %v377
    %v382 = vrcp.pop %v380
    %v383 = vmul.f32 %v372, %v381
    %v384 = vmul.f32 %v374, %v382
    %v385 = vpack.c.bf16 %v383, %v383
    %v386 = vpack.c.bf16 %v384, %v384
    %388 = vrot.lane.b32.xlu0 %v260, 96
    %v389 = vpop.permute.xlu0 %388
    %v391 = vsel %vm270, %v385, 0
    %vm393 = vcmask 1043456
    %v395 = vsel %vm393, %v389, 0
    %397 = vmatprep.subr.bf16.mxu0 0
    %398 = vmatpush1.bf16.msra.mxu0 %v395
    %399 = vmatprep.subr.bf16.mxu0 0
    %400 = vmatpush1.bf16.msra.mxu0 0
    %401 = vmatprep.subr.bf16.mxu0 0
    %402 = vmatpush1.bf16.msra.mxu0 0
    %403 = vmatprep.subr.bf16.mxu0 0
    %404 = vmatpush1.bf16.msra.mxu0 0
    %405 = vmatprep.subr.bf16.mxu0 0
    %406 = vmatpush1.bf16.msra.mxu0 0
    %407 = vmatprep.subr.bf16.mxu0 0
    %408 = vmatpush1.bf16.msra.mxu0 0
    %409 = vmatprep.subr.bf16.mxu0 0
    %410 = vmatpush1.bf16.msra.mxu0 0
    %411 = vmatprep.subr.bf16.mxu0 0
    %412 = vmatpush1.bf16.msra.mxu0 0
    %413 = vmatprep.subr.bf16.mxu0 0
    %414 = vmatpush1.bf16.msra.mxu0 0
    %415 = vmatprep.subr.bf16.mxu0 0
    %416 = vmatpush1.bf16.msra.mxu0 0
    %417 = vmatprep.subr.bf16.mxu0 0
    %418 = vmatpush1.bf16.msra.mxu0 0
    %419 = vmatprep.subr.bf16.mxu0 0
    %420 = vmatpush1.bf16.msra.mxu0 0
    %421 = vmatprep.subr.bf16.mxu0 0
    %422 = vmatpush1.bf16.msra.mxu0 0
    %423 = vmatprep.subr.bf16.mxu0 0
    %424 = vmatpush1.bf16.msra.mxu0 0
    %425 = vmatprep.subr.bf16.mxu0 0
    %426 = vmatpush1.bf16.msra.mxu0 0
    %427 = vmatprep.subr.bf16.mxu0 0
    %428 = vmatpush1.bf16.msra.mxu0 0
    %429 = vmatprep.mubr.bf16.mxu0 0
    %430 = vmatmul.mubr.bf16.gmra.mrb[0].mxu0 %v391
    %v431 = vpop.f32.mrb[0].mxu0
    %v432 = vadd.f32 0.0, %v431
    %v433 = vpop.f32.mrb[0].mxu0
    %v434 = vpop.f32.mrb[0].mxu0
    %v435 = vpop.f32.mrb[0].mxu0
    %436 = vdwg.mxu0
    %438 = vrot.lane.b32.xlu0 %v261, 96
    %v439 = vpop.permute.xlu0 %438
    %v441 = vsel %vm270, %v386, 0
    %v444 = vsel %vm393, %v439, 0
    %446 = vmatprep.subr.bf16.mxu0 0
    %447 = vmatpush1.bf16.msra.mxu0 %v444
    %448 = vmatprep.subr.bf16.mxu0 0
    %449 = vmatpush1.bf16.msra.mxu0 0
    %450 = vmatprep.subr.bf16.mxu0 0
    %451 = vmatpush1.bf16.msra.mxu0 0
    %452 = vmatprep.subr.bf16.mxu0 0
    %453 = vmatpush1.bf16.msra.mxu0 0
    %454 = vmatprep.subr.bf16.mxu0 0
    %455 = vmatpush1.bf16.msra.mxu0 0
    %456 = vmatprep.subr.bf16.mxu0 0
    %457 = vmatpush1.bf16.msra.mxu0 0
    %458 = vmatprep.subr.bf16.mxu0 0
    %459 = vmatpush1.bf16.msra.mxu0 0
    %460 = vmatprep.subr.bf16.mxu0 0
    %461 = vmatpush1.bf16.msra.mxu0 0
    %462 = vmatprep.subr.bf16.mxu0 0
    %463 = vmatpush1.bf16.msra.mxu0 0
    %464 = vmatprep.subr.bf16.mxu0 0
    %465 = vmatpush1.bf16.msra.mxu0 0
    %466 = vmatprep.subr.bf16.mxu0 0
    %467 = vmatpush1.bf16.msra.mxu0 0
    %468 = vmatprep.subr.bf16.mxu0 0
    %469 = vmatpush1.bf16.msra.mxu0 0
    %470 = vmatprep.subr.bf16.mxu0 0
    %471 = vmatpush1.bf16.msra.mxu0 0
    %472 = vmatprep.subr.bf16.mxu0 0
    %473 = vmatpush1.bf16.msra.mxu0 0
    %474 = vmatprep.subr.bf16.mxu0 0
    %475 = vmatpush1.bf16.msra.mxu0 0
    %476 = vmatprep.subr.bf16.mxu0 0
    %477 = vmatpush1.bf16.msra.mxu0 0
    %478 = vmatprep.mubr.bf16.mxu0 0
    %479 = vmatmul.mubr.bf16.gmra.mrb[0].mxu0 %v441
    %v480 = vpop.f32.mrb[0].mxu0
    %v481 = vadd.f32 0.0, %v480
    %v482 = vpop.f32.mrb[0].mxu0
    %v483 = vpop.f32.mrb[0].mxu0
    %v484 = vpop.f32.mrb[0].mxu0
    %485 = vdwg.mxu0
    %v486 = vpack.c.bf16 %v481, %v432
    %v487 = vld [vmem:[%s5] sm:$0xf]
    %489 = vrot.lane.b32.xlu0 %v258, 120
    %v490 = vpop.permute.xlu0 %489
    %491 = vrot.lane.b32.xlu0 %v260, 120
    %v492 = vpop.permute.xlu0 %491
    %v494 = vsel %vm270, %v490, 0
    %v497 = vsel %vm270, %v492, 0
    %499 = vmatprep.subr.bf16.mxu0 0
    %500 = vmatpush1.bf16.xpose.msra.mxu0 %v497
    %501 = vmatprep.subr.bf16.mxu0 0
    %502 = vmatpush1.bf16.xpose.msra.mxu0 0
    %503 = vmatprep.subr.bf16.mxu0 0
    %504 = vmatpush1.bf16.xpose.msra.mxu0 0
    %505 = vmatprep.subr.bf16.mxu0 0
    %506 = vmatpush1.bf16.xpose.msra.mxu0 0
    %507 = vmatprep.subr.bf16.mxu0 0
    %508 = vmatpush1.bf16.xpose.msra.mxu0 0
    %509 = vmatprep.subr.bf16.mxu0 0
    %510 = vmatpush1.bf16.xpose.msra.mxu0 0
    %511 = vmatprep.subr.bf16.mxu0 0
    %512 = vmatpush1.bf16.xpose.msra.mxu0 0
    %513 = vmatprep.subr.bf16.mxu0 0
    %514 = vmatpush1.bf16.xpose.msra.mxu0 0
    %515 = vmatprep.subr.bf16.mxu0 0
    %516 = vmatpush1.bf16.xpose.msra.mxu0 0
    %517 = vmatprep.subr.bf16.mxu0 0
    %518 = vmatpush1.bf16.xpose.msra.mxu0 0
    %519 = vmatprep.subr.bf16.mxu0 0
    %520 = vmatpush1.bf16.xpose.msra.mxu0 0
    %521 = vmatprep.subr.bf16.mxu0 0
    %522 = vmatpush1.bf16.xpose.msra.mxu0 0
    %523 = vmatprep.subr.bf16.mxu0 0
    %524 = vmatpush1.bf16.xpose.msra.mxu0 0
    %525 = vmatprep.subr.bf16.mxu0 0
    %526 = vmatpush1.bf16.xpose.msra.mxu0 0
    %527 = vmatprep.subr.bf16.mxu0 0
    %528 = vmatpush1.bf16.xpose.msra.mxu0 0
    %529 = vmatprep.subr.bf16.mxu0 0
    %530 = vmatpush1.bf16.xpose.msra.mxu0 0
    %531 = vmatprep.mubr.bf16.mxu0 0
    %532 = vmatmul.mubr.bf16.gmra.mrb[0].mxu0 %v494
    %v533 = vpop.f32.mrb[0].mxu0
    %v534 = vadd.f32 %v265, %v533
    %v535 = vpop.f32.mrb[0].mxu0
    %v536 = vpop.f32.mrb[0].mxu0
    %v537 = vpop.f32.mrb[0].mxu0
    %538 = vdwg.mxu0
    %540 = vrot.lane.b32.xlu0 %v259, 120
    %v541 = vpop.permute.xlu0 %540
    %542 = vrot.lane.b32.xlu0 %v261, 120
    %v543 = vpop.permute.xlu0 %542
    %v545 = vsel %vm270, %v541, 0
    %v548 = vsel %vm270, %v543, 0
    %550 = vmatprep.subr.bf16.mxu0 0
    %551 = vmatpush1.bf16.xpose.msra.mxu0 %v548
    %552 = vmatprep.subr.bf16.mxu0 0
    %553 = vmatpush1.bf16.xpose.msra.mxu0 0
    %554 = vmatprep.subr.bf16.mxu0 0
    %555 = vmatpush1.bf16.xpose.msra.mxu0 0
    %556 = vmatprep.subr.bf16.mxu0 0
    %557 = vmatpush1.bf16.xpose.msra.mxu0 0
    %558 = vmatprep.subr.bf16.mxu0 0
    %559 = vmatpush1.bf16.xpose.msra.mxu0 0
    %560 = vmatprep.subr.bf16.mxu0 0
    %561 = vmatpush1.bf16.xpose.msra.mxu0 0
    %562 = vmatprep.subr.bf16.mxu0 0
    %563 = vmatpush1.bf16.xpose.msra.mxu0 0
    %564 = vmatprep.subr.bf16.mxu0 0
    %565 = vmatpush1.bf16.xpose.msra.mxu0 0
    %566 = vmatprep.subr.bf16.mxu0 0
    %567 = vmatpush1.bf16.xpose.msra.mxu0 0
    %568 = vmatprep.subr.bf16.mxu0 0
    %569 = vmatpush1.bf16.xpose.msra.mxu0 0
    %570 = vmatprep.subr.bf16.mxu0 0
    %571 = vmatpush1.bf16.xpose.msra.mxu0 0
    %572 = vmatprep.subr.bf16.mxu0 0
    %573 = vmatpush1.bf16.xpose.msra.mxu0 0
    %574 = vmatprep.subr.bf16.mxu0 0
    %575 = vmatpush1.bf16.xpose.msra.mxu0 0
    %576 = vmatprep.subr.bf16.mxu0 0
    %577 = vmatpush1.bf16.xpose.msra.mxu0 0
    %578 = vmatprep.subr.bf16.mxu0 0
    %579 = vmatpush1.bf16.xpose.msra.mxu0 0
    %580 = vmatprep.subr.bf16.mxu0 0
    %581 = vmatpush1.bf16.xpose.msra.mxu0 0
    %582 = vmatprep.mubr.bf16.mxu0 0
    %583 = vmatmul.mubr.bf16.gmra.mrb[0].mxu0 %v545
    %v584 = vpop.f32.mrb[0].mxu0
    %v585 = vadd.f32 %v269, %v584
    %v586 = vpop.f32.mrb[0].mxu0
    %v587 = vpop.f32.mrb[0].mxu0
    %v588 = vpop.f32.mrb[0].mxu0
    %589 = vdwg.mxu0
    %v590 = vsel %vm270, %v534, -inf
    %591 = vmax.xlane.f32.xlu0 %v590
    %v592 = vpop.xlane.xlu0 %591
    %v593 = vsel %vm270, %v585, -inf
    %594 = vmax.xlane.f32.xlu0 %v593
    %v595 = vpop.xlane.xlu0 %594
    %v596 = vsub.f32 %v534, %v592
    %v597 = vsub.f32 %v585, %v595
    %v598 = vmul.f32 %v596, 1.442695
    %v599 = vpow.pop %v598
    %v600 = vmul.f32 %v597, 1.442695
    %v601 = vpow.pop %v600
    %v602 = vsel %vm270, %v599, 0.0
    %603 = vadd.xlane.f32.xlu0 %v602
    %v604 = vpop.xlane.xlu0 %603
    %v605 = vsel %vm270, %v601, 0.0
    %606 = vadd.xlane.f32.xlu0 %v605
    %v607 = vpop.xlane.xlu0 %606
    %v608 = vrcp.pop %v604
    %v609 = vrcp.pop %v607
    %v610 = vmul.f32 %v599, %v608
    %v611 = vmul.f32 %v601, %v609
    %v612 = vpack.c.bf16 %v610, %v610
    %v613 = vpack.c.bf16 %v611, %v611
    %614 = vrot.lane.b32.xlu0 %v260, 88
    %v615 = vpop.permute.xlu0 %614
    %v617 = vsel %vm270, %v612, 0
    %v620 = vsel %vm393, %v615, 0
    %622 = vmatprep.subr.bf16.mxu0 0
    %623 = vmatpush1.bf16.msra.mxu0 %v620
    %624 = vmatprep.subr.bf16.mxu0 0
    %625 = vmatpush1.bf16.msra.mxu0 0
    %626 = vmatprep.subr.bf16.mxu0 0
    %627 = vmatpush1.bf16.msra.mxu0 0
    %628 = vmatprep.subr.bf16.mxu0 0
    %629 = vmatpush1.bf16.msra.mxu0 0
    %630 = vmatprep.subr.bf16.mxu0 0
    %631 = vmatpush1.bf16.msra.mxu0 0
    %632 = vmatprep.subr.bf16.mxu0 0
    %633 = vmatpush1.bf16.msra.mxu0 0
    %634 = vmatprep.subr.bf16.mxu0 0
    %635 = vmatpush1.bf16.msra.mxu0 0
    %636 = vmatprep.subr.bf16.mxu0 0
    %637 = vmatpush1.bf16.msra.mxu0 0
    %638 = vmatprep.subr.bf16.mxu0 0
    %639 = vmatpush1.bf16.msra.mxu0 0
    %640 = vmatprep.subr.bf16.mxu0 0
    %641 = vmatpush1.bf16.msra.mxu0 0
    %642 = vmatprep.subr.bf16.mxu0 0
    %643 = vmatpush1.bf16.msra.mxu0 0
    %644 = vmatprep.subr.bf16.mxu0 0
    %645 = vmatpush1.bf16.msra.mxu0 0
    %646 = vmatprep.subr.bf16.mxu0 0
    %647 = vmatpush1.bf16.msra.mxu0 0
    %648 = vmatprep.subr.bf16.mxu0 0
    %649 = vmatpush1.bf16.msra.mxu0 0
    %650 = vmatprep.subr.bf16.mxu0 0
    %651 = vmatpush1.bf16.msra.mxu0 0
    %652 = vmatprep.subr.bf16.mxu0 0
    %653 = vmatpush1.bf16.msra.mxu0 0
    %654 = vmatprep.mubr.bf16.mxu0 0
    %655 = vmatmul.mubr.bf16.gmra.mrb[0].mxu0 %v617
    %v656 = vpop.f32.mrb[0].mxu0
    %v657 = vadd.f32 0.0, %v656
    %v658 = vpop.f32.mrb[0].mxu0
    %v659 = vpop.f32.mrb[0].mxu0
    %v660 = vpop.f32.mrb[0].mxu0
    %661 = vdwg.mxu0
    %662 = vrot.lane.b32.xlu0 %v261, 88
    %v663 = vpop.permute.xlu0 %662
    %v665 = vsel %vm270, %v613, 0
    %v668 = vsel %vm393, %v663, 0
    %670 = vmatprep.subr.bf16.mxu0 0
    %671 = vmatpush1.bf16.msra.mxu0 %v668
    %672 = vmatprep.subr.bf16.mxu0 0
    %673 = vmatpush1.bf16.msra.mxu0 0
    %674 = vmatprep.subr.bf16.mxu0 0
    %675 = vmatpush1.bf16.msra.mxu0 0
    %676 = vmatprep.subr.bf16.mxu0 0
    %677 = vmatpush1.bf16.msra.mxu0 0
    %678 = vmatprep.subr.bf16.mxu0 0
    %679 = vmatpush1.bf16.msra.mxu0 0
    %680 = vmatprep.subr.bf16.mxu0 0
    %681 = vmatpush1.bf16.msra.mxu0 0
    %682 = vmatprep.subr.bf16.mxu0 0
    %683 = vmatpush1.bf16.msra.mxu0 0
    %684 = vmatprep.subr.bf16.mxu0 0
    %685 = vmatpush1.bf16.msra.mxu0 0
    %686 = vmatprep.subr.bf16.mxu0 0
    %687 = vmatpush1.bf16.msra.mxu0 0
    %688 = vmatprep.subr.bf16.mxu0 0
    %689 = vmatpush1.bf16.msra.mxu0 0
    %690 = vmatprep.subr.bf16.mxu0 0
    %691 = vmatpush1.bf16.msra.mxu0 0
    %692 = vmatprep.subr.bf16.mxu0 0
    %693 = vmatpush1.bf16.msra.mxu0 0
    %694 = vmatprep.subr.bf16.mxu0 0
    %695 = vmatpush1.bf16.msra.mxu0 0
    %696 = vmatprep.subr.bf16.mxu0 0
    %697 = vmatpush1.bf16.msra.mxu0 0
    %698 = vmatprep.subr.bf16.mxu0 0
    %699 = vmatpush1.bf16.msra.mxu0 0
    %700 = vmatprep.subr.bf16.mxu0 0
    %701 = vmatpush1.bf16.msra.mxu0 0
    %702 = vmatprep.mubr.bf16.mxu0 0
    %703 = vmatmul.mubr.bf16.gmra.mrb[0].mxu0 %v665
    %v704 = vpop.f32.mrb[0].mxu0
    %v705 = vadd.f32 0.0, %v704
    %v706 = vpop.f32.mrb[0].mxu0
    %v707 = vpop.f32.mrb[0].mxu0
    %v708 = vpop.f32.mrb[0].mxu0
    %709 = vdwg.mxu0
    %v710 = vpack.c.bf16 %v705, %v657
    %s711 = scalar_lea.vmem %s5, 4
    %v712 = vld [vmem:[%s711] sm:$0xf]
    %v714 = vsel %vm270, %v710, 0
    %v717 = vsel %vm393, %v712, 0
    %719 = vmatprep.subr.bf16.mxu0 0
    %720 = vmatpush1.bf16.msra.mxu0 %v717
    %721 = vmatprep.subr.bf16.mxu0 0
    %722 = vmatpush1.bf16.msra.mxu0 0
    %723 = vmatprep.subr.bf16.mxu0 0
    %724 = vmatpush1.bf16.msra.mxu0 0
    %725 = vmatprep.subr.bf16.mxu0 0
    %726 = vmatpush1.bf16.msra.mxu0 0
    %727 = vmatprep.subr.bf16.mxu0 0
    %728 = vmatpush1.bf16.msra.mxu0 0
    %729 = vmatprep.subr.bf16.mxu0 0
    %730 = vmatpush1.bf16.msra.mxu0 0
    %731 = vmatprep.subr.bf16.mxu0 0
    %732 = vmatpush1.bf16.msra.mxu0 0
    %733 = vmatprep.subr.bf16.mxu0 0
    %734 = vmatpush1.bf16.msra.mxu0 0
    %735 = vmatprep.subr.bf16.mxu0 0
    %736 = vmatpush1.bf16.msra.mxu0 0
    %737 = vmatprep.subr.bf16.mxu0 0
    %738 = vmatpush1.bf16.msra.mxu0 0
    %739 = vmatprep.subr.bf16.mxu0 0
    %740 = vmatpush1.bf16.msra.mxu0 0
    %741 = vmatprep.subr.bf16.mxu0 0
    %742 = vmatpush1.bf16.msra.mxu0 0
    %743 = vmatprep.subr.bf16.mxu0 0
    %744 = vmatpush1.bf16.msra.mxu0 0
    %745 = vmatprep.subr.bf16.mxu0 0
    %746 = vmatpush1.bf16.msra.mxu0 0
    %747 = vmatprep.subr.bf16.mxu0 0
    %748 = vmatpush1.bf16.msra.mxu0 0
    %749 = vmatprep.subr.bf16.mxu0 0
    %750 = vmatpush1.bf16.msra.mxu0 0
    %751 = vmatprep.mubr.bf16.mxu0 0
    %752 = vmatmul.mubr.bf16.gmra.mrb[0].mxu0 %v714
    %v753 = vpop.f32.mrb[0].mxu0
    %v754 = vadd.f32 0.0, %v753
    %v755 = vpop.f32.mrb[0].mxu0
    %v756 = vpop.f32.mrb[0].mxu0
    %v757 = vadd.f32 0.0, %v756
    %v758 = vpop.f32.mrb[0].mxu0
    %759 = vdwg.mxu0
    %v761 = vsel %vm270, %v486, 0
    %v764 = vsel %vm393, %v487, 0
    %766 = vmatprep.subr.bf16.mxu0 0
    %767 = vmatpush1.bf16.msra.mxu0 %v764
    %768 = vmatprep.subr.bf16.mxu0 0
    %769 = vmatpush1.bf16.msra.mxu0 0
    %770 = vmatprep.subr.bf16.mxu0 0
    %771 = vmatpush1.bf16.msra.mxu0 0
    %772 = vmatprep.subr.bf16.mxu0 0
    %773 = vmatpush1.bf16.msra.mxu0 0
    %774 = vmatprep.subr.bf16.mxu0 0
    %775 = vmatpush1.bf16.msra.mxu0 0
    %776 = vmatprep.subr.bf16.mxu0 0
    %777 = vmatpush1.bf16.msra.mxu0 0
    %778 = vmatprep.subr.bf16.mxu0 0
    %779 = vmatpush1.bf16.msra.mxu0 0
    %780 = vmatprep.subr.bf16.mxu0 0
    %781 = vmatpush1.bf16.msra.mxu0 0
    %782 = vmatprep.subr.bf16.mxu0 0
    %783 = vmatpush1.bf16.msra.mxu0 0
    %784 = vmatprep.subr.bf16.mxu0 0
    %785 = vmatpush1.bf16.msra.mxu0 0
    %786 = vmatprep.subr.bf16.mxu0 0
    %787 = vmatpush1.bf16.msra.mxu0 0
    %788 = vmatprep.subr.bf16.mxu0 0
    %789 = vmatpush1.bf16.msra.mxu0 0
    %790 = vmatprep.subr.bf16.mxu0 0
    %791 = vmatpush1.bf16.msra.mxu0 0
    %792 = vmatprep.subr.bf16.mxu0 0
    %793 = vmatpush1.bf16.msra.mxu0 0
    %794 = vmatprep.subr.bf16.mxu0 0
    %795 = vmatpush1.bf16.msra.mxu0 0
    %796 = vmatprep.subr.bf16.mxu0 0
    %797 = vmatpush1.bf16.msra.mxu0 0
    %798 = vmatprep.mubr.bf16.mxu0 0
    %799 = vmatmul.mubr.bf16.gmra.mrb[0].mxu0 %v761
    %v800 = vpop.f32.mrb[0].mxu0
    %v801 = vadd.f32 %v754, %v800
    %v802 = vpop.f32.mrb[0].mxu0
    %v803 = vpop.f32.mrb[0].mxu0
    %v804 = vadd.f32 %v757, %v803
    %v805 = vpop.f32.mrb[0].mxu0
    %806 = vdwg.mxu0
    %807 = vrot.lane.b32.xlu0 %v258, 112
    %v808 = vpop.permute.xlu0 %807
    %809 = vrot.lane.b32.xlu0 %v260, 112
    %v810 = vpop.permute.xlu0 %809
    %v812 = vsel %vm270, %v808, 0
    %v815 = vsel %vm270, %v810, 0
    %817 = vmatprep.subr.bf16.mxu0 0
    %818 = vmatpush1.bf16.xpose.msra.mxu0 %v815
    %819 = vmatprep.subr.bf16.mxu0 0
    %820 = vmatpush1.bf16.xpose.msra.mxu0 0
    %821 = vmatprep.subr.bf16.mxu0 0
    %822 = vmatpush1.bf16.xpose.msra.mxu0 0
    %823 = vmatprep.subr.bf16.mxu0 0
    %824 = vmatpush1.bf16.xpose.msra.mxu0 0
    %825 = vmatprep.subr.bf16.mxu0 0
    %826 = vmatpush1.bf16.xpose.msra.mxu0 0
    %827 = vmatprep.subr.bf16.mxu0 0
    %828 = vmatpush1.bf16.xpose.msra.mxu0 0
    %829 = vmatprep.subr.bf16.mxu0 0
    %830 = vmatpush1.bf16.xpose.msra.mxu0 0
    %831 = vmatprep.subr.bf16.mxu0 0
    %832 = vmatpush1.bf16.xpose.msra.mxu0 0
    %833 = vmatprep.subr.bf16.mxu0 0
    %834 = vmatpush1.bf16.xpose.msra.mxu0 0
    %835 = vmatprep.subr.bf16.mxu0 0
    %836 = vmatpush1.bf16.xpose.msra.mxu0 0
    %837 = vmatprep.subr.bf16.mxu0 0
    %838 = vmatpush1.bf16.xpose.msra.mxu0 0
    %839 = vmatprep.subr.bf16.mxu0 0
    %840 = vmatpush1.bf16.xpose.msra.mxu0 0
    %841 = vmatprep.subr.bf16.mxu0 0
    %842 = vmatpush1.bf16.xpose.msra.mxu0 0
    %843 = vmatprep.subr.bf16.mxu0 0
    %844 = vmatpush1.bf16.xpose.msra.mxu0 0
    %845 = vmatprep.subr.bf16.mxu0 0
    %846 = vmatpush1.bf16.xpose.msra.mxu0 0
    %847 = vmatprep.subr.bf16.mxu0 0
    %848 = vmatpush1.bf16.xpose.msra.mxu0 0
    %849 = vmatprep.mubr.bf16.mxu0 0
    %850 = vmatmul.mubr.bf16.gmra.mrb[0].mxu0 %v812
    %v851 = vpop.f32.mrb[0].mxu0
    %v852 = vadd.f32 %v265, %v851
    %v853 = vpop.f32.mrb[0].mxu0
    %v854 = vpop.f32.mrb[0].mxu0
    %v855 = vpop.f32.mrb[0].mxu0
    %856 = vdwg.mxu0
    %857 = vrot.lane.b32.xlu0 %v259, 112
    %v858 = vpop.permute.xlu0 %857
    %859 = vrot.lane.b32.xlu0 %v261, 112
    %v860 = vpop.permute.xlu0 %859
    %v862 = vsel %vm270, %v858, 0
    %v865 = vsel %vm270, %v860, 0
    %867 = vmatprep.subr.bf16.mxu0 0
    %868 = vmatpush1.bf16.xpose.msra.mxu0 %v865
    %869 = vmatprep.subr.bf16.mxu0 0
    %870 = vmatpush1.bf16.xpose.msra.mxu0 0
    %871 = vmatprep.subr.bf16.mxu0 0
    %872 = vmatpush1.bf16.xpose.msra.mxu0 0
    %873 = vmatprep.subr.bf16.mxu0 0
    %874 = vmatpush1.bf16.xpose.msra.mxu0 0
    %875 = vmatprep.subr.bf16.mxu0 0
    %876 = vmatpush1.bf16.xpose.msra.mxu0 0
    %877 = vmatprep.subr.bf16.mxu0 0
    %878 = vmatpush1.bf16.xpose.msra.mxu0 0
    %879 = vmatprep.subr.bf16.mxu0 0
    %880 = vmatpush1.bf16.xpose.msra.mxu0 0
    %881 = vmatprep.subr.bf16.mxu0 0
    %882 = vmatpush1.bf16.xpose.msra.mxu0 0
    %883 = vmatprep.subr.bf16.mxu0 0
    %884 = vmatpush1.bf16.xpose.msra.mxu0 0
    %885 = vmatprep.subr.bf16.mxu0 0
    %886 = vmatpush1.bf16.xpose.msra.mxu0 0
    %887 = vmatprep.subr.bf16.mxu0 0
    %888 = vmatpush1.bf16.xpose.msra.mxu0 0
    %889 = vmatprep.subr.bf16.mxu0 0
    %890 = vmatpush1.bf16.xpose.msra.mxu0 0
    %891 = vmatprep.subr.bf16.mxu0 0
    %892 = vmatpush1.bf16.xpose.msra.mxu0 0
    %893 = vmatprep.subr.bf16.mxu0 0
    %894 = vmatpush1.bf16.xpose.msra.mxu0 0
    %895 = vmatprep.subr.bf16.mxu0 0
    %896 = vmatpush1.bf16.xpose.msra.mxu0 0
    %897 = vmatprep.subr.bf16.mxu0 0
    %898 = vmatpush1.bf16.xpose.msra.mxu0 0
    %899 = vmatprep.mubr.bf16.mxu0 0
    %900 = vmatmul.mubr.bf16.gmra.mrb[0].mxu0 %v862
    %v901 = vpop.f32.mrb[0].mxu0
    %v902 = vadd.f32 %v269, %v901
    %v903 = vpop.f32.mrb[0].mxu0
    %v904 = vpop.f32.mrb[0].mxu0
    %v905 = vpop.f32.mrb[0].mxu0
    %906 = vdwg.mxu0
    %v907 = vsel %vm270, %v852, -inf
    %908 = vmax.xlane.f32.xlu0 %v907
    %v909 = vpop.xlane.xlu0 %908
    %v910 = vsel %vm270, %v902, -inf
    %911 = vmax.xlane.f32.xlu0 %v910
    %v912 = vpop.xlane.xlu0 %911
    %v913 = vsub.f32 %v852, %v909
    %v914 = vsub.f32 %v902, %v912
    %v915 = vmul.f32 %v913, 1.442695
    %v916 = vpow.pop %v915
    %v917 = vmul.f32 %v914, 1.442695
    %v918 = vpow.pop %v917
    %v919 = vsel %vm270, %v916, 0.0
    %920 = vadd.xlane.f32.xlu0 %v919
    %v921 = vpop.xlane.xlu0 %920
    %v922 = vsel %vm270, %v918, 0.0
    %923 = vadd.xlane.f32.xlu0 %v922
    %v924 = vpop.xlane.xlu0 %923
    %v925 = vrcp.pop %v921
    %v926 = vrcp.pop %v924
    %v927 = vmul.f32 %v916, %v925
    %v928 = vmul.f32 %v918, %v926
    %v929 = vpack.c.bf16 %v927, %v927
    %v930 = vpack.c.bf16 %v928, %v928
    %931 = vrot.lane.b32.xlu0 %v260, 80
    %v932 = vpop.permute.xlu0 %931
    %v934 = vsel %vm270, %v929, 0
    %v937 = vsel %vm393, %v932, 0
    %939 = vmatprep.subr.bf16.mxu0 0
    %940 = vmatpush1.bf16.msra.mxu0 %v937
    %941 = vmatprep.subr.bf16.mxu0 0
    %942 = vmatpush1.bf16.msra.mxu0 0
    %943 = vmatprep.subr.bf16.mxu0 0
    %944 = vmatpush1.bf16.msra.mxu0 0
    %945 = vmatprep.subr.bf16.mxu0 0
    %946 = vmatpush1.bf16.msra.mxu0 0
    %947 = vmatprep.subr.bf16.mxu0 0
    %948 = vmatpush1.bf16.msra.mxu0 0
    %949 = vmatprep.subr.bf16.mxu0 0
    %950 = vmatpush1.bf16.msra.mxu0 0
    %951 = vmatprep.subr.bf16.mxu0 0
    %952 = vmatpush1.bf16.msra.mxu0 0
    %953 = vmatprep.subr.bf16.mxu0 0
    %954 = vmatpush1.bf16.msra.mxu0 0
    %955 = vmatprep.subr.bf16.mxu0 0
    %956 = vmatpush1.bf16.msra.mxu0 0
    %957 = vmatprep.subr.bf16.mxu0 0
    %958 = vmatpush1.bf16.msra.mxu0 0
    %959 = vmatprep.subr.bf16.mxu0 0
    %960 = vmatpush1.bf16.msra.mxu0 0
    %961 = vmatprep.subr.bf16.mxu0 0
    %962 = vmatpush1.bf16.msra.mxu0 0
    %963 = vmatprep.subr.bf16.mxu0 0
    %964 = vmatpush1.bf16.msra.mxu0 0
    %965 = vmatprep.subr.bf16.mxu0 0
    %966 = vmatpush1.bf16.msra.mxu0 0
    %967 = vmatprep.subr.bf16.mxu0 0
    %968 = vmatpush1.bf16.msra.mxu0 0
    %969 = vmatprep.subr.bf16.mxu0 0
    %970 = vmatpush1.bf16.msra.mxu0 0
    %971 = vmatprep.mubr.bf16.mxu0 0
    %972 = vmatmul.mubr.bf16.gmra.mrb[0].mxu0 %v934
    %v973 = vpop.f32.mrb[0].mxu0
    %v974 = vadd.f32 0.0, %v973
    %v975 = vpop.f32.mrb[0].mxu0
    %v976 = vpop.f32.mrb[0].mxu0
    %v977 = vpop.f32.mrb[0].mxu0
    %978 = vdwg.mxu0
    %979 = vrot.lane.b32.xlu0 %v261, 80
    %v980 = vpop.permute.xlu0 %979
    %v982 = vsel %vm270, %v930, 0
    %v985 = vsel %vm393, %v980, 0
    %987 = vmatprep.subr.bf16.mxu0 0
    %988 = vmatpush1.bf16.msra.mxu0 %v985
    %989 = vmatprep.subr.bf16.mxu0 0
    %990 = vmatpush1.bf16.msra.mxu0 0
    %991 = vmatprep.subr.bf16.mxu0 0
    %992 = vmatpush1.bf16.msra.mxu0 0
    %993 = vmatprep.subr.bf16.mxu0 0
    %994 = vmatpush1.bf16.msra.mxu0 0
    %995 = vmatprep.subr.bf16.mxu0 0
    %996 = vmatpush1.bf16.msra.mxu0 0
    %997 = vmatprep.subr.bf16.mxu0 0
    %998 = vmatpush1.bf16.msra.mxu0 0
    %999 = vmatprep.subr.bf16.mxu0 0
    %1000 = vmatpush1.bf16.msra.mxu0 0
    %1001 = vmatprep.subr.bf16.mxu0 0
    %1002 = vmatpush1.bf16.msra.mxu0 0
    %1003 = vmatprep.subr.bf16.mxu0 0
    %1004 = vmatpush1.bf16.msra.mxu0 0
    %1005 = vmatprep.subr.bf16.mxu0 0
    %1006 = vmatpush1.bf16.msra.mxu0 0
    %1007 = vmatprep.subr.bf16.mxu0 0
    %1008 = vmatpush1.bf16.msra.mxu0 0
    %1009 = vmatprep.subr.bf16.mxu0 0
    %1010 = vmatpush1.bf16.msra.mxu0 0
    %1011 = vmatprep.subr.bf16.mxu0 0
    %1012 = vmatpush1.bf16.msra.mxu0 0
    %1013 = vmatprep.subr.bf16.mxu0 0
    %1014 = vmatpush1.bf16.msra.mxu0 0
    %1015 = vmatprep.subr.bf16.mxu0 0
    %1016 = vmatpush1.bf16.msra.mxu0 0
    %1017 = vmatprep.subr.bf16.mxu0 0
    %1018 = vmatpush1.bf16.msra.mxu0 0
    %1019 = vmatprep.mubr.bf16.mxu0 0
    %1020 = vmatmul.mubr.bf16.gmra.mrb[0].mxu0 %v982
    %v1021 = vpop.f32.mrb[0].mxu0
    %v1022 = vadd.f32 0.0, %v1021
    %v1023 = vpop.f32.mrb[0].mxu0
    %v1024 = vpop.f32.mrb[0].mxu0
    %v1025 = vpop.f32.mrb[0].mxu0
    %1026 = vdwg.mxu0
    %v1027 = vpack.c.bf16 %v1022, %v974
    %s1028 = scalar_lea.vmem %s5, 8
    %v1029 = vld [vmem:[%s1028] sm:$0xf]
    %v1031 = vsel %vm270, %v1027, 0
    %v1034 = vsel %vm393, %v1029, 0
    %1036 = vmatprep.subr.bf16.mxu0 0
    %1037 = vmatpush1.bf16.msra.mxu0 %v1034
    %1038 = vmatprep.subr.bf16.mxu0 0
    %1039 = vmatpush1.bf16.msra.mxu0 0
    %1040 = vmatprep.subr.bf16.mxu0 0
    %1041 = vmatpush1.bf16.msra.mxu0 0
    %1042 = vmatprep.subr.bf16.mxu0 0
    %1043 = vmatpush1.bf16.msra.mxu0 0
    %1044 = vmatprep.subr.bf16.mxu0 0
    %1045 = vmatpush1.bf16.msra.mxu0 0
    %1046 = vmatprep.subr.bf16.mxu0 0
    %1047 = vmatpush1.bf16.msra.mxu0 0
    %1048 = vmatprep.subr.bf16.mxu0 0
    %1049 = vmatpush1.bf16.msra.mxu0 0
    %1050 = vmatprep.subr.bf16.mxu0 0
    %1051 = vmatpush1.bf16.msra.mxu0 0
    %1052 = vmatprep.subr.bf16.mxu0 0
    %1053 = vmatpush1.bf16.msra.mxu0 0
    %1054 = vmatprep.subr.bf16.mxu0 0
    %1055 = vmatpush1.bf16.msra.mxu0 0
    %1056 = vmatprep.subr.bf16.mxu0 0
    %1057 = vmatpush1.bf16.msra.mxu0 0
    %1058 = vmatprep.subr.bf16.mxu0 0
    %1059 = vmatpush1.bf16.msra.mxu0 0
    %1060 = vmatprep.subr.bf16.mxu0 0
    %1061 = vmatpush1.bf16.msra.mxu0 0
    %1062 = vmatprep.subr.bf16.mxu0 0
    %1063 = vmatpush1.bf16.msra.mxu0 0
    %1064 = vmatprep.subr.bf16.mxu0 0
    %1065 = vmatpush1.bf16.msra.mxu0 0
    %1066 = vmatprep.subr.bf16.mxu0 0
    %1067 = vmatpush1.bf16.msra.mxu0 0
    %1068 = vmatprep.mubr.bf16.mxu0 0
    %1069 = vmatmul.mubr.bf16.gmra.mrb[0].mxu0 %v1031
    %v1070 = vpop.f32.mrb[0].mxu0
    %v1071 = vadd.f32 0.0, %v1070
    %v1072 = vpop.f32.mrb[0].mxu0
    %v1073 = vpop.f32.mrb[0].mxu0
    %v1074 = vadd.f32 0.0, %v1073
    %v1075 = vpop.f32.mrb[0].mxu0
    %1076 = vdwg.mxu0
    %v1077 = vadd.f32 %v801, %v1071
    %v1078 = vadd.f32 %v804, %v1074
    %1079 = vrot.lane.b32.xlu0 %v258, 104
    %v1080 = vpop.permute.xlu0 %1079
    %1081 = vrot.lane.b32.xlu0 %v260, 104
    %v1082 = vpop.permute.xlu0 %1081
    %v1084 = vsel %vm270, %v1080, 0
    %v1087 = vsel %vm270, %v1082, 0
    %1089 = vmatprep.subr.bf16.mxu0 0
    %1090 = vmatpush1.bf16.xpose.msra.mxu0 %v1087
    %1091 = vmatprep.subr.bf16.mxu0 0
    %1092 = vmatpush1.bf16.xpose.msra.mxu0 0
    %1093 = vmatprep.subr.bf16.mxu0 0
    %1094 = vmatpush1.bf16.xpose.msra.mxu0 0
    %1095 = vmatprep.subr.bf16.mxu0 0
    %1096 = vmatpush1.bf16.xpose.msra.mxu0 0
    %1097 = vmatprep.subr.bf16.mxu0 0
    %1098 = vmatpush1.bf16.xpose.msra.mxu0 0
    %1099 = vmatprep.subr.bf16.mxu0 0
    %1100 = vmatpush1.bf16.xpose.msra.mxu0 0
    %1101 = vmatprep.subr.bf16.mxu0 0
    %1102 = vmatpush1.bf16.xpose.msra.mxu0 0
    %1103 = vmatprep.subr.bf16.mxu0 0
    %1104 = vmatpush1.bf16.xpose.msra.mxu0 0
    %1105 = vmatprep.subr.bf16.mxu0 0
    %1106 = vmatpush1.bf16.xpose.msra.mxu0 0
    %1107 = vmatprep.subr.bf16.mxu0 0
    %1108 = vmatpush1.bf16.xpose.msra.mxu0 0
    %1109 = vmatprep.subr.bf16.mxu0 0
    %1110 = vmatpush1.bf16.xpose.msra.mxu0 0
    %1111 = vmatprep.subr.bf16.mxu0 0
    %1112 = vmatpush1.bf16.xpose.msra.mxu0 0
    %1113 = vmatprep.subr.bf16.mxu0 0
    %1114 = vmatpush1.bf16.xpose.msra.mxu0 0
    %1115 = vmatprep.subr.bf16.mxu0 0
    %1116 = vmatpush1.bf16.xpose.msra.mxu0 0
    %1117 = vmatprep.subr.bf16.mxu0 0
    %1118 = vmatpush1.bf16.xpose.msra.mxu0 0
    %1119 = vmatprep.subr.bf16.mxu0 0
    %1120 = vmatpush1.bf16.xpose.msra.mxu0 0
    %1121 = vmatprep.mubr.bf16.mxu0 0
    %1122 = vmatmul.mubr.bf16.gmra.mrb[0].mxu0 %v1084
    %v1123 = vpop.f32.mrb[0].mxu0
    %v1124 = vadd.f32 %v265, %v1123
    %v1125 = vpop.f32.mrb[0].mxu0
    %v1126 = vpop.f32.mrb[0].mxu0
    %v1127 = vpop.f32.mrb[0].mxu0
    %1128 = vdwg.mxu0
    %1129 = vrot.lane.b32.xlu0 %v259, 104
    %v1130 = vpop.permute.xlu0 %1129
    %1131 = vrot.lane.b32.xlu0 %v261, 104
    %v1132 = vpop.permute.xlu0 %1131
    %v1134 = vsel %vm270, %v1130, 0
    %v1137 = vsel %vm270, %v1132, 0
    %1139 = vmatprep.subr.bf16.mxu0 0
    %1140 = vmatpush1.bf16.xpose.msra.mxu0 %v1137
    %1141 = vmatprep.subr.bf16.mxu0 0
    %1142 = vmatpush1.bf16.xpose.msra.mxu0 0
    %1143 = vmatprep.subr.bf16.mxu0 0
    %1144 = vmatpush1.bf16.xpose.msra.mxu0 0
    %1145 = vmatprep.subr.bf16.mxu0 0
    %1146 = vmatpush1.bf16.xpose.msra.mxu0 0
    %1147 = vmatprep.subr.bf16.mxu0 0
    %1148 = vmatpush1.bf16.xpose.msra.mxu0 0
    %1149 = vmatprep.subr.bf16.mxu0 0
    %1150 = vmatpush1.bf16.xpose.msra.mxu0 0
    %1151 = vmatprep.subr.bf16.mxu0 0
    %1152 = vmatpush1.bf16.xpose.msra.mxu0 0
    %1153 = vmatprep.subr.bf16.mxu0 0
    %1154 = vmatpush1.bf16.xpose.msra.mxu0 0
    %1155 = vmatprep.subr.bf16.mxu0 0
    %1156 = vmatpush1.bf16.xpose.msra.mxu0 0
    %1157 = vmatprep.subr.bf16.mxu0 0
    %1158 = vmatpush1.bf16.xpose.msra.mxu0 0
    %1159 = vmatprep.subr.bf16.mxu0 0
    %1160 = vmatpush1.bf16.xpose.msra.mxu0 0
    %1161 = vmatprep.subr.bf16.mxu0 0
    %1162 = vmatpush1.bf16.xpose.msra.mxu0 0
    %1163 = vmatprep.subr.bf16.mxu0 0
    %1164 = vmatpush1.bf16.xpose.msra.mxu0 0
    %1165 = vmatprep.subr.bf16.mxu0 0
    %1166 = vmatpush1.bf16.xpose.msra.mxu0 0
    %1167 = vmatprep.subr.bf16.mxu0 0
    %1168 = vmatpush1.bf16.xpose.msra.mxu0 0
    %1169 = vmatprep.subr.bf16.mxu0 0
    %1170 = vmatpush1.bf16.xpose.msra.mxu0 0
    %1171 = vmatprep.mubr.bf16.mxu0 0
    %1172 = vmatmul.mubr.bf16.gmra.mrb[0].mxu0 %v1134
    %v1173 = vpop.f32.mrb[0].mxu0
    %v1174 = vadd.f32 %v269, %v1173
    %v1175 = vpop.f32.mrb[0].mxu0
    %v1176 = vpop.f32.mrb[0].mxu0
    %v1177 = vpop.f32.mrb[0].mxu0
    %1178 = vdwg.mxu0
    %v1179 = vsel %vm270, %v1124, -inf
    %1180 = vmax.xlane.f32.xlu0 %v1179
    %v1181 = vpop.xlane.xlu0 %1180
    %v1182 = vsel %vm270, %v1174, -inf
    %1183 = vmax.xlane.f32.xlu0 %v1182
    %v1184 = vpop.xlane.xlu0 %1183
    %v1185 = vsub.f32 %v1124, %v1181
    %v1186 = vsub.f32 %v1174, %v1184
    %v1187 = vmul.f32 %v1185, 1.442695
    %v1188 = vpow.pop %v1187
    %v1189 = vmul.f32 %v1186, 1.442695
    %v1190 = vpow.pop %v1189
    %v1191 = vsel %vm270, %v1188, 0.0
    %1192 = vadd.xlane.f32.xlu0 %v1191
    %v1193 = vpop.xlane.xlu0 %1192
    %v1194 = vsel %vm270, %v1190, 0.0
    %1195 = vadd.xlane.f32.xlu0 %v1194
    %v1196 = vpop.xlane.xlu0 %1195
    %v1197 = vrcp.pop %v1193
    %v1198 = vrcp.pop %v1196
    %v1199 = vmul.f32 %v1188, %v1197
    %v1200 = vmul.f32 %v1190, %v1198
    %v1201 = vpack.c.bf16 %v1199, %v1199
    %v1202 = vpack.c.bf16 %v1200, %v1200
    %1203 = vrot.lane.b32.xlu0 %v260, 72
    %v1204 = vpop.permute.xlu0 %1203
    %v1206 = vsel %vm270, %v1201, 0
    %v1209 = vsel %vm393, %v1204, 0
    %1211 = vmatprep.subr.bf16.mxu0 0
    %1212 = vmatpush1.bf16.msra.mxu0 %v1209
    %1213 = vmatprep.subr.bf16.mxu0 0
    %1214 = vmatpush1.bf16.msra.mxu0 0
    %1215 = vmatprep.subr.bf16.mxu0 0
    %1216 = vmatpush1.bf16.msra.mxu0 0
    %1217 = vmatprep.subr.bf16.mxu0 0
    %1218 = vmatpush1.bf16.msra.mxu0 0
    %1219 = vmatprep.subr.bf16.mxu0 0
    %1220 = vmatpush1.bf16.msra.mxu0 0
    %1221 = vmatprep.subr.bf16.mxu0 0
    %1222 = vmatpush1.bf16.msra.mxu0 0
    %1223 = vmatprep.subr.bf16.mxu0 0
    %1224 = vmatpush1.bf16.msra.mxu0 0
    %1225 = vmatprep.subr.bf16.mxu0 0
    %1226 = vmatpush1.bf16.msra.mxu0 0
    %1227 = vmatprep.subr.bf16.mxu0 0
    %1228 = vmatpush1.bf16.msra.mxu0 0
    %1229 = vmatprep.subr.bf16.mxu0 0
    %1230 = vmatpush1.bf16.msra.mxu0 0
    %1231 = vmatprep.subr.bf16.mxu0 0
    %1232 = vmatpush1.bf16.msra.mxu0 0
    %1233 = vmatprep.subr.bf16.mxu0 0
    %1234 = vmatpush1.bf16.msra.mxu0 0
    %1235 = vmatprep.subr.bf16.mxu0 0
    %1236 = vmatpush1.bf16.msra.mxu0 0
    %1237 = vmatprep.subr.bf16.mxu0 0
    %1238 = vmatpush1.bf16.msra.mxu0 0
    %1239 = vmatprep.subr.bf16.mxu0 0
    %1240 = vmatpush1.bf16.msra.mxu0 0
    %1241 = vmatprep.subr.bf16.mxu0 0
    %1242 = vmatpush1.bf16.msra.mxu0 0
    %1243 = vmatprep.mubr.bf16.mxu0 0
    %1244 = vmatmul.mubr.bf16.gmra.mrb[0].mxu0 %v1206
    %v1245 = vpop.f32.mrb[0].mxu0
    %v1246 = vadd.f32 0.0, %v1245
    %v1247 = vpop.f32.mrb[0].mxu0
    %v1248 = vpop.f32.mrb[0].mxu0
    %v1249 = vpop.f32.mrb[0].mxu0
    %1250 = vdwg.mxu0
    %1251 = vrot.lane.b32.xlu0 %v261, 72
    %v1252 = vpop.permute.xlu0 %1251
    %v1254 = vsel %vm270, %v1202, 0
    %v1257 = vsel %vm393, %v1252, 0
    %1259 = vmatprep.subr.bf16.mxu0 0
    %1260 = vmatpush1.bf16.msra.mxu0 %v1257
    %1261 = vmatprep.subr.bf16.mxu0 0
    %1262 = vmatpush1.bf16.msra.mxu0 0
    %1263 = vmatprep.subr.bf16.mxu0 0
    %1264 = vmatpush1.bf16.msra.mxu0 0
    %1265 = vmatprep.subr.bf16.mxu0 0
    %1266 = vmatpush1.bf16.msra.mxu0 0
    %1267 = vmatprep.subr.bf16.mxu0 0
    %1268 = vmatpush1.bf16.msra.mxu0 0
    %1269 = vmatprep.subr.bf16.mxu0 0
    %1270 = vmatpush1.bf16.msra.mxu0 0
    %1271 = vmatprep.subr.bf16.mxu0 0
    %1272 = vmatpush1.bf16.msra.mxu0 0
    %1273 = vmatprep.subr.bf16.mxu0 0
    %1274 = vmatpush1.bf16.msra.mxu0 0
    %1275 = vmatprep.subr.bf16.mxu0 0
    %1276 = vmatpush1.bf16.msra.mxu0 0
    %1277 = vmatprep.subr.bf16.mxu0 0
    %1278 = vmatpush1.bf16.msra.mxu0 0
    %1279 = vmatprep.subr.bf16.mxu0 0
    %1280 = vmatpush1.bf16.msra.mxu0 0
    %1281 = vmatprep.subr.bf16.mxu0 0
    %1282 = vmatpush1.bf16.msra.mxu0 0
    %1283 = vmatprep.subr.bf16.mxu0 0
    %1284 = vmatpush1.bf16.msra.mxu0 0
    %1285 = vmatprep.subr.bf16.mxu0 0
    %1286 = vmatpush1.bf16.msra.mxu0 0
    %1287 = vmatprep.subr.bf16.mxu0 0
    %1288 = vmatpush1.bf16.msra.mxu0 0
    %1289 = vmatprep.subr.bf16.mxu0 0
    %1290 = vmatpush1.bf16.msra.mxu0 0
    %1291 = vmatprep.mubr.bf16.mxu0 0
    %1292 = vmatmul.mubr.bf16.gmra.mrb[0].mxu0 %v1254
    %v1293 = vpop.f32.mrb[0].mxu0
    %v1294 = vadd.f32 0.0, %v1293
    %v1295 = vpop.f32.mrb[0].mxu0
    %v1296 = vpop.f32.mrb[0].mxu0
    %v1297 = vpop.f32.mrb[0].mxu0
    %1298 = vdwg.mxu0
    %v1299 = vpack.c.bf16 %v1294, %v1246
    %s1300 = scalar_lea.vmem %s5, 12
    %v1301 = vld [vmem:[%s1300] sm:$0xf]
    %v1303 = vsel %vm270, %v1299, 0
    %v1306 = vsel %vm393, %v1301, 0
    %1308 = vmatprep.subr.bf16.mxu0 0
    %1309 = vmatpush1.bf16.msra.mxu0 %v1306
    %1310 = vmatprep.subr.bf16.mxu0 0
    %1311 = vmatpush1.bf16.msra.mxu0 0
    %1312 = vmatprep.subr.bf16.mxu0 0
    %1313 = vmatpush1.bf16.msra.mxu0 0
    %1314 = vmatprep.subr.bf16.mxu0 0
    %1315 = vmatpush1.bf16.msra.mxu0 0
    %1316 = vmatprep.subr.bf16.mxu0 0
    %1317 = vmatpush1.bf16.msra.mxu0 0
    %1318 = vmatprep.subr.bf16.mxu0 0
    %1319 = vmatpush1.bf16.msra.mxu0 0
    %1320 = vmatprep.subr.bf16.mxu0 0
    %1321 = vmatpush1.bf16.msra.mxu0 0
    %1322 = vmatprep.subr.bf16.mxu0 0
    %1323 = vmatpush1.bf16.msra.mxu0 0
    %1324 = vmatprep.subr.bf16.mxu0 0
    %1325 = vmatpush1.bf16.msra.mxu0 0
    %1326 = vmatprep.subr.bf16.mxu0 0
    %1327 = vmatpush1.bf16.msra.mxu0 0
    %1328 = vmatprep.subr.bf16.mxu0 0
    %1329 = vmatpush1.bf16.msra.mxu0 0
    %1330 = vmatprep.subr.bf16.mxu0 0
    %1331 = vmatpush1.bf16.msra.mxu0 0
    %1332 = vmatprep.subr.bf16.mxu0 0
    %1333 = vmatpush1.bf16.msra.mxu0 0
    %1334 = vmatprep.subr.bf16.mxu0 0
    %1335 = vmatpush1.bf16.msra.mxu0 0
    %1336 = vmatprep.subr.bf16.mxu0 0
    %1337 = vmatpush1.bf16.msra.mxu0 0
    %1338 = vmatprep.subr.bf16.mxu0 0
    %1339 = vmatpush1.bf16.msra.mxu0 0
    %1340 = vmatprep.mubr.bf16.mxu0 0
    %1341 = vmatmul.mubr.bf16.gmra.mrb[0].mxu0 %v1303
    %v1342 = vpop.f32.mrb[0].mxu0
    %v1343 = vadd.f32 0.0, %v1342
    %v1344 = vpop.f32.mrb[0].mxu0
    %v1345 = vpop.f32.mrb[0].mxu0
    %v1346 = vadd.f32 0.0, %v1345
    %v1347 = vpop.f32.mrb[0].mxu0
    %1348 = vdwg.mxu0
    %v1349 = vadd.f32 %v1077, %v1343
    %v1350 = vadd.f32 %v1078, %v1346
    %v1352 = vlaneseq
    %v1353 = vshrl.u32 %v1352, 7
    %v1354 = vsub.s32 0, %v1353
    %v1355 = vrot.slane %v257, %v1354
    %v1357 = vadd.f32 %v1349, %v1355
    %v1358 = vadd.f32 %v1350, %v1355
    %v1359 = vstv %s130
    %v1360 = vmul.f32 %v1359, %v1357
    %v1361 = vmul.f32 %v1359, %v1358
    %v1362 = vadd.f32 %v124, %v1360
    %v1363 = vadd.f32 %v125, %v1361
    %v1364 = vpack.c.bf16 %v1363, %v1362
    %v1365 = vld [vmem:[#allocation9] sm:$0xf]
    %v1366 = vld [vmem:[#allocation9 + $0x8] sm:$0xf]
    %v1367 = vld [vmem:[#allocation9 + $0x10] sm:$0xf]
    %v1368 = vld [vmem:[#allocation9 + $0x18] sm:$0xf]
    %v1369 = vld [vmem:[#allocation11] sm:$0x1]
    %v1371 = vlaneseq
    %v1372 = vshrl.u32 %v1371, 7
    %v1373 = vsub.s32 0, %v1372
    %v1374 = vrot.slane %v1369, %v1373
    %v1379 = vunpack.c.l.b16 %v1365
    %v1380 = vunpack.c.l.b16 %v1366
    %v1381 = vunpack.c.l.b16 %v1367
    %v1382 = vunpack.c.l.b16 %v1368
    %v1383 = vpack.c.b16 %v1380, %v1379
    %v1384 = vpack.c.b16 %v1382, %v1381
    %1385 = vrot.lane.b32.xlu0 %v1383, 32
    %v1386 = vpop.permute.xlu0 %1385
    %1387 = vrot.lane.b32.xlu0 %v1384, 32
    %v1388 = vpop.permute.xlu0 %1387
    %1391 = vrot.lane.b32.xlu0 %v1374, 32
    %v1392 = vpop.permute.xlu0 %1391
    %v1395 = vsel %vm157, %v1364, 0
    %1397 = vmatprep.subr.bf16.mxu0 0
    %1398 = vmatpush1.bf16.msra.mxu0 %v1386
    %1399 = vmatprep.subr.bf16.mxu0 0
    %1400 = vmatpush1.bf16.msra.mxu0 %v1388
    %1401 = vmatprep.subr.bf16.mxu0 0
    %1402 = vmatpush1.bf16.msra.mxu0 0
    %1403 = vmatprep.subr.bf16.mxu0 0
    %1404 = vmatpush1.bf16.msra.mxu0 0
    %1405 = vmatprep.subr.bf16.mxu0 0
    %1406 = vmatpush1.bf16.msra.mxu0 0
    %1407 = vmatprep.subr.bf16.mxu0 0
    %1408 = vmatpush1.bf16.msra.mxu0 0
    %1409 = vmatprep.subr.bf16.mxu0 0
    %1410 = vmatpush1.bf16.msra.mxu0 0
    %1411 = vmatprep.subr.bf16.mxu0 0
    %1412 = vmatpush1.bf16.msra.mxu0 0
    %1413 = vmatprep.subr.bf16.mxu0 0
    %1414 = vmatpush1.bf16.msra.mxu0 0
    %1415 = vmatprep.subr.bf16.mxu0 0
    %1416 = vmatpush1.bf16.msra.mxu0 0
    %1417 = vmatprep.subr.bf16.mxu0 0
    %1418 = vmatpush1.bf16.msra.mxu0 0
    %1419 = vmatprep.subr.bf16.mxu0 0
    %1420 = vmatpush1.bf16.msra.mxu0 0
    %1421 = vmatprep.subr.bf16.mxu0 0
    %1422 = vmatpush1.bf16.msra.mxu0 0
    %1423 = vmatprep.subr.bf16.mxu0 0
    %1424 = vmatpush1.bf16.msra.mxu0 0
    %1425 = vmatprep.subr.bf16.mxu0 0
    %1426 = vmatpush1.bf16.msra.mxu0 0
    %1427 = vmatprep.subr.bf16.mxu0 0
    %1428 = vmatpush1.bf16.msra.mxu0 0
    %1429 = vmatprep.mubr.bf16.mxu0 0
    %1430 = vmatmul.mubr.bf16.gmra.mrb[0].mxu0 %v1395
    %v1431 = vpop.f32.mrb[0].mxu0
    %v1432 = vadd.f32 %v1392, %v1431
    %v1433 = vpop.f32.mrb[0].mxu0
    %v1434 = vpop.f32.mrb[0].mxu0
    %v1435 = vadd.f32 %v1392, %v1434
    %v1436 = vpop.f32.mrb[0].mxu0
    %1437 = vdwg.mxu0
    %v1438 = vmax.f32 %v1432, 0.0
    %v1439 = vmax.f32 %v1435, 0.0
    %v1440 = vstv %s131
    %v1441 = vmul.f32 %v1440, %v1438
    %v1442 = vmul.f32 %v1440, %v1439
    %v1443 = vadd.f32 %v1362, %v1441
    %v1444 = vadd.f32 %v1363, %v1442
    %v1445 = vpack.c.bf16 %v1444, %v1443
    %v1446 = vld [vmem:[#allocation9 + $0x4] sm:$0xf]
    %v1447 = vld [vmem:[#allocation9 + $0xc] sm:$0xf]
    %v1448 = vld [vmem:[#allocation9 + $0x14] sm:$0xf]
    %v1449 = vld [vmem:[#allocation9 + $0x1c] sm:$0xf]
    %v1450 = vld [vmem:[#allocation11 + $0x1] sm:$0x1]
    %v1452 = vlaneseq
    %v1453 = vshrl.u32 %v1452, 7
    %v1454 = vsub.s32 0, %v1453
    %v1455 = vrot.slane %v1450, %v1454
    %v1461 = vunpack.c.l.b16 %v1446
    %v1462 = vunpack.c.l.b16 %v1447
    %v1463 = vunpack.c.l.b16 %v1448
    %v1464 = vunpack.c.l.b16 %v1449
    %v1465 = vpack.c.b16 %v1462, %v1461
    %v1466 = vpack.c.b16 %v1464, %v1463
    %v1470 = vsel %vm157, %v1445, 0
    %1472 = vmatprep.subr.bf16.mxu0 0
    %1473 = vmatpush1.bf16.msra.mxu0 %v1465
    %1474 = vmatprep.subr.bf16.mxu0 0
    %1475 = vmatpush1.bf16.msra.mxu0 %v1466
    %1476 = vmatprep.subr.bf16.mxu0 0
    %1477 = vmatpush1.bf16.msra.mxu0 0
    %1478 = vmatprep.subr.bf16.mxu0 0
    %1479 = vmatpush1.bf16.msra.mxu0 0
    %1480 = vmatprep.subr.bf16.mxu0 0
    %1481 = vmatpush1.bf16.msra.mxu0 0
    %1482 = vmatprep.subr.bf16.mxu0 0
    %1483 = vmatpush1.bf16.msra.mxu0 0
    %1484 = vmatprep.subr.bf16.mxu0 0
    %1485 = vmatpush1.bf16.msra.mxu0 0
    %1486 = vmatprep.subr.bf16.mxu0 0
    %1487 = vmatpush1.bf16.msra.mxu0 0
    %1488 = vmatprep.subr.bf16.mxu0 0
    %1489 = vmatpush1.bf16.msra.mxu0 0
    %1490 = vmatprep.subr.bf16.mxu0 0
    %1491 = vmatpush1.bf16.msra.mxu0 0
    %1492 = vmatprep.subr.bf16.mxu0 0
    %1493 = vmatpush1.bf16.msra.mxu0 0
    %1494 = vmatprep.subr.bf16.mxu0 0
    %1495 = vmatpush1.bf16.msra.mxu0 0
    %1496 = vmatprep.subr.bf16.mxu0 0
    %1497 = vmatpush1.bf16.msra.mxu0 0
    %1498 = vmatprep.subr.bf16.mxu0 0
    %1499 = vmatpush1.bf16.msra.mxu0 0
    %1500 = vmatprep.subr.bf16.mxu0 0
    %1501 = vmatpush1.bf16.msra.mxu0 0
    %1502 = vmatprep.subr.bf16.mxu0 0
    %1503 = vmatpush1.bf16.msra.mxu0 0
    %1504 = vmatprep.mubr.bf16.mxu0 0
    %1505 = vmatmul.mubr.bf16.gmra.mrb[0].mxu0 %v1470
    %v1506 = vpop.f32.mrb[0].mxu0
    %v1507 = vadd.f32 %v1455, %v1506
    %v1508 = vpop.f32.mrb[0].mxu0
    %v1509 = vpop.f32.mrb[0].mxu0
    %v1510 = vadd.f32 %v1455, %v1509
    %v1511 = vpop.f32.mrb[0].mxu0
    %1512 = vdwg.mxu0
    %v1513 = vmul.f32 %v1507, 0.35355338
    %v1514 = vmul.f32 %v1510, 0.35355338
    %v1515 = vld [vmem:[#allocation11 + $0x2] sm:$0x1]
    %v1516 = vpack.c.bf16 %v1513, %v1513
    %v1517 = vpack.c.bf16 %v1514, %v1514
    %v1518 = vpack.c.bf16 %v1507, %v1507
    %v1519 = vpack.c.bf16 %v1510, %v1510
    %v1520 = vlaneseq
    %v1521 = vshrl.u32 %v1520, 7
    %v1522 = vsub.s32 1, %v1521
    %v1523 = vrot.slane %v128, %v1522
    %v1524 = vlaneseq
    %v1525 = vshrl.u32 %v1524, 7
    %v1526 = vsub.s32 1, %v1525
    %v1527 = vrot.slane %v129, %v1526
    %1529 = vrot.lane.b32.xlu0 %v1518, 96
    %v1530 = vpop.permute.xlu0 %1529
    %v1532 = vsel %vm270, %v1516, 0
    %v1535 = vsel %vm270, %v1530, 0
    %1537 = vmatprep.subr.bf16.mxu0 0
    %1538 = vmatpush1.bf16.xpose.msra.mxu0 %v1535
    %1539 = vmatprep.subr.bf16.mxu0 0
    %1540 = vmatpush1.bf16.xpose.msra.mxu0 0
    %1541 = vmatprep.subr.bf16.mxu0 0
    %1542 = vmatpush1.bf16.xpose.msra.mxu0 0
    %1543 = vmatprep.subr.bf16.mxu0 0
    %1544 = vmatpush1.bf16.xpose.msra.mxu0 0
    %1545 = vmatprep.subr.bf16.mxu0 0
    %1546 = vmatpush1.bf16.xpose.msra.mxu0 0
    %1547 = vmatprep.subr.bf16.mxu0 0
    %1548 = vmatpush1.bf16.xpose.msra.mxu0 0
    %1549 = vmatprep.subr.bf16.mxu0 0
    %1550 = vmatpush1.bf16.xpose.msra.mxu0 0
    %1551 = vmatprep.subr.bf16.mxu0 0
    %1552 = vmatpush1.bf16.xpose.msra.mxu0 0
    %1553 = vmatprep.subr.bf16.mxu0 0
    %1554 = vmatpush1.bf16.xpose.msra.mxu0 0
    %1555 = vmatprep.subr.bf16.mxu0 0
    %1556 = vmatpush1.bf16.xpose.msra.mxu0 0
    %1557 = vmatprep.subr.bf16.mxu0 0
    %1558 = vmatpush1.bf16.xpose.msra.mxu0 0
    %1559 = vmatprep.subr.bf16.mxu0 0
    %1560 = vmatpush1.bf16.xpose.msra.mxu0 0
    %1561 = vmatprep.subr.bf16.mxu0 0
    %1562 = vmatpush1.bf16.xpose.msra.mxu0 0
    %1563 = vmatprep.subr.bf16.mxu0 0
    %1564 = vmatpush1.bf16.xpose.msra.mxu0 0
    %1565 = vmatprep.subr.bf16.mxu0 0
    %1566 = vmatpush1.bf16.xpose.msra.mxu0 0
    %1567 = vmatprep.subr.bf16.mxu0 0
    %1568 = vmatpush1.bf16.xpose.msra.mxu0 0
    %1569 = vmatprep.mubr.bf16.mxu0 0
    %1570 = vmatmul.mubr.bf16.gmra.mrb[0].mxu0 %v1532
    %v1571 = vpop.f32.mrb[0].mxu0
    %v1572 = vadd.f32 %v1523, %v1571
    %v1573 = vpop.f32.mrb[0].mxu0
    %v1574 = vpop.f32.mrb[0].mxu0
    %v1575 = vpop.f32.mrb[0].mxu0
    %1576 = vdwg.mxu0
    %1578 = vrot.lane.b32.xlu0 %v1519, 96
    %v1579 = vpop.permute.xlu0 %1578
    %v1581 = vsel %vm270, %v1517, 0
    %v1584 = vsel %vm270, %v1579, 0
    %1586 = vmatprep.subr.bf16.mxu0 0
    %1587 = vmatpush1.bf16.xpose.msra.mxu0 %v1584
    %1588 = vmatprep.subr.bf16.mxu0 0
    %1589 = vmatpush1.bf16.xpose.msra.mxu0 0
    %1590 = vmatprep.subr.bf16.mxu0 0
    %1591 = vmatpush1.bf16.xpose.msra.mxu0 0
    %1592 = vmatprep.subr.bf16.mxu0 0
    %1593 = vmatpush1.bf16.xpose.msra.mxu0 0
    %1594 = vmatprep.subr.bf16.mxu0 0
    %1595 = vmatpush1.bf16.xpose.msra.mxu0 0
    %1596 = vmatprep.subr.bf16.mxu0 0
    %1597 = vmatpush1.bf16.xpose.msra.mxu0 0
    %1598 = vmatprep.subr.bf16.mxu0 0
    %1599 = vmatpush1.bf16.xpose.msra.mxu0 0
    %1600 = vmatprep.subr.bf16.mxu0 0
    %1601 = vmatpush1.bf16.xpose.msra.mxu0 0
    %1602 = vmatprep.subr.bf16.mxu0 0
    %1603 = vmatpush1.bf16.xpose.msra.mxu0 0
    %1604 = vmatprep.subr.bf16.mxu0 0
    %1605 = vmatpush1.bf16.xpose.msra.mxu0 0
    %1606 = vmatprep.subr.bf16.mxu0 0
    %1607 = vmatpush1.bf16.xpose.msra.mxu0 0
    %1608 = vmatprep.subr.bf16.mxu0 0
    %1609 = vmatpush1.bf16.xpose.msra.mxu0 0
    %1610 = vmatprep.subr.bf16.mxu0 0
    %1611 = vmatpush1.bf16.xpose.msra.mxu0 0
    %1612 = vmatprep.subr.bf16.mxu0 0
    %1613 = vmatpush1.bf16.xpose.msra.mxu0 0
    %1614 = vmatprep.subr.bf16.mxu0 0
    %1615 = vmatpush1.bf16.xpose.msra.mxu0 0
    %1616 = vmatprep.subr.bf16.mxu0 0
    %1617 = vmatpush1.bf16.xpose.msra.mxu0 0
    %1618 = vmatprep.mubr.bf16.mxu0 0
    %1619 = vmatmul.mubr.bf16.gmra.mrb[0].mxu0 %v1581
    %v1620 = vpop.f32.mrb[0].mxu0
    %v1621 = vadd.f32 %v1527, %v1620
    %v1622 = vpop.f32.mrb[0].mxu0
    %v1623 = vpop.f32.mrb[0].mxu0
    %v1624 = vpop.f32.mrb[0].mxu0
    %1625 = vdwg.mxu0
    %v1626 = vsel %vm270, %v1572, -inf
    %1627 = vmax.xlane.f32.xlu0 %v1626
    %v1628 = vpop.xlane.xlu0 %1627
    %v1629 = vsel %vm270, %v1621, -inf
    %1630 = vmax.xlane.f32.xlu0 %v1629
    %v1631 = vpop.xlane.xlu0 %1630
    %v1632 = vsub.f32 %v1572, %v1628
    %v1633 = vsub.f32 %v1621, %v1631
    %v1634 = vmul.f32 %v1632, 1.442695
    %v1635 = vpow.pop %v1634
    %v1636 = vmul.f32 %v1633, 1.442695
    %v1637 = vpow.pop %v1636
    %v1638 = vsel %vm270, %v1635, 0.0
    %1639 = vadd.xlane.f32.xlu0 %v1638
    %v1640 = vpop.xlane.xlu0 %1639
    %v1641 = vsel %vm270, %v1637, 0.0
    %1642 = vadd.xlane.f32.xlu0 %v1641
    %v1643 = vpop.xlane.xlu0 %1642
    %v1644 = vrcp.pop %v1640
    %v1645 = vrcp.pop %v1643
    %v1646 = vmul.f32 %v1635, %v1644
    %v1647 = vmul.f32 %v1637, %v1645
    %v1648 = vpack.c.bf16 %v1646, %v1646
    %v1649 = vpack.c.bf16 %v1647, %v1647
    %1650 = vrot.lane.b32.xlu0 %v1518, 64
    %v1651 = vpop.permute.xlu0 %1650
    %v1653 = vsel %vm270, %v1648, 0
    %v1656 = vsel %vm393, %v1651, 0
    %1658 = vmatprep.subr.bf16.mxu0 0
    %1659 = vmatpush1.bf16.msra.mxu0 %v1656
    %1660 = vmatprep.subr.bf16.mxu0 0
    %1661 = vmatpush1.bf16.msra.mxu0 0
    %1662 = vmatprep.subr.bf16.mxu0 0
    %1663 = vmatpush1.bf16.msra.mxu0 0
    %1664 = vmatprep.subr.bf16.mxu0 0
    %1665 = vmatpush1.bf16.msra.mxu0 0
    %1666 = vmatprep.subr.bf16.mxu0 0
    %1667 = vmatpush1.bf16.msra.mxu0 0
    %1668 = vmatprep.subr.bf16.mxu0 0
    %1669 = vmatpush1.bf16.msra.mxu0 0
    %1670 = vmatprep.subr.bf16.mxu0 0
    %1671 = vmatpush1.bf16.msra.mxu0 0
    %1672 = vmatprep.subr.bf16.mxu0 0
    %1673 = vmatpush1.bf16.msra.mxu0 0
    %1674 = vmatprep.subr.bf16.mxu0 0
    %1675 = vmatpush1.bf16.msra.mxu0 0
    %1676 = vmatprep.subr.bf16.mxu0 0
    %1677 = vmatpush1.bf16.msra.mxu0 0
    %1678 = vmatprep.subr.bf16.mxu0 0
    %1679 = vmatpush1.bf16.msra.mxu0 0
    %1680 = vmatprep.subr.bf16.mxu0 0
    %1681 = vmatpush1.bf16.msra.mxu0 0
    %1682 = vmatprep.subr.bf16.mxu0 0
    %1683 = vmatpush1.bf16.msra.mxu0 0
    %1684 = vmatprep.subr.bf16.mxu0 0
    %1685 = vmatpush1.bf16.msra.mxu0 0
    %1686 = vmatprep.subr.bf16.mxu0 0
    %1687 = vmatpush1.bf16.msra.mxu0 0
    %1688 = vmatprep.subr.bf16.mxu0 0
    %1689 = vmatpush1.bf16.msra.mxu0 0
    %1690 = vmatprep.mubr.bf16.mxu0 0
    %1691 = vmatmul.mubr.bf16.gmra.mrb[0].mxu0 %v1653
    %v1692 = vpop.f32.mrb[0].mxu0
    %v1693 = vadd.f32 0.0, %v1692
    %v1694 = vpop.f32.mrb[0].mxu0
    %v1695 = vpop.f32.mrb[0].mxu0
    %v1696 = vpop.f32.mrb[0].mxu0
    %1697 = vdwg.mxu0
    %1698 = vrot.lane.b32.xlu0 %v1519, 64
    %v1699 = vpop.permute.xlu0 %1698
    %v1701 = vsel %vm270, %v1649, 0
    %v1704 = vsel %vm393, %v1699, 0
    %1706 = vmatprep.subr.bf16.mxu0 0
    %1707 = vmatpush1.bf16.msra.mxu0 %v1704
    %1708 = vmatprep.subr.bf16.mxu0 0
    %1709 = vmatpush1.bf16.msra.mxu0 0
    %1710 = vmatprep.subr.bf16.mxu0 0
    %1711 = vmatpush1.bf16.msra.mxu0 0
    %1712 = vmatprep.subr.bf16.mxu0 0
    %1713 = vmatpush1.bf16.msra.mxu0 0
    %1714 = vmatprep.subr.bf16.mxu0 0
    %1715 = vmatpush1.bf16.msra.mxu0 0
    %1716 = vmatprep.subr.bf16.mxu0 0
    %1717 = vmatpush1.bf16.msra.mxu0 0
    %1718 = vmatprep.subr.bf16.mxu0 0
    %1719 = vmatpush1.bf16.msra.mxu0 0
    %1720 = vmatprep.subr.bf16.mxu0 0
    %1721 = vmatpush1.bf16.msra.mxu0 0
    %1722 = vmatprep.subr.bf16.mxu0 0
    %1723 = vmatpush1.bf16.msra.mxu0 0
    %1724 = vmatprep.subr.bf16.mxu0 0
    %1725 = vmatpush1.bf16.msra.mxu0 0
    %1726 = vmatprep.subr.bf16.mxu0 0
    %1727 = vmatpush1.bf16.msra.mxu0 0
    %1728 = vmatprep.subr.bf16.mxu0 0
    %1729 = vmatpush1.bf16.msra.mxu0 0
    %1730 = vmatprep.subr.bf16.mxu0 0
    %1731 = vmatpush1.bf16.msra.mxu0 0
    %1732 = vmatprep.subr.bf16.mxu0 0
    %1733 = vmatpush1.bf16.msra.mxu0 0
    %1734 = vmatprep.subr.bf16.mxu0 0
    %1735 = vmatpush1.bf16.msra.mxu0 0
    %1736 = vmatprep.subr.bf16.mxu0 0
    %1737 = vmatpush1.bf16.msra.mxu0 0
    %1738 = vmatprep.mubr.bf16.mxu0 0
    %1739 = vmatmul.mubr.bf16.gmra.mrb[0].mxu0 %v1701
    %v1740 = vpop.f32.mrb[0].mxu0
    %v1741 = vadd.f32 0.0, %v1740
    %v1742 = vpop.f32.mrb[0].mxu0
    %v1743 = vpop.f32.mrb[0].mxu0
    %v1744 = vpop.f32.mrb[0].mxu0
    %1745 = vdwg.mxu0
    %v1746 = vpack.c.bf16 %v1741, %v1693
    %v1747 = vld [vmem:[#allocation12] sm:$0xf]
    %1749 = vrot.lane.b32.xlu0 %v1516, 120
    %v1750 = vpop.permute.xlu0 %1749
    %1751 = vrot.lane.b32.xlu0 %v1518, 88
    %v1752 = vpop.permute.xlu0 %1751
    %v1754 = vsel %vm270, %v1750, 0
    %v1757 = vsel %vm270, %v1752, 0
    %1759 = vmatprep.subr.bf16.mxu0 0
    %1760 = vmatpush1.bf16.xpose.msra.mxu0 %v1757
    %1761 = vmatprep.subr.bf16.mxu0 0
    %1762 = vmatpush1.bf16.xpose.msra.mxu0 0
    %1763 = vmatprep.subr.bf16.mxu0 0
    %1764 = vmatpush1.bf16.xpose.msra.mxu0 0
    %1765 = vmatprep.subr.bf16.mxu0 0
    %1766 = vmatpush1.bf16.xpose.msra.mxu0 0
    %1767 = vmatprep.subr.bf16.mxu0 0
    %1768 = vmatpush1.bf16.xpose.msra.mxu0 0
    %1769 = vmatprep.subr.bf16.mxu0 0
    %1770 = vmatpush1.bf16.xpose.msra.mxu0 0
    %1771 = vmatprep.subr.bf16.mxu0 0
    %1772 = vmatpush1.bf16.xpose.msra.mxu0 0
    %1773 = vmatprep.subr.bf16.mxu0 0
    %1774 = vmatpush1.bf16.xpose.msra.mxu0 0
    %1775 = vmatprep.subr.bf16.mxu0 0
    %1776 = vmatpush1.bf16.xpose.msra.mxu0 0
    %1777 = vmatprep.subr.bf16.mxu0 0
    %1778 = vmatpush1.bf16.xpose.msra.mxu0 0
    %1779 = vmatprep.subr.bf16.mxu0 0
    %1780 = vmatpush1.bf16.xpose.msra.mxu0 0
    %1781 = vmatprep.subr.bf16.mxu0 0
    %1782 = vmatpush1.bf16.xpose.msra.mxu0 0
    %1783 = vmatprep.subr.bf16.mxu0 0
    %1784 = vmatpush1.bf16.xpose.msra.mxu0 0
    %1785 = vmatprep.subr.bf16.mxu0 0
    %1786 = vmatpush1.bf16.xpose.msra.mxu0 0
    %1787 = vmatprep.subr.bf16.mxu0 0
    %1788 = vmatpush1.bf16.xpose.msra.mxu0 0
    %1789 = vmatprep.subr.bf16.mxu0 0
    %1790 = vmatpush1.bf16.xpose.msra.mxu0 0
    %1791 = vmatprep.mubr.bf16.mxu0 0
    %1792 = vmatmul.mubr.bf16.gmra.mrb[0].mxu0 %v1754
    %v1793 = vpop.f32.mrb[0].mxu0
    %v1794 = vadd.f32 %v1523, %v1793
    %v1795 = vpop.f32.mrb[0].mxu0
    %v1796 = vpop.f32.mrb[0].mxu0
    %v1797 = vpop.f32.mrb[0].mxu0
    %1798 = vdwg.mxu0
    %1800 = vrot.lane.b32.xlu0 %v1517, 120
    %v1801 = vpop.permute.xlu0 %1800
    %1802 = vrot.lane.b32.xlu0 %v1519, 88
    %v1803 = vpop.permute.xlu0 %1802
    %v1805 = vsel %vm270, %v1801, 0
    %v1808 = vsel %vm270, %v1803, 0
    %1810 = vmatprep.subr.bf16.mxu0 0
    %1811 = vmatpush1.bf16.xpose.msra.mxu0 %v1808
    %1812 = vmatprep.subr.bf16.mxu0 0
    %1813 = vmatpush1.bf16.xpose.msra.mxu0 0
    %1814 = vmatprep.subr.bf16.mxu0 0
    %1815 = vmatpush1.bf16.xpose.msra.mxu0 0
    %1816 = vmatprep.subr.bf16.mxu0 0
    %1817 = vmatpush1.bf16.xpose.msra.mxu0 0
    %1818 = vmatprep.subr.bf16.mxu0 0
    %1819 = vmatpush1.bf16.xpose.msra.mxu0 0
    %1820 = vmatprep.subr.bf16.mxu0 0
    %1821 = vmatpush1.bf16.xpose.msra.mxu0 0
    %1822 = vmatprep.subr.bf16.mxu0 0
    %1823 = vmatpush1.bf16.xpose.msra.mxu0 0
    %1824 = vmatprep.subr.bf16.mxu0 0
    %1825 = vmatpush1.bf16.xpose.msra.mxu0 0
    %1826 = vmatprep.subr.bf16.mxu0 0
    %1827 = vmatpush1.bf16.xpose.msra.mxu0 0
    %1828 = vmatprep.subr.bf16.mxu0 0
    %1829 = vmatpush1.bf16.xpose.msra.mxu0 0
    %1830 = vmatprep.subr.bf16.mxu0 0
    %1831 = vmatpush1.bf16.xpose.msra.mxu0 0
    %1832 = vmatprep.subr.bf16.mxu0 0
    %1833 = vmatpush1.bf16.xpose.msra.mxu0 0
    %1834 = vmatprep.subr.bf16.mxu0 0
    %1835 = vmatpush1.bf16.xpose.msra.mxu0 0
    %1836 = vmatprep.subr.bf16.mxu0 0
    %1837 = vmatpush1.bf16.xpose.msra.mxu0 0
    %1838 = vmatprep.subr.bf16.mxu0 0
    %1839 = vmatpush1.bf16.xpose.msra.mxu0 0
    %1840 = vmatprep.subr.bf16.mxu0 0
    %1841 = vmatpush1.bf16.xpose.msra.mxu0 0
    %1842 = vmatprep.mubr.bf16.mxu0 0
    %1843 = vmatmul.mubr.bf16.gmra.mrb[0].mxu0 %v1805
    %v1844 = vpop.f32.mrb[0].mxu0
    %v1845 = vadd.f32 %v1527, %v1844
    %v1846 = vpop.f32.mrb[0].mxu0
    %v1847 = vpop.f32.mrb[0].mxu0
    %v1848 = vpop.f32.mrb[0].mxu0
    %1849 = vdwg.mxu0
    %v1850 = vsel %vm270, %v1794, -inf
    %1851 = vmax.xlane.f32.xlu0 %v1850
    %v1852 = vpop.xlane.xlu0 %1851
    %v1853 = vsel %vm270, %v1845, -inf
    %1854 = vmax.xlane.f32.xlu0 %v1853
    %v1855 = vpop.xlane.xlu0 %1854
    %v1856 = vsub.f32 %v1794, %v1852
    %v1857 = vsub.f32 %v1845, %v1855
    %v1858 = vmul.f32 %v1856, 1.442695
    %v1859 = vpow.pop %v1858
    %v1860 = vmul.f32 %v1857, 1.442695
    %v1861 = vpow.pop %v1860
    %v1862 = vsel %vm270, %v1859, 0.0
    %1863 = vadd.xlane.f32.xlu0 %v1862
    %v1864 = vpop.xlane.xlu0 %1863
    %v1865 = vsel %vm270, %v1861, 0.0
    %1866 = vadd.xlane.f32.xlu0 %v1865
    %v1867 = vpop.xlane.xlu0 %1866
    %v1868 = vrcp.pop %v1864
    %v1869 = vrcp.pop %v1867
    %v1870 = vmul.f32 %v1859, %v1868
    %v1871 = vmul.f32 %v1861, %v1869
    %v1872 = vpack.c.bf16 %v1870, %v1870
    %v1873 = vpack.c.bf16 %v1871, %v1871
    %1874 = vrot.lane.b32.xlu0 %v1518, 56
    %v1875 = vpop.permute.xlu0 %1874
    %v1877 = vsel %vm270, %v1872, 0
    %v1880 = vsel %vm393, %v1875, 0
    %1882 = vmatprep.subr.bf16.mxu0 0
    %1883 = vmatpush1.bf16.msra.mxu0 %v1880
    %1884 = vmatprep.subr.bf16.mxu0 0
    %1885 = vmatpush1.bf16.msra.mxu0 0
    %1886 = vmatprep.subr.bf16.mxu0 0
    %1887 = vmatpush1.bf16.msra.mxu0 0
    %1888 = vmatprep.subr.bf16.mxu0 0
    %1889 = vmatpush1.bf16.msra.mxu0 0
    %1890 = vmatprep.subr.bf16.mxu0 0
    %1891 = vmatpush1.bf16.msra.mxu0 0
    %1892 = vmatprep.subr.bf16.mxu0 0
    %1893 = vmatpush1.bf16.msra.mxu0 0
    %1894 = vmatprep.subr.bf16.mxu0 0
    %1895 = vmatpush1.bf16.msra.mxu0 0
    %1896 = vmatprep.subr.bf16.mxu0 0
    %1897 = vmatpush1.bf16.msra.mxu0 0
    %1898 = vmatprep.subr.bf16.mxu0 0
    %1899 = vmatpush1.bf16.msra.mxu0 0
    %1900 = vmatprep.subr.bf16.mxu0 0
    %1901 = vmatpush1.bf16.msra.mxu0 0
    %1902 = vmatprep.subr.bf16.mxu0 0
    %1903 = vmatpush1.bf16.msra.mxu0 0
    %1904 = vmatprep.subr.bf16.mxu0 0
    %1905 = vmatpush1.bf16.msra.mxu0 0
    %1906 = vmatprep.subr.bf16.mxu0 0
    %1907 = vmatpush1.bf16.msra.mxu0 0
    %1908 = vmatprep.subr.bf16.mxu0 0
    %1909 = vmatpush1.bf16.msra.mxu0 0
    %1910 = vmatprep.subr.bf16.mxu0 0
    %1911 = vmatpush1.bf16.msra.mxu0 0
    %1912 = vmatprep.subr.bf16.mxu0 0
    %1913 = vmatpush1.bf16.msra.mxu0 0
    %1914 = vmatprep.mubr.bf16.mxu0 0
    %1915 = vmatmul.mubr.bf16.gmra.mrb[0].mxu0 %v1877
    %v1916 = vpop.f32.mrb[0].mxu0
    %v1917 = vadd.f32 0.0, %v1916
    %v1918 = vpop.f32.mrb[0].mxu0
    %v1919 = vpop.f32.mrb[0].mxu0
    %v1920 = vpop.f32.mrb[0].mxu0
    %1921 = vdwg.mxu0
    %1922 = vrot.lane.b32.xlu0 %v1519, 56
    %v1923 = vpop.permute.xlu0 %1922
    %v1925 = vsel %vm270, %v1873, 0
    %v1928 = vsel %vm393, %v1923, 0
    %1930 = vmatprep.subr.bf16.mxu0 0
    %1931 = vmatpush1.bf16.msra.mxu0 %v1928
    %1932 = vmatprep.subr.bf16.mxu0 0
    %1933 = vmatpush1.bf16.msra.mxu0 0
    %1934 = vmatprep.subr.bf16.mxu0 0
    %1935 = vmatpush1.bf16.msra.mxu0 0
    %1936 = vmatprep.subr.bf16.mxu0 0
    %1937 = vmatpush1.bf16.msra.mxu0 0
    %1938 = vmatprep.subr.bf16.mxu0 0
    %1939 = vmatpush1.bf16.msra.mxu0 0
    %1940 = vmatprep.subr.bf16.mxu0 0
    %1941 = vmatpush1.bf16.msra.mxu0 0
    %1942 = vmatprep.subr.bf16.mxu0 0
    %1943 = vmatpush1.bf16.msra.mxu0 0
    %1944 = vmatprep.subr.bf16.mxu0 0
    %1945 = vmatpush1.bf16.msra.mxu0 0
    %1946 = vmatprep.subr.bf16.mxu0 0
    %1947 = vmatpush1.bf16.msra.mxu0 0
    %1948 = vmatprep.subr.bf16.mxu0 0
    %1949 = vmatpush1.bf16.msra.mxu0 0
    %1950 = vmatprep.subr.bf16.mxu0 0
    %1951 = vmatpush1.bf16.msra.mxu0 0
    %1952 = vmatprep.subr.bf16.mxu0 0
    %1953 = vmatpush1.bf16.msra.mxu0 0
    %1954 = vmatprep.subr.bf16.mxu0 0
    %1955 = vmatpush1.bf16.msra.mxu0 0
    %1956 = vmatprep.subr.bf16.mxu0 0
    %1957 = vmatpush1.bf16.msra.mxu0 0
    %1958 = vmatprep.subr.bf16.mxu0 0
    %1959 = vmatpush1.bf16.msra.mxu0 0
    %1960 = vmatprep.subr.bf16.mxu0 0
    %1961 = vmatpush1.bf16.msra.mxu0 0
    %1962 = vmatprep.mubr.bf16.mxu0 0
    %1963 = vmatmul.mubr.bf16.gmra.mrb[0].mxu0 %v1925
    %v1964 = vpop.f32.mrb[0].mxu0
    %v1965 = vadd.f32 0.0, %v1964
    %v1966 = vpop.f32.mrb[0].mxu0
    %v1967 = vpop.f32.mrb[0].mxu0
    %v1968 = vpop.f32.mrb[0].mxu0
    %1969 = vdwg.mxu0
    %v1970 = vpack.c.bf16 %v1965, %v1917
    %s1971 = scalar_lea.vmem [#allocation12], 4
    %v1972 = vld [vmem:[%s1971] sm:$0xf]
    %v1974 = vsel %vm270, %v1970, 0
    %v1977 = vsel %vm393, %v1972, 0
    %1979 = vmatprep.subr.bf16.mxu0 0
    %1980 = vmatpush1.bf16.msra.mxu0 %v1977
    %1981 = vmatprep.subr.bf16.mxu0 0
    %1982 = vmatpush1.bf16.msra.mxu0 0
    %1983 = vmatprep.subr.bf16.mxu0 0
    %1984 = vmatpush1.bf16.msra.mxu0 0
    %1985 = vmatprep.subr.bf16.mxu0 0
    %1986 = vmatpush1.bf16.msra.mxu0 0
    %1987 = vmatprep.subr.bf16.mxu0 0
    %1988 = vmatpush1.bf16.msra.mxu0 0
    %1989 = vmatprep.subr.bf16.mxu0 0
    %1990 = vmatpush1.bf16.msra.mxu0 0
    %1991 = vmatprep.subr.bf16.mxu0 0
    %1992 = vmatpush1.bf16.msra.mxu0 0
    %1993 = vmatprep.subr.bf16.mxu0 0
    %1994 = vmatpush1.bf16.msra.mxu0 0
    %1995 = vmatprep.subr.bf16.mxu0 0
    %1996 = vmatpush1.bf16.msra.mxu0 0
    %1997 = vmatprep.subr.bf16.mxu0 0
    %1998 = vmatpush1.bf16.msra.mxu0 0
    %1999 = vmatprep.subr.bf16.mxu0 0
    %2000 = vmatpush1.bf16.msra.mxu0 0
    %2001 = vmatprep.subr.bf16.mxu0 0
    %2002 = vmatpush1.bf16.msra.mxu0 0
    %2003 = vmatprep.subr.bf16.mxu0 0
    %2004 = vmatpush1.bf16.msra.mxu0 0
    %2005 = vmatprep.subr.bf16.mxu0 0
    %2006 = vmatpush1.bf16.msra.mxu0 0
    %2007 = vmatprep.subr.bf16.mxu0 0
    %2008 = vmatpush1.bf16.msra.mxu0 0
    %2009 = vmatprep.subr.bf16.mxu0 0
    %2010 = vmatpush1.bf16.msra.mxu0 0
    %2011 = vmatprep.mubr.bf16.mxu0 0
    %2012 = vmatmul.mubr.bf16.gmra.mrb[0].mxu0 %v1974
    %v2013 = vpop.f32.mrb[0].mxu0
    %v2014 = vadd.f32 0.0, %v2013
    %v2015 = vpop.f32.mrb[0].mxu0
    %v2016 = vpop.f32.mrb[0].mxu0
    %v2017 = vadd.f32 0.0, %v2016
    %v2018 = vpop.f32.mrb[0].mxu0
    %2019 = vdwg.mxu0
    %v2021 = vsel %vm270, %v1746, 0
    %v2024 = vsel %vm393, %v1747, 0
    %2026 = vmatprep.subr.bf16.mxu0 0
    %2027 = vmatpush1.bf16.msra.mxu0 %v2024
    %2028 = vmatprep.subr.bf16.mxu0 0
    %2029 = vmatpush1.bf16.msra.mxu0 0
    %2030 = vmatprep.subr.bf16.mxu0 0
    %2031 = vmatpush1.bf16.msra.mxu0 0
    %2032 = vmatprep.subr.bf16.mxu0 0
    %2033 = vmatpush1.bf16.msra.mxu0 0
    %2034 = vmatprep.subr.bf16.mxu0 0
    %2035 = vmatpush1.bf16.msra.mxu0 0
    %2036 = vmatprep.subr.bf16.mxu0 0
    %2037 = vmatpush1.bf16.msra.mxu0 0
    %2038 = vmatprep.subr.bf16.mxu0 0
    %2039 = vmatpush1.bf16.msra.mxu0 0
    %2040 = vmatprep.subr.bf16.mxu0 0
    %2041 = vmatpush1.bf16.msra.mxu0 0
    %2042 = vmatprep.subr.bf16.mxu0 0
    %2043 = vmatpush1.bf16.msra.mxu0 0
    %2044 = vmatprep.subr.bf16.mxu0 0
    %2045 = vmatpush1.bf16.msra.mxu0 0
    %2046 = vmatprep.subr.bf16.mxu0 0
    %2047 = vmatpush1.bf16.msra.mxu0 0
    %2048 = vmatprep.subr.bf16.mxu0 0
    %2049 = vmatpush1.bf16.msra.mxu0 0
    %2050 = vmatprep.subr.bf16.mxu0 0
    %2051 = vmatpush1.bf16.msra.mxu0 0
    %2052 = vmatprep.subr.bf16.mxu0 0
    %2053 = vmatpush1.bf16.msra.mxu0 0
    %2054 = vmatprep.subr.bf16.mxu0 0
    %2055 = vmatpush1.bf16.msra.mxu0 0
    %2056 = vmatprep.subr.bf16.mxu0 0
    %2057 = vmatpush1.bf16.msra.mxu0 0
    %2058 = vmatprep.mubr.bf16.mxu0 0
    %2059 = vmatmul.mubr.bf16.gmra.mrb[0].mxu0 %v2021
    %v2060 = vpop.f32.mrb[0].mxu0
    %v2061 = vadd.f32 %v2014, %v2060
    %v2062 = vpop.f32.mrb[0].mxu0
    %v2063 = vpop.f32.mrb[0].mxu0
    %v2064 = vadd.f32 %v2017, %v2063
    %v2065 = vpop.f32.mrb[0].mxu0
    %2066 = vdwg.mxu0
    %2067 = vrot.lane.b32.xlu0 %v1516, 112
    %v2068 = vpop.permute.xlu0 %2067
    %2069 = vrot.lane.b32.xlu0 %v1518, 80
    %v2070 = vpop.permute.xlu0 %2069
    %v2072 = vsel %vm270, %v2068, 0
    %v2075 = vsel %vm270, %v2070, 0
    %2077 = vmatprep.subr.bf16.mxu0 0
    %2078 = vmatpush1.bf16.xpose.msra.mxu0 %v2075
    %2079 = vmatprep.subr.bf16.mxu0 0
    %2080 = vmatpush1.bf16.xpose.msra.mxu0 0
    %2081 = vmatprep.subr.bf16.mxu0 0
    %2082 = vmatpush1.bf16.xpose.msra.mxu0 0
    %2083 = vmatprep.subr.bf16.mxu0 0
    %2084 = vmatpush1.bf16.xpose.msra.mxu0 0
    %2085 = vmatprep.subr.bf16.mxu0 0
    %2086 = vmatpush1.bf16.xpose.msra.mxu0 0
    %2087 = vmatprep.subr.bf16.mxu0 0
    %2088 = vmatpush1.bf16.xpose.msra.mxu0 0
    %2089 = vmatprep.subr.bf16.mxu0 0
    %2090 = vmatpush1.bf16.xpose.msra.mxu0 0
    %2091 = vmatprep.subr.bf16.mxu0 0
    %2092 = vmatpush1.bf16.xpose.msra.mxu0 0
    %2093 = vmatprep.subr.bf16.mxu0 0
    %2094 = vmatpush1.bf16.xpose.msra.mxu0 0
    %2095 = vmatprep.subr.bf16.mxu0 0
    %2096 = vmatpush1.bf16.xpose.msra.mxu0 0
    %2097 = vmatprep.subr.bf16.mxu0 0
    %2098 = vmatpush1.bf16.xpose.msra.mxu0 0
    %2099 = vmatprep.subr.bf16.mxu0 0
    %2100 = vmatpush1.bf16.xpose.msra.mxu0 0
    %2101 = vmatprep.subr.bf16.mxu0 0
    %2102 = vmatpush1.bf16.xpose.msra.mxu0 0
    %2103 = vmatprep.subr.bf16.mxu0 0
    %2104 = vmatpush1.bf16.xpose.msra.mxu0 0
    %2105 = vmatprep.subr.bf16.mxu0 0
    %2106 = vmatpush1.bf16.xpose.msra.mxu0 0
    %2107 = vmatprep.subr.bf16.mxu0 0
    %2108 = vmatpush1.bf16.xpose.msra.mxu0 0
    %2109 = vmatprep.mubr.bf16.mxu0 0
    %2110 = vmatmul.mubr.bf16.gmra.mrb[0].mxu0 %v2072
    %v2111 = vpop.f32.mrb[0].mxu0
    %v2112 = vadd.f32 %v1523, %v2111
    %v2113 = vpop.f32.mrb[0].mxu0
    %v2114 = vpop.f32.mrb[0].mxu0
    %v2115 = vpop.f32.mrb[0].mxu0
    %2116 = vdwg.mxu0
    %2117 = vrot.lane.b32.xlu0 %v1517, 112
    %v2118 = vpop.permute.xlu0 %2117
    %2119 = vrot.lane.b32.xlu0 %v1519, 80
    %v2120 = vpop.permute.xlu0 %2119
    %v2122 = vsel %vm270, %v2118, 0
    %v2125 = vsel %vm270, %v2120, 0
    %2127 = vmatprep.subr.bf16.mxu0 0
    %2128 = vmatpush1.bf16.xpose.msra.mxu0 %v2125
    %2129 = vmatprep.subr.bf16.mxu0 0
    %2130 = vmatpush1.bf16.xpose.msra.mxu0 0
    %2131 = vmatprep.subr.bf16.mxu0 0
    %2132 = vmatpush1.bf16.xpose.msra.mxu0 0
    %2133 = vmatprep.subr.bf16.mxu0 0
    %2134 = vmatpush1.bf16.xpose.msra.mxu0 0
    %2135 = vmatprep.subr.bf16.mxu0 0
    %2136 = vmatpush1.bf16.xpose.msra.mxu0 0
    %2137 = vmatprep.subr.bf16.mxu0 0
    %2138 = vmatpush1.bf16.xpose.msra.mxu0 0
    %2139 = vmatprep.subr.bf16.mxu0 0
    %2140 = vmatpush1.bf16.xpose.msra.mxu0 0
    %2141 = vmatprep.subr.bf16.mxu0 0
    %2142 = vmatpush1.bf16.xpose.msra.mxu0 0
    %2143 = vmatprep.subr.bf16.mxu0 0
    %2144 = vmatpush1.bf16.xpose.msra.mxu0 0
    %2145 = vmatprep.subr.bf16.mxu0 0
    %2146 = vmatpush1.bf16.xpose.msra.mxu0 0
    %2147 = vmatprep.subr.bf16.mxu0 0
    %2148 = vmatpush1.bf16.xpose.msra.mxu0 0
    %2149 = vmatprep.subr.bf16.mxu0 0
    %2150 = vmatpush1.bf16.xpose.msra.mxu0 0
    %2151 = vmatprep.subr.bf16.mxu0 0
    %2152 = vmatpush1.bf16.xpose.msra.mxu0 0
    %2153 = vmatprep.subr.bf16.mxu0 0
    %2154 = vmatpush1.bf16.xpose.msra.mxu0 0
    %2155 = vmatprep.subr.bf16.mxu0 0
    %2156 = vmatpush1.bf16.xpose.msra.mxu0 0
    %2157 = vmatprep.subr.bf16.mxu0 0
    %2158 = vmatpush1.bf16.xpose.msra.mxu0 0
    %2159 = vmatprep.mubr.bf16.mxu0 0
    %2160 = vmatmul.mubr.bf16.gmra.mrb[0].mxu0 %v2122
    %v2161 = vpop.f32.mrb[0].mxu0
    %v2162 = vadd.f32 %v1527, %v2161
    %v2163 = vpop.f32.mrb[0].mxu0
    %v2164 = vpop.f32.mrb[0].mxu0
    %v2165 = vpop.f32.mrb[0].mxu0
    %2166 = vdwg.mxu0
    %v2167 = vsel %vm270, %v2112, -inf
    %2168 = vmax.xlane.f32.xlu0 %v2167
    %v2169 = vpop.xlane.xlu0 %2168
    %v2170 = vsel %vm270, %v2162, -inf
    %2171 = vmax.xlane.f32.xlu0 %v2170
    %v2172 = vpop.xlane.xlu0 %2171
    %v2173 = vsub.f32 %v2112, %v2169
    %v2174 = vsub.f32 %v2162, %v2172
    %v2175 = vmul.f32 %v2173, 1.442695
    %v2176 = vpow.pop %v2175
    %v2177 = vmul.f32 %v2174, 1.442695
    %v2178 = vpow.pop %v2177
    %v2179 = vsel %vm270, %v2176, 0.0
    %2180 = vadd.xlane.f32.xlu0 %v2179
    %v2181 = vpop.xlane.xlu0 %2180
    %v2182 = vsel %vm270, %v2178, 0.0
    %2183 = vadd.xlane.f32.xlu0 %v2182
    %v2184 = vpop.xlane.xlu0 %2183
    %v2185 = vrcp.pop %v2181
    %v2186 = vrcp.pop %v2184
    %v2187 = vmul.f32 %v2176, %v2185
    %v2188 = vmul.f32 %v2178, %v2186
    %v2189 = vpack.c.bf16 %v2187, %v2187
    %v2190 = vpack.c.bf16 %v2188, %v2188
    %2191 = vrot.lane.b32.xlu0 %v1518, 48
    %v2192 = vpop.permute.xlu0 %2191
    %v2194 = vsel %vm270, %v2189, 0
    %v2197 = vsel %vm393, %v2192, 0
    %2199 = vmatprep.subr.bf16.mxu0 0
    %2200 = vmatpush1.bf16.msra.mxu0 %v2197
    %2201 = vmatprep.subr.bf16.mxu0 0
    %2202 = vmatpush1.bf16.msra.mxu0 0
    %2203 = vmatprep.subr.bf16.mxu0 0
    %2204 = vmatpush1.bf16.msra.mxu0 0
    %2205 = vmatprep.subr.bf16.mxu0 0
    %2206 = vmatpush1.bf16.msra.mxu0 0
    %2207 = vmatprep.subr.bf16.mxu0 0
    %2208 = vmatpush1.bf16.msra.mxu0 0
    %2209 = vmatprep.subr.bf16.mxu0 0
    %2210 = vmatpush1.bf16.msra.mxu0 0
    %2211 = vmatprep.subr.bf16.mxu0 0
    %2212 = vmatpush1.bf16.msra.mxu0 0
    %2213 = vmatprep.subr.bf16.mxu0 0
    %2214 = vmatpush1.bf16.msra.mxu0 0
    %2215 = vmatprep.subr.bf16.mxu0 0
    %2216 = vmatpush1.bf16.msra.mxu0 0
    %2217 = vmatprep.subr.bf16.mxu0 0
    %2218 = vmatpush1.bf16.msra.mxu0 0
    %2219 = vmatprep.subr.bf16.mxu0 0
    %2220 = vmatpush1.bf16.msra.mxu0 0
    %2221 = vmatprep.subr.bf16.mxu0 0
    %2222 = vmatpush1.bf16.msra.mxu0 0
    %2223 = vmatprep.subr.bf16.mxu0 0
    %2224 = vmatpush1.bf16.msra.mxu0 0
    %2225 = vmatprep.subr.bf16.mxu0 0
    %2226 = vmatpush1.bf16.msra.mxu0 0
    %2227 = vmatprep.subr.bf16.mxu0 0
    %2228 = vmatpush1.bf16.msra.mxu0 0
    %2229 = vmatprep.subr.bf16.mxu0 0
    %2230 = vmatpush1.bf16.msra.mxu0 0
    %2231 = vmatprep.mubr.bf16.mxu0 0
    %2232 = vmatmul.mubr.bf16.gmra.mrb[0].mxu0 %v2194
    %v2233 = vpop.f32.mrb[0].mxu0
    %v2234 = vadd.f32 0.0, %v2233
    %v2235 = vpop.f32.mrb[0].mxu0
    %v2236 = vpop.f32.mrb[0].mxu0
    %v2237 = vpop.f32.mrb[0].mxu0
    %2238 = vdwg.mxu0
    %2239 = vrot.lane.b32.xlu0 %v1519, 48
    %v2240 = vpop.permute.xlu0 %2239
    %v2242 = vsel %vm270, %v2190, 0
    %v2245 = vsel %vm393, %v2240, 0
    %2247 = vmatprep.subr.bf16.mxu0 0
    %2248 = vmatpush1.bf16.msra.mxu0 %v2245
    %2249 = vmatprep.subr.bf16.mxu0 0
    %2250 = vmatpush1.bf16.msra.mxu0 0
    %2251 = vmatprep.subr.bf16.mxu0 0
    %2252 = vmatpush1.bf16.msra.mxu0 0
    %2253 = vmatprep.subr.bf16.mxu0 0
    %2254 = vmatpush1.bf16.msra.mxu0 0
    %2255 = vmatprep.subr.bf16.mxu0 0
    %2256 = vmatpush1.bf16.msra.mxu0 0
    %2257 = vmatprep.subr.bf16.mxu0 0
    %2258 = vmatpush1.bf16.msra.mxu0 0
    %2259 = vmatprep.subr.bf16.mxu0 0
    %2260 = vmatpush1.bf16.msra.mxu0 0
    %2261 = vmatprep.subr.bf16.mxu0 0
    %2262 = vmatpush1.bf16.msra.mxu0 0
    %2263 = vmatprep.subr.bf16.mxu0 0
    %2264 = vmatpush1.bf16.msra.mxu0 0
    %2265 = vmatprep.subr.bf16.mxu0 0
    %2266 = vmatpush1.bf16.msra.mxu0 0
    %2267 = vmatprep.subr.bf16.mxu0 0
    %2268 = vmatpush1.bf16.msra.mxu0 0
    %2269 = vmatprep.subr.bf16.mxu0 0
    %2270 = vmatpush1.bf16.msra.mxu0 0
    %2271 = vmatprep.subr.bf16.mxu0 0
    %2272 = vmatpush1.bf16.msra.mxu0 0
    %2273 = vmatprep.subr.bf16.mxu0 0
    %2274 = vmatpush1.bf16.msra.mxu0 0
    %2275 = vmatprep.subr.bf16.mxu0 0
    %2276 = vmatpush1.bf16.msra.mxu0 0
    %2277 = vmatprep.subr.bf16.mxu0 0
    %2278 = vmatpush1.bf16.msra.mxu0 0
    %2279 = vmatprep.mubr.bf16.mxu0 0
    %2280 = vmatmul.mubr.bf16.gmra.mrb[0].mxu0 %v2242
    %v2281 = vpop.f32.mrb[0].mxu0
    %v2282 = vadd.f32 0.0, %v2281
    %v2283 = vpop.f32.mrb[0].mxu0
    %v2284 = vpop.f32.mrb[0].mxu0
    %v2285 = vpop.f32.mrb[0].mxu0
    %2286 = vdwg.mxu0
    %v2287 = vpack.c.bf16 %v2282, %v2234
    %s2288 = scalar_lea.vmem [#allocation12], 8
    %v2289 = vld [vmem:[%s2288] sm:$0xf]
    %v2291 = vsel %vm270, %v2287, 0
    %v2294 = vsel %vm393, %v2289, 0
    %2296 = vmatprep.subr.bf16.mxu0 0
    %2297 = vmatpush1.bf16.msra.mxu0 %v2294
    %2298 = vmatprep.subr.bf16.mxu0 0
    %2299 = vmatpush1.bf16.msra.mxu0 0
    %2300 = vmatprep.subr.bf16.mxu0 0
    %2301 = vmatpush1.bf16.msra.mxu0 0
    %2302 = vmatprep.subr.bf16.mxu0 0
    %2303 = vmatpush1.bf16.msra.mxu0 0
    %2304 = vmatprep.subr.bf16.mxu0 0
    %2305 = vmatpush1.bf16.msra.mxu0 0
    %2306 = vmatprep.subr.bf16.mxu0 0
    %2307 = vmatpush1.bf16.msra.mxu0 0
    %2308 = vmatprep.subr.bf16.mxu0 0
    %2309 = vmatpush1.bf16.msra.mxu0 0
    %2310 = vmatprep.subr.bf16.mxu0 0
    %2311 = vmatpush1.bf16.msra.mxu0 0
    %2312 = vmatprep.subr.bf16.mxu0 0
    %2313 = vmatpush1.bf16.msra.mxu0 0
    %2314 = vmatprep.subr.bf16.mxu0 0
    %2315 = vmatpush1.bf16.msra.mxu0 0
    %2316 = vmatprep.subr.bf16.mxu0 0
    %2317 = vmatpush1.bf16.msra.mxu0 0
    %2318 = vmatprep.subr.bf16.mxu0 0
    %2319 = vmatpush1.bf16.msra.mxu0 0
    %2320 = vmatprep.subr.bf16.mxu0 0
    %2321 = vmatpush1.bf16.msra.mxu0 0
    %2322 = vmatprep.subr.bf16.mxu0 0
    %2323 = vmatpush1.bf16.msra.mxu0 0
    %2324 = vmatprep.subr.bf16.mxu0 0
    %2325 = vmatpush1.bf16.msra.mxu0 0
    %2326 = vmatprep.subr.bf16.mxu0 0
    %2327 = vmatpush1.bf16.msra.mxu0 0
    %2328 = vmatprep.mubr.bf16.mxu0 0
    %2329 = vmatmul.mubr.bf16.gmra.mrb[0].mxu0 %v2291
    %v2330 = vpop.f32.mrb[0].mxu0
    %v2331 = vadd.f32 0.0, %v2330
    %v2332 = vpop.f32.mrb[0].mxu0
    %v2333 = vpop.f32.mrb[0].mxu0
    %v2334 = vadd.f32 0.0, %v2333
    %v2335 = vpop.f32.mrb[0].mxu0
    %2336 = vdwg.mxu0
    %v2337 = vadd.f32 %v2061, %v2331
    %v2338 = vadd.f32 %v2064, %v2334
    %2339 = vrot.lane.b32.xlu0 %v1516, 104
    %v2340 = vpop.permute.xlu0 %2339
    %2341 = vrot.lane.b32.xlu0 %v1518, 72
    %v2342 = vpop.permute.xlu0 %2341
    %v2344 = vsel %vm270, %v2340, 0
    %v2347 = vsel %vm270, %v2342, 0
    %2349 = vmatprep.subr.bf16.mxu0 0
    %2350 = vmatpush1.bf16.xpose.msra.mxu0 %v2347
    %2351 = vmatprep.subr.bf16.mxu0 0
    %2352 = vmatpush1.bf16.xpose.msra.mxu0 0
    %2353 = vmatprep.subr.bf16.mxu0 0
    %2354 = vmatpush1.bf16.xpose.msra.mxu0 0
    %2355 = vmatprep.subr.bf16.mxu0 0
    %2356 = vmatpush1.bf16.xpose.msra.mxu0 0
    %2357 = vmatprep.subr.bf16.mxu0 0
    %2358 = vmatpush1.bf16.xpose.msra.mxu0 0
    %2359 = vmatprep.subr.bf16.mxu0 0
    %2360 = vmatpush1.bf16.xpose.msra.mxu0 0
    %2361 = vmatprep.subr.bf16.mxu0 0
    %2362 = vmatpush1.bf16.xpose.msra.mxu0 0
    %2363 = vmatprep.subr.bf16.mxu0 0
    %2364 = vmatpush1.bf16.xpose.msra.mxu0 0
    %2365 = vmatprep.subr.bf16.mxu0 0
    %2366 = vmatpush1.bf16.xpose.msra.mxu0 0
    %2367 = vmatprep.subr.bf16.mxu0 0
    %2368 = vmatpush1.bf16.xpose.msra.mxu0 0
    %2369 = vmatprep.subr.bf16.mxu0 0
    %2370 = vmatpush1.bf16.xpose.msra.mxu0 0
    %2371 = vmatprep.subr.bf16.mxu0 0
    %2372 = vmatpush1.bf16.xpose.msra.mxu0 0
    %2373 = vmatprep.subr.bf16.mxu0 0
    %2374 = vmatpush1.bf16.xpose.msra.mxu0 0
    %2375 = vmatprep.subr.bf16.mxu0 0
    %2376 = vmatpush1.bf16.xpose.msra.mxu0 0
    %2377 = vmatprep.subr.bf16.mxu0 0
    %2378 = vmatpush1.bf16.xpose.msra.mxu0 0
    %2379 = vmatprep.subr.bf16.mxu0 0
    %2380 = vmatpush1.bf16.xpose.msra.mxu0 0
    %2381 = vmatprep.mubr.bf16.mxu0 0
    %2382 = vmatmul.mubr.bf16.gmra.mrb[0].mxu0 %v2344
    %v2383 = vpop.f32.mrb[0].mxu0
    %v2384 = vadd.f32 %v1523, %v2383
    %v2385 = vpop.f32.mrb[0].mxu0
    %v2386 = vpop.f32.mrb[0].mxu0
    %v2387 = vpop.f32.mrb[0].mxu0
    %2388 = vdwg.mxu0
    %2389 = vrot.lane.b32.xlu0 %v1517, 104
    %v2390 = vpop.permute.xlu0 %2389
    %2391 = vrot.lane.b32.xlu0 %v1519, 72
    %v2392 = vpop.permute.xlu0 %2391
    %v2394 = vsel %vm270, %v2390, 0
    %v2397 = vsel %vm270, %v2392, 0
    %2399 = vmatprep.subr.bf16.mxu0 0
    %2400 = vmatpush1.bf16.xpose.msra.mxu0 %v2397
    %2401 = vmatprep.subr.bf16.mxu0 0
    %2402 = vmatpush1.bf16.xpose.msra.mxu0 0
    %2403 = vmatprep.subr.bf16.mxu0 0
    %2404 = vmatpush1.bf16.xpose.msra.mxu0 0
    %2405 = vmatprep.subr.bf16.mxu0 0
    %2406 = vmatpush1.bf16.xpose.msra.mxu0 0
    %2407 = vmatprep.subr.bf16.mxu0 0
    %2408 = vmatpush1.bf16.xpose.msra.mxu0 0
    %2409 = vmatprep.subr.bf16.mxu0 0
    %2410 = vmatpush1.bf16.xpose.msra.mxu0 0
    %2411 = vmatprep.subr.bf16.mxu0 0
    %2412 = vmatpush1.bf16.xpose.msra.mxu0 0
    %2413 = vmatprep.subr.bf16.mxu0 0
    %2414 = vmatpush1.bf16.xpose.msra.mxu0 0
    %2415 = vmatprep.subr.bf16.mxu0 0
    %2416 = vmatpush1.bf16.xpose.msra.mxu0 0
    %2417 = vmatprep.subr.bf16.mxu0 0
    %2418 = vmatpush1.bf16.xpose.msra.mxu0 0
    %2419 = vmatprep.subr.bf16.mxu0 0
    %2420 = vmatpush1.bf16.xpose.msra.mxu0 0
    %2421 = vmatprep.subr.bf16.mxu0 0
    %2422 = vmatpush1.bf16.xpose.msra.mxu0 0
    %2423 = vmatprep.subr.bf16.mxu0 0
    %2424 = vmatpush1.bf16.xpose.msra.mxu0 0
    %2425 = vmatprep.subr.bf16.mxu0 0
    %2426 = vmatpush1.bf16.xpose.msra.mxu0 0
    %2427 = vmatprep.subr.bf16.mxu0 0
    %2428 = vmatpush1.bf16.xpose.msra.mxu0 0
    %2429 = vmatprep.subr.bf16.mxu0 0
    %2430 = vmatpush1.bf16.xpose.msra.mxu0 0
    %2431 = vmatprep.mubr.bf16.mxu0 0
    %2432 = vmatmul.mubr.bf16.gmra.mrb[0].mxu0 %v2394
    %v2433 = vpop.f32.mrb[0].mxu0
    %v2434 = vadd.f32 %v1527, %v2433
    %v2435 = vpop.f32.mrb[0].mxu0
    %v2436 = vpop.f32.mrb[0].mxu0
    %v2437 = vpop.f32.mrb[0].mxu0
    %2438 = vdwg.mxu0
    %v2439 = vsel %vm270, %v2384, -inf
    %2440 = vmax.xlane.f32.xlu0 %v2439
    %v2441 = vpop.xlane.xlu0 %2440
    %v2442 = vsel %vm270, %v2434, -inf
    %2443 = vmax.xlane.f32.xlu0 %v2442
    %v2444 = vpop.xlane.xlu0 %2443
    %v2445 = vsub.f32 %v2384, %v2441
    %v2446 = vsub.f32 %v2434, %v2444
    %v2447 = vmul.f32 %v2445, 1.442695
    %v2448 = vpow.pop %v2447
    %v2449 = vmul.f32 %v2446, 1.442695
    %v2450 = vpow.pop %v2449
    %v2451 = vsel %vm270, %v2448, 0.0
    %2452 = vadd.xlane.f32.xlu0 %v2451
    %v2453 = vpop.xlane.xlu0 %2452
    %v2454 = vsel %vm270, %v2450, 0.0
    %2455 = vadd.xlane.f32.xlu0 %v2454
    %v2456 = vpop.xlane.xlu0 %2455
    %v2457 = vrcp.pop %v2453
    %v2458 = vrcp.pop %v2456
    %v2459 = vmul.f32 %v2448, %v2457
    %v2460 = vmul.f32 %v2450, %v2458
    %v2461 = vpack.c.bf16 %v2459, %v2459
    %v2462 = vpack.c.bf16 %v2460, %v2460
    %2463 = vrot.lane.b32.xlu0 %v1518, 40
    %v2464 = vpop.permute.xlu0 %2463
    %v2466 = vsel %vm270, %v2461, 0
    %v2469 = vsel %vm393, %v2464, 0
    %2471 = vmatprep.subr.bf16.mxu0 0
    %2472 = vmatpush1.bf16.msra.mxu0 %v2469
    %2473 = vmatprep.subr.bf16.mxu0 0
    %2474 = vmatpush1.bf16.msra.mxu0 0
    %2475 = vmatprep.subr.bf16.mxu0 0
    %2476 = vmatpush1.bf16.msra.mxu0 0
    %2477 = vmatprep.subr.bf16.mxu0 0
    %2478 = vmatpush1.bf16.msra.mxu0 0
    %2479 = vmatprep.subr.bf16.mxu0 0
    %2480 = vmatpush1.bf16.msra.mxu0 0
    %2481 = vmatprep.subr.bf16.mxu0 0
    %2482 = vmatpush1.bf16.msra.mxu0 0
    %2483 = vmatprep.subr.bf16.mxu0 0
    %2484 = vmatpush1.bf16.msra.mxu0 0
    %2485 = vmatprep.subr.bf16.mxu0 0
    %2486 = vmatpush1.bf16.msra.mxu0 0
    %2487 = vmatprep.subr.bf16.mxu0 0
    %2488 = vmatpush1.bf16.msra.mxu0 0
    %2489 = vmatprep.subr.bf16.mxu0 0
    %2490 = vmatpush1.bf16.msra.mxu0 0
    %2491 = vmatprep.subr.bf16.mxu0 0
    %2492 = vmatpush1.bf16.msra.mxu0 0
    %2493 = vmatprep.subr.bf16.mxu0 0
    %2494 = vmatpush1.bf16.msra.mxu0 0
    %2495 = vmatprep.subr.bf16.mxu0 0
    %2496 = vmatpush1.bf16.msra.mxu0 0
    %2497 = vmatprep.subr.bf16.mxu0 0
    %2498 = vmatpush1.bf16.msra.mxu0 0
    %2499 = vmatprep.subr.bf16.mxu0 0
    %2500 = vmatpush1.bf16.msra.mxu0 0
    %2501 = vmatprep.subr.bf16.mxu0 0
    %2502 = vmatpush1.bf16.msra.mxu0 0
    %2503 = vmatprep.mubr.bf16.mxu0 0
    %2504 = vmatmul.mubr.bf16.gmra.mrb[0].mxu0 %v2466
    %v2505 = vpop.f32.mrb[0].mxu0
    %v2506 = vadd.f32 0.0, %v2505
    %v2507 = vpop.f32.mrb[0].mxu0
    %v2508 = vpop.f32.mrb[0].mxu0
    %v2509 = vpop.f32.mrb[0].mxu0
    %2510 = vdwg.mxu0
    %2511 = vrot.lane.b32.xlu0 %v1519, 40
    %v2512 = vpop.permute.xlu0 %2511
    %v2514 = vsel %vm270, %v2462, 0
    %v2517 = vsel %vm393, %v2512, 0
    %2519 = vmatprep.subr.bf16.mxu0 0
    %2520 = vmatpush1.bf16.msra.mxu0 %v2517
    %2521 = vmatprep.subr.bf16.mxu0 0
    %2522 = vmatpush1.bf16.msra.mxu0 0
    %2523 = vmatprep.subr.bf16.mxu0 0
    %2524 = vmatpush1.bf16.msra.mxu0 0
    %2525 = vmatprep.subr.bf16.mxu0 0
    %2526 = vmatpush1.bf16.msra.mxu0 0
    %2527 = vmatprep.subr.bf16.mxu0 0
    %2528 = vmatpush1.bf16.msra.mxu0 0
    %2529 = vmatprep.subr.bf16.mxu0 0
    %2530 = vmatpush1.bf16.msra.mxu0 0
    %2531 = vmatprep.subr.bf16.mxu0 0
    %2532 = vmatpush1.bf16.msra.mxu0 0
    %2533 = vmatprep.subr.bf16.mxu0 0
    %2534 = vmatpush1.bf16.msra.mxu0 0
    %2535 = vmatprep.subr.bf16.mxu0 0
    %2536 = vmatpush1.bf16.msra.mxu0 0
    %2537 = vmatprep.subr.bf16.mxu0 0
    %2538 = vmatpush1.bf16.msra.mxu0 0
    %2539 = vmatprep.subr.bf16.mxu0 0
    %2540 = vmatpush1.bf16.msra.mxu0 0
    %2541 = vmatprep.subr.bf16.mxu0 0
    %2542 = vmatpush1.bf16.msra.mxu0 0
    %2543 = vmatprep.subr.bf16.mxu0 0
    %2544 = vmatpush1.bf16.msra.mxu0 0
    %2545 = vmatprep.subr.bf16.mxu0 0
    %2546 = vmatpush1.bf16.msra.mxu0 0
    %2547 = vmatprep.subr.bf16.mxu0 0
    %2548 = vmatpush1.bf16.msra.mxu0 0
    %2549 = vmatprep.subr.bf16.mxu0 0
    %2550 = vmatpush1.bf16.msra.mxu0 0
    %2551 = vmatprep.mubr.bf16.mxu0 0
    %2552 = vmatmul.mubr.bf16.gmra.mrb[0].mxu0 %v2514
    %v2553 = vpop.f32.mrb[0].mxu0
    %v2554 = vadd.f32 0.0, %v2553
    %v2555 = vpop.f32.mrb[0].mxu0
    %v2556 = vpop.f32.mrb[0].mxu0
    %v2557 = vpop.f32.mrb[0].mxu0
    %2558 = vdwg.mxu0
    %v2559 = vpack.c.bf16 %v2554, %v2506
    %s2560 = scalar_lea.vmem [#allocation12], 12
    %v2561 = vld [vmem:[%s2560] sm:$0xf]
    %v2563 = vsel %vm270, %v2559, 0
    %v2566 = vsel %vm393, %v2561, 0
    %2568 = vmatprep.subr.bf16.mxu0 0
    %2569 = vmatpush1.bf16.msra.mxu0 %v2566
    %2570 = vmatprep.subr.bf16.mxu0 0
    %2571 = vmatpush1.bf16.msra.mxu0 0
    %2572 = vmatprep.subr.bf16.mxu0 0
    %2573 = vmatpush1.bf16.msra.mxu0 0
    %2574 = vmatprep.subr.bf16.mxu0 0
    %2575 = vmatpush1.bf16.msra.mxu0 0
    %2576 = vmatprep.subr.bf16.mxu0 0
    %2577 = vmatpush1.bf16.msra.mxu0 0
    %2578 = vmatprep.subr.bf16.mxu0 0
    %2579 = vmatpush1.bf16.msra.mxu0 0
    %2580 = vmatprep.subr.bf16.mxu0 0
    %2581 = vmatpush1.bf16.msra.mxu0 0
    %2582 = vmatprep.subr.bf16.mxu0 0
    %2583 = vmatpush1.bf16.msra.mxu0 0
    %2584 = vmatprep.subr.bf16.mxu0 0
    %2585 = vmatpush1.bf16.msra.mxu0 0
    %2586 = vmatprep.subr.bf16.mxu0 0
    %2587 = vmatpush1.bf16.msra.mxu0 0
    %2588 = vmatprep.subr.bf16.mxu0 0
    %2589 = vmatpush1.bf16.msra.mxu0 0
    %2590 = vmatprep.subr.bf16.mxu0 0
    %2591 = vmatpush1.bf16.msra.mxu0 0
    %2592 = vmatprep.subr.bf16.mxu0 0
    %2593 = vmatpush1.bf16.msra.mxu0 0
    %2594 = vmatprep.subr.bf16.mxu0 0
    %2595 = vmatpush1.bf16.msra.mxu0 0
    %2596 = vmatprep.subr.bf16.mxu0 0
    %2597 = vmatpush1.bf16.msra.mxu0 0
    %2598 = vmatprep.subr.bf16.mxu0 0
    %2599 = vmatpush1.bf16.msra.mxu0 0
    %2600 = vmatprep.mubr.bf16.mxu0 0
    %2601 = vmatmul.mubr.bf16.gmra.mrb[0].mxu0 %v2563
    %v2602 = vpop.f32.mrb[0].mxu0
    %v2603 = vadd.f32 0.0, %v2602
    %v2604 = vpop.f32.mrb[0].mxu0
    %v2605 = vpop.f32.mrb[0].mxu0
    %v2606 = vadd.f32 0.0, %v2605
    %v2607 = vpop.f32.mrb[0].mxu0
    %2608 = vdwg.mxu0
    %v2609 = vadd.f32 %v2337, %v2603
    %v2610 = vadd.f32 %v2338, %v2606
    %v2612 = vlaneseq
    %v2613 = vshrl.u32 %v2612, 7
    %v2614 = vsub.s32 0, %v2613
    %v2615 = vrot.slane %v1515, %v2614
    %2616 = vrot.lane.b32.xlu0 %v2615, 96
    %v2617 = vpop.permute.xlu0 %2616
    %v2619 = vadd.f32 %v2609, %v2617
    %v2620 = vadd.f32 %v2610, %v2617
    %v2621 = vadd.f32 %v1443, %v2619
    %v2622 = vadd.f32 %v1444, %v2620
    %v2623 = vpack.c.bf16 %v2622, %v2621
    %v2624 = vld [vmem:[#allocation9 + $0x4] sm:$0xf]
    %v2625 = vld [vmem:[#allocation9 + $0xc] sm:$0xf]
    %v2626 = vld [vmem:[#allocation9 + $0x14] sm:$0xf]
    %v2627 = vld [vmem:[#allocation9 + $0x1c] sm:$0xf]
    %v2628 = vld [vmem:[#allocation11 + $0x1] sm:$0x1]
    %v2630 = vlaneseq
    %v2631 = vshrl.u32 %v2630, 7
    %v2632 = vsub.s32 0, %v2631
    %v2633 = vrot.slane %v2628, %v2632
    %v2638 = vunpack.c.l.b16 %v2624
    %v2639 = vunpack.c.l.b16 %v2625
    %v2640 = vunpack.c.l.b16 %v2626
    %v2641 = vunpack.c.l.b16 %v2627
    %v2642 = vpack.c.b16 %v2639, %v2638
    %v2643 = vpack.c.b16 %v2641, %v2640
    %2644 = vrot.lane.b32.xlu0 %v2642, 32
    %v2645 = vpop.permute.xlu0 %2644
    %2646 = vrot.lane.b32.xlu0 %v2643, 32
    %v2647 = vpop.permute.xlu0 %2646
    %2650 = vrot.lane.b32.xlu0 %v2633, 32
    %v2651 = vpop.permute.xlu0 %2650
    %v2654 = vsel %vm157, %v2623, 0
    %2656 = vmatprep.subr.bf16.mxu0 0
    %2657 = vmatpush1.bf16.msra.mxu0 %v2645
    %2658 = vmatprep.subr.bf16.mxu0 0
    %2659 = vmatpush1.bf16.msra.mxu0 %v2647
    %2660 = vmatprep.subr.bf16.mxu0 0
    %2661 = vmatpush1.bf16.msra.mxu0 0
    %2662 = vmatprep.subr.bf16.mxu0 0
    %2663 = vmatpush1.bf16.msra.mxu0 0
    %2664 = vmatprep.subr.bf16.mxu0 0
    %2665 = vmatpush1.bf16.msra.mxu0 0
    %2666 = vmatprep.subr.bf16.mxu0 0
    %2667 = vmatpush1.bf16.msra.mxu0 0
    %2668 = vmatprep.subr.bf16.mxu0 0
    %2669 = vmatpush1.bf16.msra.mxu0 0
    %2670 = vmatprep.subr.bf16.mxu0 0
    %2671 = vmatpush1.bf16.msra.mxu0 0
    %2672 = vmatprep.subr.bf16.mxu0 0
    %2673 = vmatpush1.bf16.msra.mxu0 0
    %2674 = vmatprep.subr.bf16.mxu0 0
    %2675 = vmatpush1.bf16.msra.mxu0 0
    %2676 = vmatprep.subr.bf16.mxu0 0
    %2677 = vmatpush1.bf16.msra.mxu0 0
    %2678 = vmatprep.subr.bf16.mxu0 0
    %2679 = vmatpush1.bf16.msra.mxu0 0
    %2680 = vmatprep.subr.bf16.mxu0 0
    %2681 = vmatpush1.bf16.msra.mxu0 0
    %2682 = vmatprep.subr.bf16.mxu0 0
    %2683 = vmatpush1.bf16.msra.mxu0 0
    %2684 = vmatprep.subr.bf16.mxu0 0
    %2685 = vmatpush1.bf16.msra.mxu0 0
    %2686 = vmatprep.subr.bf16.mxu0 0
    %2687 = vmatpush1.bf16.msra.mxu0 0
    %2688 = vmatprep.mubr.bf16.mxu0 0
    %2689 = vmatmul.mubr.bf16.gmra.mrb[0].mxu0 %v2654
    %v2690 = vpop.f32.mrb[0].mxu0
    %v2691 = vadd.f32 %v2651, %v2690
    %v2692 = vpop.f32.mrb[0].mxu0
    %v2693 = vpop.f32.mrb[0].mxu0
    %v2694 = vadd.f32 %v2651, %v2693
    %v2695 = vpop.f32.mrb[0].mxu0
    %2696 = vdwg.mxu0
    %v2697 = vmax.f32 %v2691, 0.0
    %v2698 = vmax.f32 %v2694, 0.0
    %v2699 = vadd.f32 %v2621, %v2697
    %v2700 = vadd.f32 %v2622, %v2698
    %v2703 = vrot.slane %v2699, 1
    %v2704 = vrot.slane %v2700, 1
    %2705 = vrot.lane.b32.xlu0 %v2703, 32
    %v2706 = vpop.permute.xlu0 %2705
    %2707 = vrot.lane.b32.xlu0 %v2704, 32
    %v2708 = vpop.permute.xlu0 %2707
    %v2711 = vrot.slane %v2699, 2
    %v2712 = vrot.slane %v2700, 2
    %2713 = vrot.lane.b32.xlu0 %v2711, 64
    %v2714 = vpop.permute.xlu0 %2713
    %2715 = vrot.lane.b32.xlu0 %v2712, 64
    %v2716 = vpop.permute.xlu0 %2715
    %v2719 = vrot.slane %v2699, 3
    %v2720 = vrot.slane %v2700, 3
    %2721 = vrot.lane.b32.xlu0 %v2719, 96
    %v2722 = vpop.permute.xlu0 %2721
    %2723 = vrot.lane.b32.xlu0 %v2720, 96
    %v2724 = vpop.permute.xlu0 %2723
    %v2727 = vrot.slane %v2699, 4
    %v2728 = vrot.slane %v2700, 4
    %v2731 = vrot.slane %v2699, 5
    %v2732 = vrot.slane %v2700, 5
    %2733 = vrot.lane.b32.xlu0 %v2731, 32
    %v2734 = vpop.permute.xlu0 %2733
    %2735 = vrot.lane.b32.xlu0 %v2732, 32
    %v2736 = vpop.permute.xlu0 %2735
    %v2739 = vrot.slane %v2699, 6
    %v2740 = vrot.slane %v2700, 6
    %2741 = vrot.lane.b32.xlu0 %v2739, 64
    %v2742 = vpop.permute.xlu0 %2741
    %2743 = vrot.lane.b32.xlu0 %v2740, 64
    %v2744 = vpop.permute.xlu0 %2743
    %v2747 = vrot.slane %v2699, 7
    %v2748 = vrot.slane %v2700, 7
    %2749 = vrot.lane.b32.xlu0 %v2747, 96
    %v2750 = vpop.permute.xlu0 %2749
    %2751 = vrot.lane.b32.xlu0 %v2748, 96
    %v2752 = vpop.permute.xlu0 %2751
    %v2755 = vsel %vm157, %v2699, %v2706
    %v2756 = vsel %vm157, %v2700, %v2708
    %vm2757 = vcmask 523264
    %v2758 = vsel %vm2757, %v2755, %v2714
    %v2759 = vsel %vm2757, %v2756, %v2716
    %vm2760 = vcmask 785408
    %v2761 = vsel %vm2760, %v2758, %v2722
    %v2762 = vsel %vm2760, %v2759, %v2724
    %v2763 = vsel %vm157, %v2727, %v2734
    %v2764 = vsel %vm157, %v2728, %v2736
    %v2765 = vsel %vm2757, %v2763, %v2742
    %v2766 = vsel %vm2757, %v2764, %v2744
    %v2767 = vsel %vm2760, %v2765, %v2750
    %v2768 = vsel %vm2760, %v2766, %v2752
    %v2773 = vcombine.low %v2761, %v2767
    %v2775 = vunpack.c.l.s4 1966171168
    %v2776 = vunpack.c.0.s8 %v2775
    %v2777 = vlaneseq
    %v2778 = vshrl.u32 %v2777, 7
    %v2779 = vsub.s32 %v2776, %v2778
    %v2780 = vrot.slane %v2773, %v2779
    %v2782 = vunpack.c.l.s4 1966171168
    %v2783 = vunpack.c.0.s8 %v2782
    %v2784 = vlaneseq
    %v2785 = vshrl.u32 %v2784, 7
    %v2786 = vsub.s32 %v2783, %v2785
    %v2787 = vrot.slane %v2780, %v2786
    %v2788 = vcombine.low %v2762, %v2768
    %v2790 = vunpack.c.l.s4 1966171168
    %v2791 = vunpack.c.0.s8 %v2790
    %v2792 = vlaneseq
    %v2793 = vshrl.u32 %v2792, 7
    %v2794 = vsub.s32 %v2791, %v2793
    %v2795 = vrot.slane %v2788, %v2794
    %v2797 = vunpack.c.l.s4 1966171168
    %v2798 = vunpack.c.0.s8 %v2797
    %v2799 = vlaneseq
    %v2800 = vshrl.u32 %v2799, 7
    %v2801 = vsub.s32 %v2798, %v2800
    %v2802 = vrot.slane %v2795, %v2801
    %v2805 = vlaneseq
    %vm2806 = vcmp.ge.s32.totalorder %v2805, 0
    %vm2807 = vcmp.lt.s32.totalorder %v2805, 256
    %vm2808 = vmand %vm2806, %vm2807
    %2809 = vst.msk [vmem:[#allocation15] sm:$0x3] %vm2808, %v2787
    %2810 = vst.msk [vmem:[#allocation15 + $0x2] sm:$0x3] %vm2808, %v2802
    // Predicated region
    $region62: #{tpu_custom_call.1} parent=1 // pred_check
      _
    $region63: #{tpu_custom_call.1} parent=1 // pred_check_branch
      %2812 = sbr.rel (0) target = $region65
    $region64: #{tpu_custom_call.1} parent=1 // pred_region
      %s2814 = ssub.s32 64, 64
      %2815 = vsyncadd [#allocation4], %s2814
      %s2816 = sshll.u32 [#allocation15], 4
      %s2817 = int_to_ptr.vmem [resolvable:$true] %s2816
      %2822 = dma.vmem_to_hbm [thread:$0]  %s2817, 64, %s8, [#allocation4], 32, 32, 2
    $region65: #{tpu_custom_call.1} parent=1 // pred_fallthru
      _
    // Predicated region
    $region66: #{tpu_custom_call.1} parent=1 // pred_check
      _
    $region67: #{tpu_custom_call.1} parent=1 // pred_check_branch
      %2824 = sbr.rel (0) target = $region69
    $region68: #{tpu_custom_call.1} parent=1 // pred_region
      %2825 = dma.done [#allocation4], 64
    $region69: #{tpu_custom_call.1} parent=1 // pred_fallthru
      _
    %2826 = vsyncpa [#allocation3], 1
    %2827 = vsyncpa [#allocation7], 1
    %2828 = vsyncpa [#allocation10], 1
    %2829 = vsyncpa [#allocation13], 1
    %2830 = vsyncpa [#allocation4], 1
    %2831 = vsyncpa [#allocation5], 1

</llo_original>
